<compile_context>
chip_gen: v7x
topology: tpu7x:2x2x1
jax: 0.10.0
libtpu: 0.0.40
codegen_flags: <defaults>
</compile_context>

<pallas_src>
import jax
import jax.numpy as jnp
import numpy as np
from jax.experimental import pallas as pl
from jax.experimental.pallas import tpu as pltpu

B = 2            # batch
C_IN = 32        # in_channels (small test size)
H = W = 14       # input spatial -> AvgPool2d(5, stride=3) -> 4x4 (fc expects 128*4*4)
P_OUT = 4        # pooled spatial
S = P_OUT * P_OUT          # 16 pooled positions
C_MID = 128
HID = 1024
LABELS = 10
LANE = 128                 # lane-padded class dimension
BN_EPS = 1e-5

HID_TILE = 512             # fc1 weight column tile (2 grid steps)
N_TILES = HID // HID_TILE
assert HID % HID_TILE == 0


def aux_classifier_kernel(x_ref, pool_ref, wc_ref, bc_ref,
                          w1_ref, w1s_ref, b1_ref, w2_ref, b2_ref,
                          out_ref, flat_sc, h1_sc):
    j = pl.program_id(0)

    # ---- Step 0 only: AvgPool(5,3) + 1x1 conv (BN folded) + ReLU + flatten ----
    @pl.when(j == 0)
    def _():
        pm = pool_ref[...]                           # (S, H*W)      bf16
        wc = wc_ref[...]                             # (C_IN, C_MID) bf16
        bc = bc_ref[...]                             # (1, C_MID)    f32
        rows = []
        for b in range(B):                           # static unroll, B tiny
            pooled = jnp.dot(pm, x_ref[b],
                             preferred_element_type=jnp.float32)          # (S, C_IN)
            act = jnp.maximum(
                jnp.dot(pooled.astype(jnp.bfloat16), wc,
                        preferred_element_type=jnp.float32) + bc, 0.0)    # (S, C_MID)
            # bf16 before the tile-crossing reshape (halves relayout bytes).
            rows.append(act.astype(jnp.bfloat16).reshape(1, S * C_MID))
        flat_sc[...] = jnp.concatenate(rows, axis=0)                      # (B, 2048) bf16

    # ---- Every step: one HID_TILE column slab of fc1 (int8 weight stream) ----
    w1_tile = w1_ref[...].astype(jnp.bfloat16)                            # int8 -> bf16
    h1c = jnp.dot(flat_sc[...], w1_tile,
                  preferred_element_type=jnp.float32)                     # (B, HID_TILE)
    h1c = jnp.maximum(h1c * w1s_ref[...] + b1_ref[...], 0.0)              # dequant + bias + ReLU
    for t in range(N_TILES):                                              # static column stores
        @pl.when(j == t)
        def _(t=t):
            h1_sc[:, t * HID_TILE:(t + 1) * HID_TILE] = h1c.astype(jnp.bfloat16)

    # ---- Last step: fc2 + ReLU + masked softmax over 128 lanes ----
    @pl.when(j == pl.num_programs(0) - 1)
    def _():
        h2 = jnp.maximum(
            jnp.dot(h1_sc[...], w2_ref[...],
                    preferred_element_type=jnp.float32) + b2_ref[...], 0.0)   # (B, LANE)
        lane = jax.lax.broadcasted_iota(jnp.int32, h2.shape, 1)
        h2 = jnp.where(lane < LABELS, h2, -1e30)      # pad lanes contribute exp() == 0
        m = jnp.max(h2, axis=-1, keepdims=True)
        e = jnp.exp(h2 - m)
        inv = pl.reciprocal(jnp.sum(e, axis=-1, keepdims=True), approx=True)
        out_ref[...] = (e * inv).astype(out_ref.dtype)


def make_pool_matrix():
    """(16, 196) matrix implementing AvgPool2d(kernel=5, stride=3) on 14x14."""
    pm = np.zeros((S, H * W), np.float32)
    for i in range(P_OUT):
        for j in range(P_OUT):
            for di in range(5):
                for dj in range(5):
                    pm[i * P_OUT + j, (3 * i + di) * W + (3 * j + dj)] = 1.0 / 25.0
    return pm


@jax.jit
def aux_classifier(x, pm_bf16, wc_eff, bc_eff, w1_i8, w1_scale, b1_k, w2_k, b2_k):
    # NCHW -> (B, H*W, C_in) channels-last, bf16 (halves x DMA, bf16 MXU pass).
    x3d = jnp.transpose(x, (0, 2, 3, 1)).reshape(B, H * W, C_IN).astype(jnp.bfloat16)

    const3 = lambda j: (0, 0, 0)   # resident across all fc1 tiles
    const2 = lambda j: (0, 0)

    grid_spec = pltpu.PrefetchScalarGridSpec(
        num_scalar_prefetch=0,
        grid=(N_TILES,),                                         # fc1 column tiles
        in_specs=[
            pl.BlockSpec((B, H * W, C_IN), const3),              # x, channels-last, bf16
            pl.BlockSpec((S, H * W), const2),                    # pool matrix, bf16
            pl.BlockSpec((C_IN, C_MID), const2),                 # conv weight (BN folded), bf16
            pl.BlockSpec((1, C_MID), const2),                    # conv bias (BN folded), f32
            pl.BlockSpec((S * C_MID, HID_TILE), lambda j: (0, j)),   # fc1 weight, int8 column tiles
            pl.BlockSpec((1, HID_TILE), lambda j: (0, j)),           # fc1 per-column dequant scales
            pl.BlockSpec((1, HID_TILE), lambda j: (0, j)),           # fc1 bias
            pl.BlockSpec((HID, LANE), const2),                   # fc2 weight, bf16, lane-padded
            pl.BlockSpec((1, LANE), const2),                     # fc2 bias, lane-padded
        ],
        out_specs=pl.BlockSpec((B, LANE), const2),
        scratch_shapes=[
            pltpu.VMEM((B, S * C_MID), jnp.bfloat16),            # flattened conv activations
            pltpu.VMEM((B, HID), jnp.bfloat16),                  # fc1 activations
        ],
    )

    out_padded = pl.pallas_call(
        aux_classifier_kernel,
        out_shape=jax.ShapeDtypeStruct((B, LANE), jnp.float32),
        grid_spec=grid_spec,
        compiler_params=pltpu.CompilerParams(
            dimension_semantics=("arbitrary",),                  # h1 accumulates across steps
            vmem_limit_bytes=32 * 1024 * 1024,                   # <= v7x scoped default
        ),
    )(x3d, pm_bf16, wc_eff, bc_eff, w1_i8, w1_scale, b1_k, w2_k, b2_k)

    return out_padded[:, :LABELS]


def reference(x, wc, bc, gamma, beta, run_mean, run_var, w1, b1, w2, b2):
    """Plain-JAX mirror of the PyTorch forward (eval mode), NCHW."""
    hp = jax.lax.Precision.HIGHEST
    pooled = jax.lax.reduce_window(x, 0.0, jax.lax.add,
                                   (1, 1, 5, 5), (1, 1, 3, 3), "VALID") / 25.0
    conv = jnp.einsum("oc,bchw->bohw", wc, pooled, precision=hp) + bc[None, :, None, None]
    bn = (conv - run_mean[None, :, None, None]) / jnp.sqrt(run_var + BN_EPS)[None, :, None, None]
    bn = bn * gamma[None, :, None, None] + beta[None, :, None, None]
    act = jnp.maximum(bn, 0.0)
    flat = act.reshape(x.shape[0], C_MID * S)                # PyTorch Flatten order (c*16 + s)
    h1 = jnp.maximum(jnp.dot(flat, w1.T, precision=hp) + b1, 0.0)
    h2 = jnp.maximum(jnp.dot(h1, w2.T, precision=hp) + b2, 0.0)
    return jax.nn.softmax(h2, axis=1)


if __name__ == "__main__":
    key = jax.random.PRNGKey(0)
    kx, kwc, kbc, kw1, kb1, kw2, kb2 = jax.random.split(key, 7)

    # Deterministic synthetic parameters (PyTorch layouts).
    wc = jax.random.normal(kwc, (C_MID, C_IN), jnp.float32) * 0.05      # Conv2d weight (O, I) [1x1]
    bc = jax.random.normal(kbc, (C_MID,), jnp.float32) * 0.05
    gamma = jnp.ones((C_MID,), jnp.float32)
    beta = jnp.zeros((C_MID,), jnp.float32)
    run_mean = jnp.zeros((C_MID,), jnp.float32)
    run_var = jnp.ones((C_MID,), jnp.float32)
    w1 = jax.random.normal(kw1, (HID, C_MID * S), jnp.float32) * 0.02   # Linear(2048, 1024) weight
    b1 = jax.random.normal(kb1, (HID,), jnp.float32) * 0.02
    w2 = jax.random.normal(kw2, (LABELS, HID), jnp.float32) * 0.02      # Linear(1024, 10) weight
    b2 = jax.random.normal(kb2, (LABELS,), jnp.float32) * 0.02

    # --- Kernel-friendly parameter layouts (all shape fixes / folding here) ---
    # Single (16, 196) pooling matrix (no O(B^2) block-diagonal), bf16.
    pm_bf16 = jnp.asarray(make_pool_matrix()).astype(jnp.bfloat16)

    # Fold eval-mode BatchNorm and the conv bias into the conv weight/bias.
    bn_scale = gamma / jnp.sqrt(run_var + BN_EPS)                        # (128,)
    bn_shift = beta - run_mean * bn_scale                                # (128,)
    wc_eff = (wc.T * bn_scale[None, :]).astype(jnp.bfloat16)             # (C_in, 128) bf16
    bc_eff = (bc * bn_scale + bn_shift).reshape(1, C_MID)                # (1, 128) f32

    # w1[o, c*16 + s] -> w1_k[s*128 + c, o] (matches the kernel's (s, c) flatten),
    # then symmetric int8 with per-output-column scales.
    w1_k = jnp.transpose(w1.reshape(HID, C_MID, S), (2, 1, 0)).reshape(S * C_MID, HID)
    w1_absmax = jnp.max(jnp.abs(w1_k), axis=0, keepdims=True)            # (1, 1024)
    w1_scale = jnp.maximum(w1_absmax, 1e-12) / 127.0                     # (1, 1024) f32
    w1_i8 = jnp.round(w1_k / w1_scale).astype(jnp.int8)                  # (2048, 1024) int8
    b1_k = b1.reshape(1, HID)

    # fc2 weight/bias lane-padded from 10 -> 128 classes (pad lanes masked in kernel).
    w2_k = jnp.zeros((HID, LANE), jnp.float32).at[:, :LABELS].set(w2.T).astype(jnp.bfloat16)
    b2_k = jnp.zeros((1, LANE), jnp.float32).at[0, :LABELS].set(b2)

    x = jax.random.normal(kx, (B, C_IN, H, W), jnp.float32)

    out = aux_classifier(x, pm_bf16, wc_eff, bc_eff, w1_i8, w1_scale, b1_k, w2_k, b2_k)
    out = jax.block_until_ready(out)

    ref = reference(x, wc, bc, gamma, beta, run_mean, run_var, w1, b1, w2, b2)
    np.testing.assert_allclose(np.asarray(out), np.asarray(ref), rtol=2e-2, atol=3e-3)

    print("KERNEL_OK")
</pallas_src>

<mosaic_0001>
module attributes {stable_mosaic.version = 11 : i64} {
  func.func @aux_classifier_kernel(%arg0: i32, %arg1: memref<2x196x32xbf16, #tpu.memory_space<vmem>>, %arg2: memref<16x196xbf16, #tpu.memory_space<vmem>>, %arg3: memref<32x128xbf16, #tpu.memory_space<vmem>>, %arg4: memref<1x128xf32, #tpu.memory_space<vmem>>, %arg5: memref<2048x512xi8, #tpu.memory_space<vmem>>, %arg6: memref<1x512xf32, #tpu.memory_space<vmem>>, %arg7: memref<1x512xf32, #tpu.memory_space<vmem>>, %arg8: memref<1024x128xbf16, #tpu.memory_space<vmem>>, %arg9: memref<1x128xf32, #tpu.memory_space<vmem>>, %arg10: memref<2x128xf32, #tpu.memory_space<vmem>>, %arg11: memref<2x2048xbf16, #tpu.memory_space<vmem>>, %arg12: memref<2x1024xbf16, #tpu.memory_space<vmem>>) attributes {dimension_semantics = [#tpu.dimension_semantics<arbitrary>], iteration_bounds = array<i64: 2>, scalar_prefetch = 0 : i64, scratch_operands = 2 : i64, tpu.core_type = #tpu.core_type<tc>, window_params = [{pipeline_mode = #tpu.pipeline_mode<synchronous>, transform_indices = @transform_0, window_bounds = array<i64: 2, 196, 32>}, {pipeline_mode = #tpu.pipeline_mode<synchronous>, transform_indices = @transform_1, window_bounds = array<i64: 16, 196>}, {pipeline_mode = #tpu.pipeline_mode<synchronous>, transform_indices = @transform_2, window_bounds = array<i64: 32, 128>}, {pipeline_mode = #tpu.pipeline_mode<synchronous>, transform_indices = @transform_3, window_bounds = array<i64: 1, 128>}, {transform_indices = @transform_4, window_bounds = array<i64: 2048, 512>}, {transform_indices = @transform_5, window_bounds = array<i64: 1, 512>}, {transform_indices = @transform_6, window_bounds = array<i64: 1, 512>}, {pipeline_mode = #tpu.pipeline_mode<synchronous>, transform_indices = @transform_7, window_bounds = array<i64: 1024, 128>}, {pipeline_mode = #tpu.pipeline_mode<synchronous>, transform_indices = @transform_8, window_bounds = array<i64: 1, 128>}, {pipeline_mode = #tpu.pipeline_mode<synchronous>, transform_indices = @transform_9, window_bounds = array<i64: 2, 128>}]} {
    %c0_i32 = arith.constant 0 : i32
    %0 = arith.cmpi eq, %arg0, %c0_i32 : i32
    %1 = arith.extui %0 : i1 to i32
    %c0_i32_0 = arith.constant 0 : i32
    %2 = arith.cmpi ne, %1, %c0_i32_0 : i32
    scf.if %2 {
      %c0_14 = arith.constant 0 : index
      %c0_15 = arith.constant 0 : index
      %24 = vector.load %arg2[%c0_14, %c0_15] : memref<16x196xbf16, #tpu.memory_space<vmem>>, vector<16x196xbf16>
      %c0_16 = arith.constant 0 : index
      %c0_17 = arith.constant 0 : index
      %25 = vector.load %arg3[%c0_16, %c0_17] : memref<32x128xbf16, #tpu.memory_space<vmem>>, vector<32x128xbf16>
      %c0_18 = arith.constant 0 : index
      %c0_19 = arith.constant 0 : index
      %26 = vector.load %arg4[%c0_18, %c0_19] : memref<1x128xf32, #tpu.memory_space<vmem>>, vector<1x128xf32>
      %c0_20 = arith.constant 0 : index
      %c0_21 = arith.constant 0 : index
      %c0_22 = arith.constant 0 : index
      %27 = vector.load %arg1[%c0_20, %c0_21, %c0_22] : memref<2x196x32xbf16, #tpu.memory_space<vmem>>, vector<1x196x32xbf16>
      %28 = vector.shape_cast %27 : vector<1x196x32xbf16> to vector<196x32xbf16>
      %cst_23 = arith.constant dense<0.000000e+00> : vector<16x32xf32>
      %29 = tpu.matmul %24, %28, %cst_23 {dimension_numbers = #tpu.dot_dimension_numbers<[1], [0], [0], [1], [0, 0, 1, 1], [], []>} : vector<16x196xbf16>, vector<196x32xbf16>, vector<16x32xf32> -> vector<16x32xf32>
      %30 = arith.truncf %29 : vector<16x32xf32> to vector<16x32xbf16>
      %cst_24 = arith.constant dense<0.000000e+00> : vector<16x128xf32>
      %31 = tpu.matmul %30, %25, %cst_24 {dimension_numbers = #tpu.dot_dimension_numbers<[1], [0], [0], [1], [0, 0, 1, 1], [], []>} : vector<16x32xbf16>, vector<32x128xbf16>, vector<16x128xf32> -> vector<16x128xf32>
      %32 = vector.broadcast %26 : vector<1x128xf32> to vector<16x128xf32>
      %33 = arith.addf %31, %32 : vector<16x128xf32>
      %cst_25 = arith.constant 0.000000e+00 : f32
      %34 = vector.broadcast %cst_25 : f32 to vector<16x128xf32>
      %35 = arith.maximumf %33, %34 : vector<16x128xf32>
      %36 = arith.truncf %35 : vector<16x128xf32> to vector<16x128xbf16>
      %37 = vector.shape_cast %36 : vector<16x128xbf16> to vector<1x2048xbf16>
      %c1 = arith.constant 1 : index
      %c0_26 = arith.constant 0 : index
      %c0_27 = arith.constant 0 : index
      %38 = vector.load %arg1[%c1, %c0_26, %c0_27] : memref<2x196x32xbf16, #tpu.memory_space<vmem>>, vector<1x196x32xbf16>
      %39 = vector.shape_cast %38 : vector<1x196x32xbf16> to vector<196x32xbf16>
      %cst_28 = arith.constant dense<0.000000e+00> : vector<16x32xf32>
      %40 = tpu.matmul %24, %39, %cst_28 {dimension_numbers = #tpu.dot_dimension_numbers<[1], [0], [0], [1], [0, 0, 1, 1], [], []>} : vector<16x196xbf16>, vector<196x32xbf16>, vector<16x32xf32> -> vector<16x32xf32>
      %41 = arith.truncf %40 : vector<16x32xf32> to vector<16x32xbf16>
      %cst_29 = arith.constant dense<0.000000e+00> : vector<16x128xf32>
      %42 = tpu.matmul %41, %25, %cst_29 {dimension_numbers = #tpu.dot_dimension_numbers<[1], [0], [0], [1], [0, 0, 1, 1], [], []>} : vector<16x32xbf16>, vector<32x128xbf16>, vector<16x128xf32> -> vector<16x128xf32>
      %43 = vector.broadcast %26 : vector<1x128xf32> to vector<16x128xf32>
      %44 = arith.addf %42, %43 : vector<16x128xf32>
      %cst_30 = arith.constant 0.000000e+00 : f32
      %45 = vector.broadcast %cst_30 : f32 to vector<16x128xf32>
      %46 = arith.maximumf %44, %45 : vector<16x128xf32>
      %47 = arith.truncf %46 : vector<16x128xf32> to vector<16x128xbf16>
      %48 = vector.shape_cast %47 : vector<16x128xbf16> to vector<1x2048xbf16>
      %49 = tpu.concatenate %37, %48 in 0 : vector<1x2048xbf16>, vector<1x2048xbf16> -> vector<2x2048xbf16>
      %c0_31 = arith.constant 0 : index
      %c0_32 = arith.constant 0 : index
      %50 = vector.load %arg11[%c0_31, %c0_32] : memref<2x2048xbf16, #tpu.memory_space<vmem>>, vector<2x2048xbf16>
      tpu.vector_store %arg11[%c0_31, %c0_32], %49 {strides = array<i32>} : memref<2x2048xbf16, #tpu.memory_space<vmem>>, vector<2x2048xbf16>,
    } else {
    }
    %c0 = arith.constant 0 : index
    %c0_1 = arith.constant 0 : index
    %3 = vector.load %arg5[%c0, %c0_1] : memref<2048x512xi8, #tpu.memory_space<vmem>>, vector<2048x512xi8>
    %4 = arith.sitofp %3 : vector<2048x512xi8> to vector<2048x512xbf16>
    %c0_2 = arith.constant 0 : index
    %c0_3 = arith.constant 0 : index
    %5 = vector.load %arg11[%c0_2, %c0_3] : memref<2x2048xbf16, #tpu.memory_space<vmem>>, vector<2x2048xbf16>
    %cst = arith.constant dense<0.000000e+00> : vector<2x512xf32>
    %6 = tpu.matmul %5, %4, %cst {dimension_numbers = #tpu.dot_dimension_numbers<[1], [0], [0], [1], [0, 0, 1, 1], [], []>} : vector<2x2048xbf16>, vector<2048x512xbf16>, vector<2x512xf32> -> vector<2x512xf32>
    %c0_4 = arith.constant 0 : index
    %c0_5 = arith.constant 0 : index
    %7 = vector.load %arg6[%c0_4, %c0_5] : memref<1x512xf32, #tpu.memory_space<vmem>>, vector<1x512xf32>
    %8 = vector.broadcast %7 : vector<1x512xf32> to vector<2x512xf32>
    %9 = arith.mulf %6, %8 : vector<2x512xf32>
    %c0_6 = arith.constant 0 : index
    %c0_7 = arith.constant 0 : index
    %10 = vector.load %arg7[%c0_6, %c0_7] : memref<1x512xf32, #tpu.memory_space<vmem>>, vector<1x512xf32>
    %11 = vector.broadcast %10 : vector<1x512xf32> to vector<2x512xf32>
    %12 = arith.addf %9, %11 : vector<2x512xf32>
    %cst_8 = arith.constant 0.000000e+00 : f32
    %13 = vector.broadcast %cst_8 : f32 to vector<2x512xf32>
    %14 = arith.maximumf %12, %13 : vector<2x512xf32>
    %c0_i32_9 = arith.constant 0 : i32
    %15 = arith.cmpi eq, %arg0, %c0_i32_9 : i32
    %16 = arith.extui %15 : i1 to i32
    %c0_i32_10 = arith.constant 0 : i32
    %17 = arith.cmpi ne, %16, %c0_i32_10 : i32
    scf.if %17 {
      %24 = arith.truncf %14 : vector<2x512xf32> to vector<2x512xbf16>
      %c0_14 = arith.constant 0 : index
      %c0_15 = arith.constant 0 : index
      %25 = vector.load %arg12[%c0_14, %c0_15] : memref<2x1024xbf16, #tpu.memory_space<vmem>>, vector<2x512xbf16>
      tpu.vector_store %arg12[%c0_14, %c0_15], %24 {strides = array<i32>} : memref<2x1024xbf16, #tpu.memory_space<vmem>>, vector<2x512xbf16>,
    } else {
    }
    %c1_i32 = arith.constant 1 : i32
    %18 = arith.cmpi eq, %arg0, %c1_i32 : i32
    %19 = arith.extui %18 : i1 to i32
    %c0_i32_11 = arith.constant 0 : i32
    %20 = arith.cmpi ne, %19, %c0_i32_11 : i32
    scf.if %20 {
      %24 = arith.truncf %14 : vector<2x512xf32> to vector<2x512xbf16>
      %c0_14 = arith.constant 0 : index
      %c512 = arith.constant 512 : index
      %25 = vector.load %arg12[%c0_14, %c512] : memref<2x1024xbf16, #tpu.memory_space<vmem>>, vector<2x512xbf16>
      tpu.vector_store %arg12[%c0_14, %c512], %24 {strides = array<i32>} : memref<2x1024xbf16, #tpu.memory_space<vmem>>, vector<2x512xbf16>,
    } else {
    }
    %c1_i32_12 = arith.constant 1 : i32
    %21 = arith.cmpi eq, %arg0, %c1_i32_12 : i32
    %22 = arith.extui %21 : i1 to i32
    %c0_i32_13 = arith.constant 0 : i32
    %23 = arith.cmpi ne, %22, %c0_i32_13 : i32
    scf.if %23 {
      %c0_14 = arith.constant 0 : index
      %c0_15 = arith.constant 0 : index
      %24 = vector.load %arg12[%c0_14, %c0_15] : memref<2x1024xbf16, #tpu.memory_space<vmem>>, vector<2x1024xbf16>
      %c0_16 = arith.constant 0 : index
      %c0_17 = arith.constant 0 : index
      %25 = vector.load %arg8[%c0_16, %c0_17] : memref<1024x128xbf16, #tpu.memory_space<vmem>>, vector<1024x128xbf16>
      %cst_18 = arith.constant dense<0.000000e+00> : vector<2x128xf32>
      %26 = tpu.matmul %24, %25, %cst_18 {dimension_numbers = #tpu.dot_dimension_numbers<[1], [0], [0], [1], [0, 0, 1, 1], [], []>} : vector<2x1024xbf16>, vector<1024x128xbf16>, vector<2x128xf32> -> vector<2x128xf32>
      %c0_19 = arith.constant 0 : index
      %c0_20 = arith.constant 0 : index
      %27 = vector.load %arg9[%c0_19, %c0_20] : memref<1x128xf32, #tpu.memory_space<vmem>>, vector<1x128xf32>
      %28 = vector.broadcast %27 : vector<1x128xf32> to vector<2x128xf32>
      %29 = arith.addf %26, %28 : vector<2x128xf32>
      %cst_21 = arith.constant 0.000000e+00 : f32
      %30 = vector.broadcast %cst_21 : f32 to vector<2x128xf32>
      %31 = arith.maximumf %29, %30 : vector<2x128xf32>
      %32 = tpu.iota {dimensions = array<i32: 1>} : vector<2x128xi32>
      %c10_i32 = arith.constant 10 : i32
      %33 = vector.broadcast %c10_i32 : i32 to vector<2x128xi32>
      %34 = arith.cmpi slt, %32, %33 : vector<2x128xi32>
      %cst_22 = arith.constant -1.000000e+30 : f32
      %35 = vector.broadcast %cst_22 : f32 to vector<2x128xf32>
      %36 = arith.select %34, %31, %35 : vector<2x128xi1>, vector<2x128xf32>
      %cst_23 = arith.constant dense<0xFF800000> : vector<2xf32>
      %37 = vector.multi_reduction <maximumf>, %36, %cst_23 [1] : vector<2x128xf32> to vector<2xf32>
      %38 = vector.shape_cast %37 : vector<2xf32> to vector<2x1xf32>
      %39 = vector.broadcast %38 : vector<2x1xf32> to vector<2x128xf32>
      %40 = arith.subf %36, %39 : vector<2x128xf32>
      %41 = math.exp %40 : vector<2x128xf32>
      %cst_24 = arith.constant dense<0.000000e+00> : vector<2xf32>
      %42 = vector.multi_reduction <add>, %41, %cst_24 [1] : vector<2x128xf32> to vector<2xf32>
      %43 = vector.shape_cast %42 : vector<2xf32> to vector<2x1xf32>
      %44 = tpu.reciprocal %43 {approx = true} : vector<2x1xf32> -> vector<2x1xf32>
      %45 = vector.broadcast %44 : vector<2x1xf32> to vector<2x128xf32>
      %46 = arith.mulf %41, %45 : vector<2x128xf32>
      %c0_25 = arith.constant 0 : index
      %c0_26 = arith.constant 0 : index
      %47 = vector.load %arg10[%c0_25, %c0_26] : memref<2x128xf32, #tpu.memory_space<vmem>>, vector<2x128xf32>
      tpu.vector_store %arg10[%c0_25, %c0_26], %46 {strides = array<i32>} : memref<2x128xf32, #tpu.memory_space<vmem>>, vector<2x128xf32>,
    } else {
    }
    return
  }
  func.func @transform_0(%arg0: i32) -> (i32, i32, i32) {
    %c0_i32 = arith.constant 0 : i32
    %c0_i32_0 = arith.constant 0 : i32
    %c0_i32_1 = arith.constant 0 : i32
    %c0_i32_2 = arith.constant 0 : i32
    return %c0_i32, %c0_i32_0, %c0_i32_1 : i32, i32, i32
  }
  func.func @transform_1(%arg0: i32) -> (i32, i32) {
    %c0_i32 = arith.constant 0 : i32
    %c0_i32_0 = arith.constant 0 : i32
    %c0_i32_1 = arith.constant 0 : i32
    return %c0_i32, %c0_i32_0 : i32, i32
  }
  func.func @transform_2(%arg0: i32) -> (i32, i32) {
    %c0_i32 = arith.constant 0 : i32
    %c0_i32_0 = arith.constant 0 : i32
    %c0_i32_1 = arith.constant 0 : i32
    return %c0_i32, %c0_i32_0 : i32, i32
  }
  func.func @transform_3(%arg0: i32) -> (i32, i32) {
    %c0_i32 = arith.constant 0 : i32
    %c0_i32_0 = arith.constant 0 : i32
    %c0_i32_1 = arith.constant 0 : i32
    return %c0_i32, %c0_i32_0 : i32, i32
  }
  func.func @transform_4(%arg0: i32) -> (i32, i32) {
    %c0_i32 = arith.constant 0 : i32
    %c0_i32_0 = arith.constant 0 : i32
    return %c0_i32, %arg0 : i32, i32
  }
  func.func @transform_5(%arg0: i32) -> (i32, i32) {
    %c0_i32 = arith.constant 0 : i32
    %c0_i32_0 = arith.constant 0 : i32
    return %c0_i32, %arg0 : i32, i32
  }
  func.func @transform_6(%arg0: i32) -> (i32, i32) {
    %c0_i32 = arith.constant 0 : i32
    %c0_i32_0 = arith.constant 0 : i32
    return %c0_i32, %arg0 : i32, i32
  }
  func.func @transform_7(%arg0: i32) -> (i32, i32) {
    %c0_i32 = arith.constant 0 : i32
    %c0_i32_0 = arith.constant 0 : i32
    %c0_i32_1 = arith.constant 0 : i32
    return %c0_i32, %c0_i32_0 : i32, i32
  }
  func.func @transform_8(%arg0: i32) -> (i32, i32) {
    %c0_i32 = arith.constant 0 : i32
    %c0_i32_0 = arith.constant 0 : i32
    %c0_i32_1 = arith.constant 0 : i32
    return %c0_i32, %c0_i32_0 : i32, i32
  }
  func.func @transform_9(%arg0: i32) -> (i32, i32) {
    %c0_i32 = arith.constant 0 : i32
    %c0_i32_0 = arith.constant 0 : i32
    %c0_i32_1 = arith.constant 0 : i32
    return %c0_i32, %c0_i32_0 : i32, i32
  }
}

</mosaic_0001>

<llo_original>
// kernel: aux_classifier.1
$region0: #{aux_classifier.1}
  #allocation0 [shape = 'u32[]', space=smem, size = 0x4, offset = 0x4, fixed_abs, tag = 'smem constant byte address 0x4 - core index']
  #allocation1 [shape = 'u32[144,128]{1,0:T(1,128)}', space=vmem, size = 0x12000, scoped, tag = 'internal scratch']
  #allocation2 [shape = 'bf16[2,2048]{1,0:T(2,128)(2,1)}', space=vmem, size = 0x2000, scoped, tag = 'scratch operand']
  #allocation3 [shape = 'bf16[2,1024]{1,0:T(2,128)(2,1)}', space=vmem, size = 0x1000, scoped, tag = 'scratch operand']
  %s0 = inlined_call_operand.vmem [shape: bf16[2,196,32], index: 0, kind: input, shape index: {}]
  %s1 = inlined_call_operand.hbm [shape: bf16[16,196], index: 1, kind: input, shape index: {}]
  %s2 = inlined_call_operand.hbm [shape: bf16[32,128], index: 2, kind: input, shape index: {}]
  %s3 = inlined_call_operand.hbm [shape: f32[1,128], index: 3, kind: input, shape index: {}]
  %s4 = inlined_call_operand.hbm [shape: s8[2048,1024], index: 4, kind: input, shape index: {}]
  %s5 = inlined_call_operand.hbm [shape: f32[1,1024], index: 5, kind: input, shape index: {}]
  %s6 = inlined_call_operand.hbm [shape: f32[1,1024], index: 6, kind: input, shape index: {}]
  %s7 = inlined_call_operand.hbm [shape: bf16[1024,128], index: 7, kind: input, shape index: {}]
  %s8 = inlined_call_operand.hbm [shape: f32[1,128], index: 8, kind: input, shape index: {}]
  %s9 = inlined_call_operand.hbm [shape: f32[2,128], index: 9, kind: output, shape index: {}]
  %s10 = sld [smem:[#allocation0]]
  $region113: #{aux_classifier.1} parent=0
    _
  %s12 = ssub.s32 1, %s10
  %s13 = scalar_select 0, %s12, %s10
  $region1: #{aux_classifier.1} parent=0
    #allocation4 [shape = 'u8[8192]{0}', space=vmem, size = 0x2000, scoped, tag = 'input window, operand 1, single buffered']
    #allocation5 [shape = 's32[2]{0}', space=sflag, size = 0x8, scoped, tag = 'scoped memory for aux_classifier.1']
    #allocation6 [shape = 's32[2]{0}', space=sflag, size = 0x8, scoped, tag = 'scoped memory for aux_classifier.1']
    #allocation7 [shape = 'u8[8192]{0}', space=vmem, size = 0x2000, scoped, tag = 'input window, operand 2, single buffered']
    #allocation8 [shape = 's32[1]{0}', space=sflag, size = 0x4, scoped, tag = 'scoped memory for aux_classifier.1']
    #allocation9 [shape = 'u8[512]{0}', space=vmem, size = 0x400, scoped, tag = 'input window, operand 3, single buffered']
    #allocation10 [shape = 'u8[2097152]{0}', space=vmem, size = 0x200000, scoped, tag = 'input window, operand 4']
    #allocation11 [shape = 's32[2]{0}', space=sflag, size = 0x8, scoped, tag = 'scoped memory for aux_classifier.1']
    #allocation12 [shape = 'u8[4096]{0}', space=vmem, size = 0x1000, scoped, tag = 'input window, operand 5']
    #allocation13 [shape = 'u8[4096]{0}', space=vmem, size = 0x1000, scoped, tag = 'input window, operand 6']
    #allocation14 [shape = 's32[2]{0}', space=sflag, size = 0x8, scoped, tag = 'scoped memory for aux_classifier.1']
    #allocation15 [shape = 'u8[262144]{0}', space=vmem, size = 0x40000, scoped, tag = 'input window, operand 7, single buffered']
    #allocation16 [shape = 'u8[512]{0}', space=vmem, size = 0x400, scoped, tag = 'input window, operand 8, single buffered']
    #allocation17 [shape = 's32[1]{0}', space=sflag, size = 0x4, scoped, tag = 'scoped memory for aux_classifier.1']
    #allocation18 [shape = 'u8[1024]{0}', space=vmem, size = 0x400, scoped, tag = 'output window, operand 0, single buffered']
    %14 = vsyncpa [#allocation5], 0
    %15 = vsyncpa [#allocation8], 0
    %16 = vsyncpa [#allocation11], 0
    %s17 = scalar_lea.sflag [#allocation11], 1
    %18 = vsyncpa %s17, 0
    %19 = vsyncpa [#allocation14], 0
    %s20 = scalar_lea.sflag [#allocation14], 1
    %21 = vsyncpa %s20, 0
    %22 = vsyncpa [#allocation17], 0
    %23 = vsyncpa [#allocation6], 0
    loop: start=0, step=1, limit=4
    $region2: #{aux_classifier.1} parent=1 // loop_pre_header
      _
    $region3: #{aux_classifier.1} parent=1 // loop_header
      %s25 = sphi 0, %s29
      %p26 = scmp.ge.s32.totalorder %s25, 4
      %s33 = sphi 0, %s33
      %s35 = sphi 0, %s33
      %s36 = sphi 0, %s35
      %s50 = sphi 0, %s36
      %s54 = sphi 0, %s54
      %s56 = sphi 0, %s54
      %s57 = sphi 0, %s56
      %s71 = sphi 0, %s57
      %s75 = sphi 0, %s75
      %s77 = sphi 0, %s75
      %s78 = sphi 0, %s77
      %s92 = sphi 0, %s78
      %s96 = sphi 0, %s96
      %s98 = sphi 0, %s96
      %s99 = sphi 0, %s98
      %s113 = sphi 0, %s99
      %s119 = sphi 0, %s121
      %s122 = sphi 0, %s119
      %s123 = sphi 0, %s122
      %s139 = sphi 0, %s123
      %s145 = sphi 0, %s147
      %s148 = sphi 0, %s145
      %s149 = sphi 0, %s148
      %s165 = sphi 0, %s149
      %s171 = sphi 0, %s173
      %s174 = sphi 0, %s171
      %s175 = sphi 0, %s174
      %s191 = sphi 0, %s175
      %s195 = sphi 0, %s195
      %s197 = sphi 0, %s195
      %s198 = sphi 0, %s197
      %s212 = sphi 0, %s198
      %s216 = sphi 0, %s216
      %s218 = sphi 0, %s216
      %s219 = sphi 0, %s218
      %s233 = sphi 0, %s219
      %s237 = sphi 0, %s237
      %s239 = sphi 0, %s237
      %s240 = sphi 0, %s239
      %s254 = sphi 0, %s240
    $region4: #{aux_classifier.1} parent=1 // loop_header_branch
      %28 = sbr.rel (%p26) target = $region8
    $region5: #{aux_classifier.1} parent=1 // loop_body
      %s30 = ssub.s32 %s25, 1
      %s31 = ssub.s32 %s25, 2
      %s32 = sadd.s32 %s25, 1
      %s34 = sadd.s32 %s33, 1
      %p37 = scmp.eq.s32.totalorder %s25, 1
      %p38 = scmp.ne.s32.totalorder %s33, %s35
      %p39 = scmp.eq.s32.totalorder %s25, 0
      %p40 = por %p38, %p39
      %p41 = scmp.ne.s32.totalorder %s33, %s35
      %p42 = scmp.eq.s32.totalorder %s30, 1
      %p43 = por %p41, %p42
      %p44 = scmp.ne.s32.totalorder %s35, %s36
      %p45 = scmp.eq.s32.totalorder %s30, 0
      %p46 = por %p44, %p45
      %p47 = scmp.ne.s32.totalorder %s35, %s36
      %p48 = scmp.eq.s32.totalorder %s31, 1
      %p49 = por %p47, %p48
      %p51 = scmp.ne.s32.totalorder %s36, %s50
      %p52 = scmp.eq.s32.totalorder %s31, 0
      %p53 = por %p51, %p52
      %s55 = sadd.s32 %s54, 1
      %p58 = scmp.eq.s32.totalorder %s25, 1
      %p59 = scmp.ne.s32.totalorder %s54, %s56
      %p60 = scmp.eq.s32.totalorder %s25, 0
      %p61 = por %p59, %p60
      %p62 = scmp.ne.s32.totalorder %s54, %s56
      %p63 = scmp.eq.s32.totalorder %s30, 1
      %p64 = por %p62, %p63
      %p65 = scmp.ne.s32.totalorder %s56, %s57
      %p66 = scmp.eq.s32.totalorder %s30, 0
      %p67 = por %p65, %p66
      %p68 = scmp.ne.s32.totalorder %s56, %s57
      %p69 = scmp.eq.s32.totalorder %s31, 1
      %p70 = por %p68, %p69
      %p72 = scmp.ne.s32.totalorder %s57, %s71
      %p73 = scmp.eq.s32.totalorder %s31, 0
      %p74 = por %p72, %p73
      %s76 = sadd.s32 %s75, 1
      %p79 = scmp.eq.s32.totalorder %s25, 1
      %p80 = scmp.ne.s32.totalorder %s75, %s77
      %p81 = scmp.eq.s32.totalorder %s25, 0
      %p82 = por %p80, %p81
      %p83 = scmp.ne.s32.totalorder %s75, %s77
      %p84 = scmp.eq.s32.totalorder %s30, 1
      %p85 = por %p83, %p84
      %p86 = scmp.ne.s32.totalorder %s77, %s78
      %p87 = scmp.eq.s32.totalorder %s30, 0
      %p88 = por %p86, %p87
      %p89 = scmp.ne.s32.totalorder %s77, %s78
      %p90 = scmp.eq.s32.totalorder %s31, 1
      %p91 = por %p89, %p90
      %p93 = scmp.ne.s32.totalorder %s78, %s92
      %p94 = scmp.eq.s32.totalorder %s31, 0
      %p95 = por %p93, %p94
      %s97 = sadd.s32 %s96, 1
      %p100 = scmp.eq.s32.totalorder %s25, 1
      %p101 = scmp.ne.s32.totalorder %s96, %s98
      %p102 = scmp.eq.s32.totalorder %s25, 0
      %p103 = por %p101, %p102
      %p104 = scmp.ne.s32.totalorder %s96, %s98
      %p105 = scmp.eq.s32.totalorder %s30, 1
      %p106 = por %p104, %p105
      %p107 = scmp.ne.s32.totalorder %s98, %s99
      %p108 = scmp.eq.s32.totalorder %s30, 0
      %p109 = por %p107, %p108
      %p110 = scmp.ne.s32.totalorder %s98, %s99
      %p111 = scmp.eq.s32.totalorder %s31, 1
      %p112 = por %p110, %p111
      %p114 = scmp.ne.s32.totalorder %s99, %s113
      %p115 = scmp.eq.s32.totalorder %s31, 0
      %p116 = por %p114, %p115
      %s117 = ssub.s32 %s25, %s32
      %p118 = scmp.eq.s32.totalorder %s117, 0
      %s120 = sadd.s32 %s119, 1
      %s121 = scalar_select %p118, %s119, %s120
      %p124 = pneg %p118
      %p125 = scmp.eq.s32.totalorder %s25, 1
      %p126 = por %p124, %p125
      %p127 = scmp.ne.s32.totalorder %s119, %s122
      %p128 = scmp.eq.s32.totalorder %s25, 0
      %p129 = por %p127, %p128
      %p130 = scmp.ne.s32.totalorder %s119, %s122
      %p131 = scmp.eq.s32.totalorder %s30, 1
      %p132 = por %p130, %p131
      %p133 = scmp.ne.s32.totalorder %s122, %s123
      %p134 = scmp.eq.s32.totalorder %s30, 0
      %p135 = por %p133, %p134
      %p136 = scmp.ne.s32.totalorder %s122, %s123
      %p137 = scmp.eq.s32.totalorder %s31, 1
      %p138 = por %p136, %p137
      %p140 = scmp.ne.s32.totalorder %s123, %s139
      %p141 = scmp.eq.s32.totalorder %s31, 0
      %p142 = por %p140, %p141
      %s143 = ssub.s32 %s25, %s32
      %p144 = scmp.eq.s32.totalorder %s143, 0
      %s146 = sadd.s32 %s145, 1
      %s147 = scalar_select %p144, %s145, %s146
      %p150 = pneg %p144
      %p151 = scmp.eq.s32.totalorder %s25, 1
      %p152 = por %p150, %p151
      %p153 = scmp.ne.s32.totalorder %s145, %s148
      %p154 = scmp.eq.s32.totalorder %s25, 0
      %p155 = por %p153, %p154
      %p156 = scmp.ne.s32.totalorder %s145, %s148
      %p157 = scmp.eq.s32.totalorder %s30, 1
      %p158 = por %p156, %p157
      %p159 = scmp.ne.s32.totalorder %s148, %s149
      %p160 = scmp.eq.s32.totalorder %s30, 0
      %p161 = por %p159, %p160
      %p162 = scmp.ne.s32.totalorder %s148, %s149
      %p163 = scmp.eq.s32.totalorder %s31, 1
      %p164 = por %p162, %p163
      %p166 = scmp.ne.s32.totalorder %s149, %s165
      %p167 = scmp.eq.s32.totalorder %s31, 0
      %p168 = por %p166, %p167
      %s169 = ssub.s32 %s25, %s32
      %p170 = scmp.eq.s32.totalorder %s169, 0
      %s172 = sadd.s32 %s171, 1
      %s173 = scalar_select %p170, %s171, %s172
      %p176 = pneg %p170
      %p177 = scmp.eq.s32.totalorder %s25, 1
      %p178 = por %p176, %p177
      %p179 = scmp.ne.s32.totalorder %s171, %s174
      %p180 = scmp.eq.s32.totalorder %s25, 0
      %p181 = por %p179, %p180
      %p182 = scmp.ne.s32.totalorder %s171, %s174
      %p183 = scmp.eq.s32.totalorder %s30, 1
      %p184 = por %p182, %p183
      %p185 = scmp.ne.s32.totalorder %s174, %s175
      %p186 = scmp.eq.s32.totalorder %s30, 0
      %p187 = por %p185, %p186
      %p188 = scmp.ne.s32.totalorder %s174, %s175
      %p189 = scmp.eq.s32.totalorder %s31, 1
      %p190 = por %p188, %p189
      %p192 = scmp.ne.s32.totalorder %s175, %s191
      %p193 = scmp.eq.s32.totalorder %s31, 0
      %p194 = por %p192, %p193
      %s196 = sadd.s32 %s195, 1
      %p199 = scmp.eq.s32.totalorder %s25, 1
      %p200 = scmp.ne.s32.totalorder %s195, %s197
      %p201 = scmp.eq.s32.totalorder %s25, 0
      %p202 = por %p200, %p201
      %p203 = scmp.ne.s32.totalorder %s195, %s197
      %p204 = scmp.eq.s32.totalorder %s30, 1
      %p205 = por %p203, %p204
      %p206 = scmp.ne.s32.totalorder %s197, %s198
      %p207 = scmp.eq.s32.totalorder %s30, 0
      %p208 = por %p206, %p207
      %p209 = scmp.ne.s32.totalorder %s197, %s198
      %p210 = scmp.eq.s32.totalorder %s31, 1
      %p211 = por %p209, %p210
      %p213 = scmp.ne.s32.totalorder %s198, %s212
      %p214 = scmp.eq.s32.totalorder %s31, 0
      %p215 = por %p213, %p214
      %s217 = sadd.s32 %s216, 1
      %p220 = scmp.eq.s32.totalorder %s25, 1
      %p221 = scmp.ne.s32.totalorder %s216, %s218
      %p222 = scmp.eq.s32.totalorder %s25, 0
      %p223 = por %p221, %p222
      %p224 = scmp.ne.s32.totalorder %s216, %s218
      %p225 = scmp.eq.s32.totalorder %s30, 1
      %p226 = por %p224, %p225
      %p227 = scmp.ne.s32.totalorder %s218, %s219
      %p228 = scmp.eq.s32.totalorder %s30, 0
      %p229 = por %p227, %p228
      %p230 = scmp.ne.s32.totalorder %s218, %s219
      %p231 = scmp.eq.s32.totalorder %s31, 1
      %p232 = por %p230, %p231
      %p234 = scmp.ne.s32.totalorder %s219, %s233
      %p235 = scmp.eq.s32.totalorder %s31, 0
      %p236 = por %p234, %p235
      %s238 = sadd.s32 %s237, 1
      %p241 = scmp.eq.s32.totalorder %s25, 1
      %p242 = scmp.ne.s32.totalorder %s237, %s239
      %p243 = scmp.eq.s32.totalorder %s25, 0
      %p244 = por %p242, %p243
      %p245 = scmp.ne.s32.totalorder %s237, %s239
      %p246 = scmp.eq.s32.totalorder %s30, 1
      %p247 = por %p245, %p246
      %p248 = scmp.ne.s32.totalorder %s239, %s240
      %p249 = scmp.eq.s32.totalorder %s30, 0
      %p250 = por %p248, %p249
      %p251 = scmp.ne.s32.totalorder %s239, %s240
      %p252 = scmp.eq.s32.totalorder %s31, 1
      %p253 = por %p251, %p252
      %p255 = scmp.ne.s32.totalorder %s240, %s254
      %p256 = scmp.eq.s32.totalorder %s31, 0
      %p257 = por %p255, %p256
      %p258 = scmp.le.s32.totalorder 1, %s25
      %p259 = scmp.lt.s32.totalorder %s25, 3
      %p260 = pnand %p258, %p259
      %p261 = pneg %p260
      // Predicated region
      $region9: #{aux_classifier.1} parent=5 // pred_check
        _
      $region10: #{aux_classifier.1} parent=5 // pred_check_branch
        %263 = sbr.rel (%p260) target = $region12
      $region11: #{aux_classifier.1} parent=5 // pred_region
        %s264 = ssub.s32 %s25, 1
        // Predicated region
        $region13: #{aux_classifier.1} parent=11 // pred_check
          %p265 = pneg %p46
        $region14: #{aux_classifier.1} parent=11 // pred_check_branch
          %267 = sbr.rel (%p265) target = $region16
        $region15: #{aux_classifier.1} parent=11 // pred_region
          _
        $region16: #{aux_classifier.1} parent=11 // pred_fallthru
          _
        // Predicated region
        $region17: #{aux_classifier.1} parent=11 // pred_check
          %p268 = pneg %p67
        $region18: #{aux_classifier.1} parent=11 // pred_check_branch
          %270 = sbr.rel (%p268) target = $region20
        $region19: #{aux_classifier.1} parent=11 // pred_region
          %s272 = ssub.s32 256, 256
          %273 = vsyncadd [#allocation5], %s272
          %s274 = sshll.u32 [#allocation4], 4
          %s275 = int_to_ptr.vmem [resolvable:$true] %s274
          %280 = dma.hbm_to_vmem [thread:$0]  %s1, 256, %s275, [#allocation5], 128, 128, 8
        $region20: #{aux_classifier.1} parent=11 // pred_fallthru
          _
        // Predicated region
        $region21: #{aux_classifier.1} parent=11 // pred_check
          %p281 = pneg %p88
        $region22: #{aux_classifier.1} parent=11 // pred_check_branch
          %283 = sbr.rel (%p281) target = $region24
        $region23: #{aux_classifier.1} parent=11 // pred_region
          %s285 = ssub.s32 256, 256
          %286 = vsyncadd [#allocation8], %s285
          %s287 = sshll.u32 [#allocation7], 4
          %s288 = int_to_ptr.vmem [resolvable:$true] %s287
          %293 = dma.hbm_to_vmem [thread:$0]  %s2, 256, %s288, [#allocation8], 64, 64, 4
        $region24: #{aux_classifier.1} parent=11 // pred_fallthru
          _
        // Predicated region
        $region25: #{aux_classifier.1} parent=11 // pred_check
          %p294 = pneg %p109
        $region26: #{aux_classifier.1} parent=11 // pred_check_branch
          %296 = sbr.rel (%p294) target = $region28
        $region27: #{aux_classifier.1} parent=11 // pred_region
          %s298 = ssub.s32 16, 16
          %299 = vsyncadd [#allocation8], %s298
          %s301 = sshll.u32 [#allocation9], 4
          %s302 = int_to_ptr.vmem [resolvable:$true] %s301
          %304 = dma.hbm_to_vmem [thread:$0]  %s3, 16, %s302, [#allocation8]
        $region28: #{aux_classifier.1} parent=11 // pred_fallthru
          _
        // Predicated region
        $region29: #{aux_classifier.1} parent=11 // pred_check
          %p305 = pneg %p208
        $region30: #{aux_classifier.1} parent=11 // pred_check_branch
          %307 = sbr.rel (%p305) target = $region32
        $region31: #{aux_classifier.1} parent=11 // pred_region
          %s309 = ssub.s32 8192, 8192
          %310 = vsyncadd [#allocation14], %s309
          %s311 = sshll.u32 [#allocation15], 4
          %s312 = int_to_ptr.vmem [resolvable:$true] %s311
          %317 = dma.hbm_to_vmem [thread:$0]  %s7, 8192, %s312, [#allocation14], 64, 64, 4
        $region32: #{aux_classifier.1} parent=11 // pred_fallthru
          _
        // Predicated region
        $region33: #{aux_classifier.1} parent=11 // pred_check
          %p318 = pneg %p229
        $region34: #{aux_classifier.1} parent=11 // pred_check_branch
          %320 = sbr.rel (%p318) target = $region36
        $region35: #{aux_classifier.1} parent=11 // pred_region
          %s322 = ssub.s32 16, 16
          %323 = vsyncadd [#allocation17], %s322
          %s325 = sshll.u32 [#allocation16], 4
          %s326 = int_to_ptr.vmem [resolvable:$true] %s325
          %328 = dma.hbm_to_vmem [thread:$0]  %s8, 16, %s326, [#allocation17]
        $region36: #{aux_classifier.1} parent=11 // pred_fallthru
          _
      $region12: #{aux_classifier.1} parent=5 // pred_fallthru
        _
      %p329 = scmp.lt.s32.totalorder %s25, 2
      // Predicated region
      $region37: #{aux_classifier.1} parent=5 // pred_check
        %p330 = pneg %p329
      $region38: #{aux_classifier.1} parent=5 // pred_check_branch
        %332 = sbr.rel (%p330) target = $region40
      $region39: #{aux_classifier.1} parent=5 // pred_region
        // Predicated region
        $region41: #{aux_classifier.1} parent=39 // pred_check
          %p333 = pneg %p129
        $region42: #{aux_classifier.1} parent=39 // pred_check_branch
          %335 = sbr.rel (%p333) target = $region44
        $region43: #{aux_classifier.1} parent=39 // pred_region
          %s336 = sand.u32 %s25, 1
          %s337 = scalar_lea.sflag [#allocation11], %s336
          %s338 = sand.u32 %s119, 1
          %s339 = smul.addr %s338, 2048
          %s340 = scalar_lea.vmem [#allocation10], %s339
          %s341 = smul.u32 4, %s25
          %s343 = ssub.s32 32768, 32768
          %344 = vsyncadd %s337, %s343
          %s345 = smul.addr %s341, 128
          %s346 = scalar_lea.hbm %s4, %s345
          %s347 = sshll.u32 %s340, 4
          %s348 = int_to_ptr.vmem [resolvable:$true] %s347
          %353 = dma.hbm_to_vmem [thread:$0]  %s346, 32768, %s348, %s337, 1024, 512, 32
        $region44: #{aux_classifier.1} parent=39 // pred_fallthru
          _
        // Predicated region
        $region45: #{aux_classifier.1} parent=39 // pred_check
          %p354 = pneg %p155
        $region46: #{aux_classifier.1} parent=39 // pred_check_branch
          %356 = sbr.rel (%p354) target = $region48
        $region47: #{aux_classifier.1} parent=39 // pred_region
          %s357 = sand.u32 %s25, 1
          %s358 = scalar_lea.sflag [#allocation11], %s357
          %s359 = sand.u32 %s145, 1
          %s360 = smul.addr %s359, 4
          %s361 = scalar_lea.vmem [#allocation12], %s360
          %s362 = smul.u32 4, %s25
          %s364 = ssub.s32 64, 64
          %365 = vsyncadd %s358, %s364
          %s366 = smul.addr %s362, 16
          %s367 = scalar_lea.hbm %s5, %s366
          %s369 = sshll.u32 %s361, 4
          %s370 = int_to_ptr.vmem [resolvable:$true] %s369
          %372 = dma.hbm_to_vmem [thread:$0]  %s367, 64, %s370, %s358
        $region48: #{aux_classifier.1} parent=39 // pred_fallthru
          _
        // Predicated region
        $region49: #{aux_classifier.1} parent=39 // pred_check
          %p373 = pneg %p181
        $region50: #{aux_classifier.1} parent=39 // pred_check_branch
          %375 = sbr.rel (%p373) target = $region52
        $region51: #{aux_classifier.1} parent=39 // pred_region
          %s376 = sand.u32 %s25, 1
          %s377 = scalar_lea.sflag [#allocation14], %s376
          %s378 = sand.u32 %s171, 1
          %s379 = smul.addr %s378, 4
          %s380 = scalar_lea.vmem [#allocation13], %s379
          %s381 = smul.u32 4, %s25
          %s383 = ssub.s32 64, 64
          %384 = vsyncadd %s377, %s383
          %s385 = smul.addr %s381, 16
          %s386 = scalar_lea.hbm %s6, %s385
          %s388 = sshll.u32 %s380, 4
          %s389 = int_to_ptr.vmem [resolvable:$true] %s388
          %391 = dma.hbm_to_vmem [thread:$0]  %s386, 64, %s389, %s377
        $region52: #{aux_classifier.1} parent=39 // pred_fallthru
          _
      $region40: #{aux_classifier.1} parent=5 // pred_fallthru
        _
      %p392 = scmp.le.s32.totalorder 1, %s25
      %p393 = scmp.lt.s32.totalorder %s25, 3
      %p394 = pnand %p392, %p393
      %p395 = pneg %p394
      // Predicated region
      $region53: #{aux_classifier.1} parent=5 // pred_check
        _
      $region54: #{aux_classifier.1} parent=5 // pred_check_branch
        %397 = sbr.rel (%p394) target = $region56
      $region55: #{aux_classifier.1} parent=5 // pred_region
        %s398 = ssub.s32 %s25, 1
        // Predicated region
        $region57: #{aux_classifier.1} parent=55 // pred_check
          %p399 = pneg %p67
        $region58: #{aux_classifier.1} parent=55 // pred_check_branch
          %401 = sbr.rel (%p399) target = $region60
        $region59: #{aux_classifier.1} parent=55 // pred_region
          %402 = dma.done [#allocation5], 256
        $region60: #{aux_classifier.1} parent=55 // pred_fallthru
          _
        // Predicated region
        $region61: #{aux_classifier.1} parent=55 // pred_check
          %p403 = pneg %p88
        $region62: #{aux_classifier.1} parent=55 // pred_check_branch
          %405 = sbr.rel (%p403) target = $region64
        $region63: #{aux_classifier.1} parent=55 // pred_region
          %406 = dma.done [#allocation8], 256
        $region64: #{aux_classifier.1} parent=55 // pred_fallthru
          _
        // Predicated region
        $region65: #{aux_classifier.1} parent=55 // pred_check
          %p407 = pneg %p109
        $region66: #{aux_classifier.1} parent=55 // pred_check_branch
          %409 = sbr.rel (%p407) target = $region68
        $region67: #{aux_classifier.1} parent=55 // pred_region
          %410 = dma.done [#allocation8], 16
        $region68: #{aux_classifier.1} parent=55 // pred_fallthru
          _
        %s411 = sand.u32 %s30, 1
        %s412 = scalar_lea.sflag [#allocation11], %s411
        %s413 = sand.u32 %s122, 1
        %s414 = smul.addr %s413, 2048
        %s415 = scalar_lea.vmem [#allocation10], %s414
        // Predicated region
        $region69: #{aux_classifier.1} parent=55 // pred_check
          %p416 = pneg %p135
        $region70: #{aux_classifier.1} parent=55 // pred_check_branch
          %418 = sbr.rel (%p416) target = $region72
        $region71: #{aux_classifier.1} parent=55 // pred_region
          %419 = dma.done %s412, 32768
        $region72: #{aux_classifier.1} parent=55 // pred_fallthru
          _
        %s420 = sand.u32 %s30, 1
        %s421 = scalar_lea.sflag [#allocation11], %s420
        %s422 = sand.u32 %s148, 1
        %s423 = smul.addr %s422, 4
        %s424 = scalar_lea.vmem [#allocation12], %s423
        // Predicated region
        $region73: #{aux_classifier.1} parent=55 // pred_check
          %p425 = pneg %p161
        $region74: #{aux_classifier.1} parent=55 // pred_check_branch
          %427 = sbr.rel (%p425) target = $region76
        $region75: #{aux_classifier.1} parent=55 // pred_region
          %428 = dma.done %s421, 64
        $region76: #{aux_classifier.1} parent=55 // pred_fallthru
          _
        %s429 = sand.u32 %s30, 1
        %s430 = scalar_lea.sflag [#allocation14], %s429
        %s431 = sand.u32 %s174, 1
        %s432 = smul.addr %s431, 4
        %s433 = scalar_lea.vmem [#allocation13], %s432
        // Predicated region
        $region77: #{aux_classifier.1} parent=55 // pred_check
          %p434 = pneg %p187
        $region78: #{aux_classifier.1} parent=55 // pred_check_branch
          %436 = sbr.rel (%p434) target = $region80
        $region79: #{aux_classifier.1} parent=55 // pred_region
          %437 = dma.done %s430, 64
        $region80: #{aux_classifier.1} parent=55 // pred_fallthru
          _
        // Predicated region
        $region81: #{aux_classifier.1} parent=55 // pred_check
          %p438 = pneg %p208
        $region82: #{aux_classifier.1} parent=55 // pred_check_branch
          %440 = sbr.rel (%p438) target = $region84
        $region83: #{aux_classifier.1} parent=55 // pred_region
          %441 = dma.done [#allocation14], 8192
        $region84: #{aux_classifier.1} parent=55 // pred_fallthru
          _
        // Predicated region
        $region85: #{aux_classifier.1} parent=55 // pred_check
          %p442 = pneg %p229
        $region86: #{aux_classifier.1} parent=55 // pred_check_branch
          %444 = sbr.rel (%p442) target = $region88
        $region87: #{aux_classifier.1} parent=55 // pred_region
          %445 = dma.done [#allocation17], 16
        $region88: #{aux_classifier.1} parent=55 // pred_fallthru
          _
        %p446 = pneg %p46
        %p447 = pneg %p43
        %p448 = pneg %p67
        %p449 = pneg %p64
        %p450 = pneg %p88
        %p451 = pneg %p85
        %p452 = pneg %p109
        %p453 = pneg %p106
        %s454 = sand.u32 %s30, 1
        %s455 = scalar_lea.sflag [#allocation11], %s454
        %s456 = sand.u32 %s122, 1
        %s457 = smul.addr %s456, 2048
        %s458 = scalar_lea.vmem [#allocation10], %s457
        %p459 = pneg %p135
        %p460 = pneg %p132
        %s461 = sand.u32 %s30, 1
        %s462 = scalar_lea.sflag [#allocation11], %s461
        %s463 = sand.u32 %s148, 1
        %s464 = smul.addr %s463, 4
        %s465 = scalar_lea.vmem [#allocation12], %s464
        %p466 = pneg %p161
        %p467 = pneg %p158
        %s468 = sand.u32 %s30, 1
        %s469 = scalar_lea.sflag [#allocation14], %s468
        %s470 = sand.u32 %s174, 1
        %s471 = smul.addr %s470, 4
        %s472 = scalar_lea.vmem [#allocation13], %s471
        %p473 = pneg %p187
        %p474 = pneg %p184
        %p475 = pneg %p208
        %p476 = pneg %p205
        %p477 = pneg %p229
        %p478 = pneg %p226
        %p479 = pneg %p250
        %p480 = pneg %p247
        %s481 = smul.u32 4, %s30
        %s482 = smul.u32 4, %s30
        %s483 = smul.u32 4, %s30
        %p485 = scmp.eq.s32.totalorder %s30, 0
        // Predicated region
        $region89: #{aux_classifier.1} parent=55 // pred_check
          %p486 = pneg %p485
        $region90: #{aux_classifier.1} parent=55 // pred_check_branch
          %488 = sbr.rel (%p486) target = $region92
        $region91: #{aux_classifier.1} parent=55 // pred_region
          %v489 = vld [vmem:[#allocation4] sm:$0xff]
          %v490 = vld [vmem:[#allocation4 + $0x8] sm:$0xff]
          %v491 = vld [vmem:[#allocation7] sm:$0xf]
          %v492 = vld [vmem:[#allocation7 + $0x4] sm:$0xf]
          %v493 = vld [vmem:[#allocation7 + $0x8] sm:$0xf]
          %v494 = vld [vmem:[#allocation7 + $0xc] sm:$0xf]
          %v495 = vld [vmem:[#allocation9] sm:$0x1]
          %v496 = vld [vmem:[%s0] sm:$0xf]
          %v497 = vld [vmem:[%s0 + $0x4] sm:$0xf]
          %v498 = vld [vmem:[%s0 + $0x8] sm:$0xf]
          %v499 = vld [vmem:[%s0 + $0xc] sm:$0xf]
          %v500 = vld [vmem:[%s0 + $0x10] sm:$0xf]
          %v501 = vld [vmem:[%s0 + $0x14] sm:$0xf]
          %v502 = vld [vmem:[%s0 + $0x18] sm:$0xf]
          %v503 = vld [vmem:[%s0 + $0x1c] sm:$0xf]
          %v504 = vld [vmem:[%s0 + $0x20] sm:$0xf]
          %v505 = vld [vmem:[%s0 + $0x24] sm:$0xf]
          %v506 = vld [vmem:[%s0 + $0x28] sm:$0xf]
          %v507 = vld [vmem:[%s0 + $0x2c] sm:$0xf]
          %v508 = vld [vmem:[%s0 + $0x30] sm:$0xf]
          %v509 = vld [vmem:[%s0 + $0x34] sm:$0xf]
          %v510 = vld [vmem:[%s0 + $0x38] sm:$0xf]
          %v511 = vld [vmem:[%s0 + $0x3c] sm:$0xf]
          %v512 = vld [vmem:[%s0 + $0x40] sm:$0xf]
          %v513 = vld [vmem:[%s0 + $0x44] sm:$0xf]
          %v514 = vld [vmem:[%s0 + $0x48] sm:$0xf]
          %v515 = vld [vmem:[%s0 + $0x4c] sm:$0xf]
          %v516 = vld [vmem:[%s0 + $0x50] sm:$0xf]
          %v517 = vld [vmem:[%s0 + $0x54] sm:$0xf]
          %v518 = vld [vmem:[%s0 + $0x58] sm:$0xf]
          %v519 = vld [vmem:[%s0 + $0x5c] sm:$0xf]
          %v520 = vld [vmem:[%s0 + $0x60] sm:$0x3]
          %v523 = vunpack.c.l.b16 %v489
          %v524 = vunpack.c.h.b16 %v489
          %v525 = vunpack.c.l.b16 %v490
          %v526 = vunpack.c.h.b16 %v490
          %v527 = vpack.c.b16 %v525, %v523
          %v528 = vpack.c.b16 %v526, %v524
          %v555 = vunpack.c.l.b16 %v496
          %v556 = vunpack.c.l.b16 %v497
          %v557 = vunpack.c.l.b16 %v498
          %v558 = vunpack.c.l.b16 %v499
          %v559 = vunpack.c.l.b16 %v500
          %v560 = vunpack.c.l.b16 %v501
          %v561 = vunpack.c.l.b16 %v502
          %v562 = vunpack.c.l.b16 %v503
          %v563 = vunpack.c.l.b16 %v504
          %v564 = vunpack.c.l.b16 %v505
          %v565 = vunpack.c.l.b16 %v506
          %v566 = vunpack.c.l.b16 %v507
          %v567 = vunpack.c.l.b16 %v508
          %v568 = vunpack.c.l.b16 %v509
          %v569 = vunpack.c.l.b16 %v510
          %v570 = vunpack.c.l.b16 %v511
          %v571 = vunpack.c.l.b16 %v512
          %v572 = vunpack.c.l.b16 %v513
          %v573 = vunpack.c.l.b16 %v514
          %v574 = vunpack.c.l.b16 %v515
          %v575 = vunpack.c.l.b16 %v516
          %v576 = vunpack.c.l.b16 %v517
          %v577 = vunpack.c.l.b16 %v518
          %v578 = vunpack.c.l.b16 %v519
          %v579 = vunpack.c.l.b16 %v520
          %v580 = vpack.c.b16 %v556, %v555
          %v581 = vpack.c.b16 %v558, %v557
          %v582 = vpack.c.b16 %v560, %v559
          %v583 = vpack.c.b16 %v562, %v561
          %v584 = vpack.c.b16 %v564, %v563
          %v585 = vpack.c.b16 %v566, %v565
          %v586 = vpack.c.b16 %v568, %v567
          %v587 = vpack.c.b16 %v570, %v569
          %v588 = vpack.c.b16 %v572, %v571
          %v589 = vpack.c.b16 %v574, %v573
          %v590 = vpack.c.b16 %v576, %v575
          %v591 = vpack.c.b16 %v578, %v577
          %v592 = vpack.c.b16 %v579, %v579
          %vm605 = vcmask 556032
          %v607 = vsel %vm605, %v528, 0
          %vm609 = vcmask 1041408
          %v611 = vsel %vm609, %v592, 0
          %613 = vmatprep.subr.bf16.mxu0 0
          %614 = vmatpush1.bf16.msra.mxu0 %v580
          %615 = vmatprep.subr.bf16.mxu0 0
          %616 = vmatpush1.bf16.msra.mxu0 %v581
          %617 = vmatprep.subr.bf16.mxu0 0
          %618 = vmatpush1.bf16.msra.mxu0 %v582
          %619 = vmatprep.subr.bf16.mxu0 0
          %620 = vmatpush1.bf16.msra.mxu0 %v583
          %621 = vmatprep.subr.bf16.mxu0 0
          %622 = vmatpush1.bf16.msra.mxu0 %v584
          %623 = vmatprep.subr.bf16.mxu0 0
          %624 = vmatpush1.bf16.msra.mxu0 %v585
          %625 = vmatprep.subr.bf16.mxu0 0
          %626 = vmatpush1.bf16.msra.mxu0 %v586
          %627 = vmatprep.subr.bf16.mxu0 0
          %628 = vmatpush1.bf16.msra.mxu0 %v587
          %629 = vmatprep.subr.bf16.mxu0 0
          %630 = vmatpush1.bf16.msra.mxu0 %v588
          %631 = vmatprep.subr.bf16.mxu0 0
          %632 = vmatpush1.bf16.msra.mxu0 %v589
          %633 = vmatprep.subr.bf16.mxu0 0
          %634 = vmatpush1.bf16.msra.mxu0 %v590
          %635 = vmatprep.subr.bf16.mxu0 0
          %636 = vmatpush1.bf16.msra.mxu0 %v591
          %637 = vmatprep.subr.bf16.mxu0 0
          %638 = vmatpush1.bf16.msra.mxu0 %v611
          %639 = vmatprep.subr.bf16.mxu0 0
          %640 = vmatpush1.bf16.msra.mxu0 0
          %641 = vmatprep.subr.bf16.mxu0 0
          %642 = vmatpush1.bf16.msra.mxu0 0
          %643 = vmatprep.subr.bf16.mxu0 0
          %644 = vmatpush1.bf16.msra.mxu0 0
          %645 = vmatprep.mubr.bf16.mxu0 %v607
          %646 = vmatmul.mubr.bf16.gmra.mrb[0].mxu0 %v527
          %v647 = vpop.f32.mrb[0].mxu0
          %v648 = vadd.f32 0.0, %v647
          %v649 = vpop.f32.mrb[0].mxu0
          %v650 = vpop.f32.mrb[0].mxu0
          %v651 = vadd.f32 0.0, %v650
          %v652 = vpop.f32.mrb[0].mxu0
          %653 = vdwg.mxu0
          %v654 = vpack.c.bf16 %v651, %v648
          %v656 = vlaneseq
          %v657 = vshrl.u32 %v656, 7
          %v658 = vsub.s32 0, %v657
          %v659 = vrot.slane %v495, %v658
          %v665 = vunpack.c.l.b16 %v491
          %v666 = vunpack.c.l.b16 %v492
          %v667 = vunpack.c.l.b16 %v493
          %v668 = vunpack.c.l.b16 %v494
          %v669 = vpack.c.b16 %v666, %v665
          %v670 = vpack.c.b16 %v668, %v667
          %vm673 = vcmask 261120
          %v675 = vsel %vm673, %v654, 0
          %677 = vmatprep.subr.bf16.mxu0 0
          %678 = vmatpush1.bf16.msra.mxu0 %v669
          %679 = vmatprep.subr.bf16.mxu0 0
          %680 = vmatpush1.bf16.msra.mxu0 %v670
          %681 = vmatprep.subr.bf16.mxu0 0
          %682 = vmatpush1.bf16.msra.mxu0 0
          %683 = vmatprep.subr.bf16.mxu0 0
          %684 = vmatpush1.bf16.msra.mxu0 0
          %685 = vmatprep.subr.bf16.mxu0 0
          %686 = vmatpush1.bf16.msra.mxu0 0
          %687 = vmatprep.subr.bf16.mxu0 0
          %688 = vmatpush1.bf16.msra.mxu0 0
          %689 = vmatprep.subr.bf16.mxu0 0
          %690 = vmatpush1.bf16.msra.mxu0 0
          %691 = vmatprep.subr.bf16.mxu0 0
          %692 = vmatpush1.bf16.msra.mxu0 0
          %693 = vmatprep.subr.bf16.mxu0 0
          %694 = vmatpush1.bf16.msra.mxu0 0
          %695 = vmatprep.subr.bf16.mxu0 0
          %696 = vmatpush1.bf16.msra.mxu0 0
          %697 = vmatprep.subr.bf16.mxu0 0
          %698 = vmatpush1.bf16.msra.mxu0 0
          %699 = vmatprep.subr.bf16.mxu0 0
          %700 = vmatpush1.bf16.msra.mxu0 0
          %701 = vmatprep.subr.bf16.mxu0 0
          %702 = vmatpush1.bf16.msra.mxu0 0
          %703 = vmatprep.subr.bf16.mxu0 0
          %704 = vmatpush1.bf16.msra.mxu0 0
          %705 = vmatprep.subr.bf16.mxu0 0
          %706 = vmatpush1.bf16.msra.mxu0 0
          %707 = vmatprep.subr.bf16.mxu0 0
          %708 = vmatpush1.bf16.msra.mxu0 0
          %709 = vmatprep.mubr.bf16.mxu0 0
          %710 = vmatmul.mubr.bf16.gmra.mrb[0].mxu0 %v675
          %v711 = vpop.f32.mrb[0].mxu0
          %v712 = vadd.f32 %v659, %v711
          %v713 = vpop.f32.mrb[0].mxu0
          %v714 = vpop.f32.mrb[0].mxu0
          %v715 = vadd.f32 %v659, %v714
          %v716 = vpop.f32.mrb[0].mxu0
          %717 = vdwg.mxu0
          %v718 = vmax.f32 %v712, 0.0
          %v719 = vmax.f32 %v715, 0.0
          %v720 = vpack.c.bf16 %v719, %v718
          %s721 = scalar_lea.vmem %s0, 100
          %v722 = vld [vmem:[%s721] sm:$0xf]
          %v723 = vld [vmem:[%s721 + $0x4] sm:$0xf]
          %v724 = vld [vmem:[%s721 + $0x8] sm:$0xf]
          %v725 = vld [vmem:[%s721 + $0xc] sm:$0xf]
          %v726 = vld [vmem:[%s721 + $0x10] sm:$0xf]
          %v727 = vld [vmem:[%s721 + $0x14] sm:$0xf]
          %v728 = vld [vmem:[%s721 + $0x18] sm:$0xf]
          %v729 = vld [vmem:[%s721 + $0x1c] sm:$0xf]
          %v730 = vld [vmem:[%s721 + $0x20] sm:$0xf]
          %v731 = vld [vmem:[%s721 + $0x24] sm:$0xf]
          %v732 = vld [vmem:[%s721 + $0x28] sm:$0xf]
          %v733 = vld [vmem:[%s721 + $0x2c] sm:$0xf]
          %v734 = vld [vmem:[%s721 + $0x30] sm:$0xf]
          %v735 = vld [vmem:[%s721 + $0x34] sm:$0xf]
          %v736 = vld [vmem:[%s721 + $0x38] sm:$0xf]
          %v737 = vld [vmem:[%s721 + $0x3c] sm:$0xf]
          %v738 = vld [vmem:[%s721 + $0x40] sm:$0xf]
          %v739 = vld [vmem:[%s721 + $0x44] sm:$0xf]
          %v740 = vld [vmem:[%s721 + $0x48] sm:$0xf]
          %v741 = vld [vmem:[%s721 + $0x4c] sm:$0xf]
          %v742 = vld [vmem:[%s721 + $0x50] sm:$0xf]
          %v743 = vld [vmem:[%s721 + $0x54] sm:$0xf]
          %v744 = vld [vmem:[%s721 + $0x58] sm:$0xf]
          %v745 = vld [vmem:[%s721 + $0x5c] sm:$0xf]
          %v746 = vld [vmem:[%s721 + $0x60] sm:$0x3]
          %v772 = vunpack.c.l.b16 %v722
          %v773 = vunpack.c.l.b16 %v723
          %v774 = vunpack.c.l.b16 %v724
          %v775 = vunpack.c.l.b16 %v725
          %v776 = vunpack.c.l.b16 %v726
          %v777 = vunpack.c.l.b16 %v727
          %v778 = vunpack.c.l.b16 %v728
          %v779 = vunpack.c.l.b16 %v729
          %v780 = vunpack.c.l.b16 %v730
          %v781 = vunpack.c.l.b16 %v731
          %v782 = vunpack.c.l.b16 %v732
          %v783 = vunpack.c.l.b16 %v733
          %v784 = vunpack.c.l.b16 %v734
          %v785 = vunpack.c.l.b16 %v735
          %v786 = vunpack.c.l.b16 %v736
          %v787 = vunpack.c.l.b16 %v737
          %v788 = vunpack.c.l.b16 %v738
          %v789 = vunpack.c.l.b16 %v739
          %v790 = vunpack.c.l.b16 %v740
          %v791 = vunpack.c.l.b16 %v741
          %v792 = vunpack.c.l.b16 %v742
          %v793 = vunpack.c.l.b16 %v743
          %v794 = vunpack.c.l.b16 %v744
          %v795 = vunpack.c.l.b16 %v745
          %v796 = vunpack.c.l.b16 %v746
          %v797 = vpack.c.b16 %v773, %v772
          %v798 = vpack.c.b16 %v775, %v774
          %v799 = vpack.c.b16 %v777, %v776
          %v800 = vpack.c.b16 %v779, %v778
          %v801 = vpack.c.b16 %v781, %v780
          %v802 = vpack.c.b16 %v783, %v782
          %v803 = vpack.c.b16 %v785, %v784
          %v804 = vpack.c.b16 %v787, %v786
          %v805 = vpack.c.b16 %v789, %v788
          %v806 = vpack.c.b16 %v791, %v790
          %v807 = vpack.c.b16 %v793, %v792
          %v808 = vpack.c.b16 %v795, %v794
          %v809 = vpack.c.b16 %v796, %v796
          %v823 = vsel %vm609, %v809, 0
          %825 = vmatprep.subr.bf16.mxu0 0
          %826 = vmatpush1.bf16.msra.mxu0 %v797
          %827 = vmatprep.subr.bf16.mxu0 0
          %828 = vmatpush1.bf16.msra.mxu0 %v798
          %829 = vmatprep.subr.bf16.mxu0 0
          %830 = vmatpush1.bf16.msra.mxu0 %v799
          %831 = vmatprep.subr.bf16.mxu0 0
          %832 = vmatpush1.bf16.msra.mxu0 %v800
          %833 = vmatprep.subr.bf16.mxu0 0
          %834 = vmatpush1.bf16.msra.mxu0 %v801
          %835 = vmatprep.subr.bf16.mxu0 0
          %836 = vmatpush1.bf16.msra.mxu0 %v802
          %837 = vmatprep.subr.bf16.mxu0 0
          %838 = vmatpush1.bf16.msra.mxu0 %v803
          %839 = vmatprep.subr.bf16.mxu0 0
          %840 = vmatpush1.bf16.msra.mxu0 %v804
          %841 = vmatprep.subr.bf16.mxu0 0
          %842 = vmatpush1.bf16.msra.mxu0 %v805
          %843 = vmatprep.subr.bf16.mxu0 0
          %844 = vmatpush1.bf16.msra.mxu0 %v806
          %845 = vmatprep.subr.bf16.mxu0 0
          %846 = vmatpush1.bf16.msra.mxu0 %v807
          %847 = vmatprep.subr.bf16.mxu0 0
          %848 = vmatpush1.bf16.msra.mxu0 %v808
          %849 = vmatprep.subr.bf16.mxu0 0
          %850 = vmatpush1.bf16.msra.mxu0 %v823
          %851 = vmatprep.subr.bf16.mxu0 0
          %852 = vmatpush1.bf16.msra.mxu0 0
          %853 = vmatprep.subr.bf16.mxu0 0
          %854 = vmatpush1.bf16.msra.mxu0 0
          %855 = vmatprep.subr.bf16.mxu0 0
          %856 = vmatpush1.bf16.msra.mxu0 0
          %857 = vmatprep.mubr.bf16.mxu0 %v607
          %858 = vmatmul.mubr.bf16.gmra.mrb[0].mxu0 %v527
          %v859 = vpop.f32.mrb[0].mxu0
          %v860 = vadd.f32 0.0, %v859
          %v861 = vpop.f32.mrb[0].mxu0
          %v862 = vpop.f32.mrb[0].mxu0
          %v863 = vadd.f32 0.0, %v862
          %v864 = vpop.f32.mrb[0].mxu0
          %865 = vdwg.mxu0
          %v866 = vpack.c.bf16 %v863, %v860
          %v868 = vsel %vm673, %v866, 0
          %870 = vmatprep.subr.bf16.mxu0 0
          %871 = vmatpush1.bf16.msra.mxu0 %v669
          %872 = vmatprep.subr.bf16.mxu0 0
          %873 = vmatpush1.bf16.msra.mxu0 %v670
          %874 = vmatprep.subr.bf16.mxu0 0
          %875 = vmatpush1.bf16.msra.mxu0 0
          %876 = vmatprep.subr.bf16.mxu0 0
          %877 = vmatpush1.bf16.msra.mxu0 0
          %878 = vmatprep.subr.bf16.mxu0 0
          %879 = vmatpush1.bf16.msra.mxu0 0
          %880 = vmatprep.subr.bf16.mxu0 0
          %881 = vmatpush1.bf16.msra.mxu0 0
          %882 = vmatprep.subr.bf16.mxu0 0
          %883 = vmatpush1.bf16.msra.mxu0 0
          %884 = vmatprep.subr.bf16.mxu0 0
          %885 = vmatpush1.bf16.msra.mxu0 0
          %886 = vmatprep.subr.bf16.mxu0 0
          %887 = vmatpush1.bf16.msra.mxu0 0
          %888 = vmatprep.subr.bf16.mxu0 0
          %889 = vmatpush1.bf16.msra.mxu0 0
          %890 = vmatprep.subr.bf16.mxu0 0
          %891 = vmatpush1.bf16.msra.mxu0 0
          %892 = vmatprep.subr.bf16.mxu0 0
          %893 = vmatpush1.bf16.msra.mxu0 0
          %894 = vmatprep.subr.bf16.mxu0 0
          %895 = vmatpush1.bf16.msra.mxu0 0
          %896 = vmatprep.subr.bf16.mxu0 0
          %897 = vmatpush1.bf16.msra.mxu0 0
          %898 = vmatprep.subr.bf16.mxu0 0
          %899 = vmatpush1.bf16.msra.mxu0 0
          %900 = vmatprep.subr.bf16.mxu0 0
          %901 = vmatpush1.bf16.msra.mxu0 0
          %902 = vmatprep.mubr.bf16.mxu0 0
          %903 = vmatmul.mubr.bf16.gmra.mrb[0].mxu0 %v868
          %v904 = vpop.f32.mrb[0].mxu0
          %v905 = vadd.f32 %v659, %v904
          %v906 = vpop.f32.mrb[0].mxu0
          %v907 = vpop.f32.mrb[0].mxu0
          %v908 = vadd.f32 %v659, %v907
          %v909 = vpop.f32.mrb[0].mxu0
          %910 = vdwg.mxu0
          %v911 = vmax.f32 %v905, 0.0
          %v912 = vmax.f32 %v908, 0.0
          %v913 = vpack.c.bf16 %v912, %v911
          %v915 = vunpack.c.l.b16 %v720
          %v916 = vunpack.c.h.b16 %v720
          %v917 = vpack.i.b16 %v915, %v915
          %v918 = vpack.i.b16 %v916, %v916
          %v919 = vlaneseq
          %v920 = vshrl.u32 %v919, 7
          %v921 = vsub.s32 0, %v920
          %v922 = vrot.slane %v917, %v921
          %v923 = vlaneseq
          %v924 = vshrl.u32 %v923, 7
          %v925 = vsub.s32 1, %v924
          %v926 = vrot.slane %v917, %v925
          %v927 = vlaneseq
          %v928 = vshrl.u32 %v927, 7
          %v929 = vsub.s32 2, %v928
          %v930 = vrot.slane %v917, %v929
          %v931 = vlaneseq
          %v932 = vshrl.u32 %v931, 7
          %v933 = vsub.s32 3, %v932
          %v934 = vrot.slane %v917, %v933
          %v935 = vlaneseq
          %v936 = vshrl.u32 %v935, 7
          %v937 = vsub.s32 4, %v936
          %v938 = vrot.slane %v917, %v937
          %v939 = vlaneseq
          %v940 = vshrl.u32 %v939, 7
          %v941 = vsub.s32 5, %v940
          %v942 = vrot.slane %v917, %v941
          %v943 = vlaneseq
          %v944 = vshrl.u32 %v943, 7
          %v945 = vsub.s32 6, %v944
          %v946 = vrot.slane %v917, %v945
          %v947 = vlaneseq
          %v948 = vshrl.u32 %v947, 7
          %v949 = vsub.s32 7, %v948
          %v950 = vrot.slane %v917, %v949
          %v951 = vlaneseq
          %v952 = vshrl.u32 %v951, 7
          %v953 = vsub.s32 0, %v952
          %v954 = vrot.slane %v918, %v953
          %v955 = vlaneseq
          %v956 = vshrl.u32 %v955, 7
          %v957 = vsub.s32 1, %v956
          %v958 = vrot.slane %v918, %v957
          %v959 = vlaneseq
          %v960 = vshrl.u32 %v959, 7
          %v961 = vsub.s32 2, %v960
          %v962 = vrot.slane %v918, %v961
          %v963 = vlaneseq
          %v964 = vshrl.u32 %v963, 7
          %v965 = vsub.s32 3, %v964
          %v966 = vrot.slane %v918, %v965
          %v967 = vlaneseq
          %v968 = vshrl.u32 %v967, 7
          %v969 = vsub.s32 4, %v968
          %v970 = vrot.slane %v918, %v969
          %v971 = vlaneseq
          %v972 = vshrl.u32 %v971, 7
          %v973 = vsub.s32 5, %v972
          %v974 = vrot.slane %v918, %v973
          %v975 = vlaneseq
          %v976 = vshrl.u32 %v975, 7
          %v977 = vsub.s32 6, %v976
          %v978 = vrot.slane %v918, %v977
          %v979 = vlaneseq
          %v980 = vshrl.u32 %v979, 7
          %v981 = vsub.s32 7, %v980
          %v982 = vrot.slane %v918, %v981
          %v1000 = vunpack.c.l.b16 %v913
          %v1001 = vunpack.c.h.b16 %v913
          %v1002 = vpack.i.b16 %v1000, %v1000
          %v1003 = vpack.i.b16 %v1001, %v1001
          %v1004 = vlaneseq
          %v1005 = vshrl.u32 %v1004, 7
          %v1006 = vsub.s32 0, %v1005
          %v1007 = vrot.slane %v1002, %v1006
          %v1008 = vlaneseq
          %v1009 = vshrl.u32 %v1008, 7
          %v1010 = vsub.s32 1, %v1009
          %v1011 = vrot.slane %v1002, %v1010
          %v1012 = vlaneseq
          %v1013 = vshrl.u32 %v1012, 7
          %v1014 = vsub.s32 2, %v1013
          %v1015 = vrot.slane %v1002, %v1014
          %v1016 = vlaneseq
          %v1017 = vshrl.u32 %v1016, 7
          %v1018 = vsub.s32 3, %v1017
          %v1019 = vrot.slane %v1002, %v1018
          %v1020 = vlaneseq
          %v1021 = vshrl.u32 %v1020, 7
          %v1022 = vsub.s32 4, %v1021
          %v1023 = vrot.slane %v1002, %v1022
          %v1024 = vlaneseq
          %v1025 = vshrl.u32 %v1024, 7
          %v1026 = vsub.s32 5, %v1025
          %v1027 = vrot.slane %v1002, %v1026
          %v1028 = vlaneseq
          %v1029 = vshrl.u32 %v1028, 7
          %v1030 = vsub.s32 6, %v1029
          %v1031 = vrot.slane %v1002, %v1030
          %v1032 = vlaneseq
          %v1033 = vshrl.u32 %v1032, 7
          %v1034 = vsub.s32 7, %v1033
          %v1035 = vrot.slane %v1002, %v1034
          %v1036 = vlaneseq
          %v1037 = vshrl.u32 %v1036, 7
          %v1038 = vsub.s32 0, %v1037
          %v1039 = vrot.slane %v1003, %v1038
          %v1040 = vlaneseq
          %v1041 = vshrl.u32 %v1040, 7
          %v1042 = vsub.s32 1, %v1041
          %v1043 = vrot.slane %v1003, %v1042
          %v1044 = vlaneseq
          %v1045 = vshrl.u32 %v1044, 7
          %v1046 = vsub.s32 2, %v1045
          %v1047 = vrot.slane %v1003, %v1046
          %v1048 = vlaneseq
          %v1049 = vshrl.u32 %v1048, 7
          %v1050 = vsub.s32 3, %v1049
          %v1051 = vrot.slane %v1003, %v1050
          %v1052 = vlaneseq
          %v1053 = vshrl.u32 %v1052, 7
          %v1054 = vsub.s32 4, %v1053
          %v1055 = vrot.slane %v1003, %v1054
          %v1056 = vlaneseq
          %v1057 = vshrl.u32 %v1056, 7
          %v1058 = vsub.s32 5, %v1057
          %v1059 = vrot.slane %v1003, %v1058
          %v1060 = vlaneseq
          %v1061 = vshrl.u32 %v1060, 7
          %v1062 = vsub.s32 6, %v1061
          %v1063 = vrot.slane %v1003, %v1062
          %v1064 = vlaneseq
          %v1065 = vshrl.u32 %v1064, 7
          %v1066 = vsub.s32 7, %v1065
          %v1067 = vrot.slane %v1003, %v1066
          %vm1084 = vcmask 1040384
          %vm1085 = vsmask.f32 256
          %vm1086 = vmand %vm1084, %vm1085
          %v1087 = vsel %vm1086, %v922, %v1007
          %v1088 = vsel %vm1086, %v926, %v1011
          %v1089 = vsel %vm1086, %v930, %v1015
          %v1090 = vsel %vm1086, %v934, %v1019
          %v1091 = vsel %vm1086, %v938, %v1023
          %v1092 = vsel %vm1086, %v942, %v1027
          %v1093 = vsel %vm1086, %v946, %v1031
          %v1094 = vsel %vm1086, %v950, %v1035
          %v1095 = vsel %vm1086, %v954, %v1039
          %v1096 = vsel %vm1086, %v958, %v1043
          %v1097 = vsel %vm1086, %v962, %v1047
          %v1098 = vsel %vm1086, %v966, %v1051
          %v1099 = vsel %vm1086, %v970, %v1055
          %v1100 = vsel %vm1086, %v974, %v1059
          %v1101 = vsel %vm1086, %v978, %v1063
          %v1102 = vsel %vm1086, %v982, %v1067
          %v1119 = vcombine.low %v1087, %v1088
          %v1120 = vcombine.low %v1089, %v1090
          %v1121 = vcombine.low %v1091, %v1092
          %v1122 = vcombine.low %v1093, %v1094
          %v1124 = vunpack.c.l.s4 1966171168
          %v1125 = vunpack.c.0.s8 %v1124
          %v1126 = vlaneseq
          %v1127 = vshrl.u32 %v1126, 7
          %v1128 = vsub.s32 %v1125, %v1127
          %v1129 = vrot.slane %v1119, %v1128
          %v1131 = vunpack.c.l.s4 1966171168
          %v1132 = vunpack.c.0.s8 %v1131
          %v1133 = vlaneseq
          %v1134 = vshrl.u32 %v1133, 7
          %v1135 = vsub.s32 %v1132, %v1134
          %v1136 = vrot.slane %v1120, %v1135
          %v1138 = vunpack.c.l.s4 1966171168
          %v1139 = vunpack.c.0.s8 %v1138
          %v1140 = vlaneseq
          %v1141 = vshrl.u32 %v1140, 7
          %v1142 = vsub.s32 %v1139, %v1141
          %v1143 = vrot.slane %v1121, %v1142
          %v1145 = vunpack.c.l.s4 1966171168
          %v1146 = vunpack.c.0.s8 %v1145
          %v1147 = vlaneseq
          %v1148 = vshrl.u32 %v1147, 7
          %v1149 = vsub.s32 %v1146, %v1148
          %v1150 = vrot.slane %v1122, %v1149
          %v1151 = vcombine.low %v1129, %v1136
          %v1152 = vcombine.low %v1143, %v1150
          %v1154 = vunpack.c.l.s4 1966171168
          %v1155 = vunpack.c.0.s8 %v1154
          %v1156 = vlaneseq
          %v1157 = vshrl.u32 %v1156, 7
          %v1158 = vsub.s32 %v1155, %v1157
          %v1159 = vrot.slane %v1151, %v1158
          %v1161 = vunpack.c.l.s4 1966171168
          %v1162 = vunpack.c.0.s8 %v1161
          %v1163 = vlaneseq
          %v1164 = vshrl.u32 %v1163, 7
          %v1165 = vsub.s32 %v1162, %v1164
          %v1166 = vrot.slane %v1152, %v1165
          %v1167 = vcombine.low %v1159, %v1166
          %v1168 = vcombine.low %v1095, %v1096
          %v1169 = vcombine.low %v1097, %v1098
          %v1170 = vcombine.low %v1099, %v1100
          %v1171 = vcombine.low %v1101, %v1102
          %v1173 = vunpack.c.l.s4 1966171168
          %v1174 = vunpack.c.0.s8 %v1173
          %v1175 = vlaneseq
          %v1176 = vshrl.u32 %v1175, 7
          %v1177 = vsub.s32 %v1174, %v1176
          %v1178 = vrot.slane %v1168, %v1177
          %v1180 = vunpack.c.l.s4 1966171168
          %v1181 = vunpack.c.0.s8 %v1180
          %v1182 = vlaneseq
          %v1183 = vshrl.u32 %v1182, 7
          %v1184 = vsub.s32 %v1181, %v1183
          %v1185 = vrot.slane %v1169, %v1184
          %v1187 = vunpack.c.l.s4 1966171168
          %v1188 = vunpack.c.0.s8 %v1187
          %v1189 = vlaneseq
          %v1190 = vshrl.u32 %v1189, 7
          %v1191 = vsub.s32 %v1188, %v1190
          %v1192 = vrot.slane %v1170, %v1191
          %v1194 = vunpack.c.l.s4 1966171168
          %v1195 = vunpack.c.0.s8 %v1194
          %v1196 = vlaneseq
          %v1197 = vshrl.u32 %v1196, 7
          %v1198 = vsub.s32 %v1195, %v1197
          %v1199 = vrot.slane %v1171, %v1198
          %v1200 = vcombine.low %v1178, %v1185
          %v1201 = vcombine.low %v1192, %v1199
          %v1203 = vunpack.c.l.s4 1966171168
          %v1204 = vunpack.c.0.s8 %v1203
          %v1205 = vlaneseq
          %v1206 = vshrl.u32 %v1205, 7
          %v1207 = vsub.s32 %v1204, %v1206
          %v1208 = vrot.slane %v1200, %v1207
          %v1210 = vunpack.c.l.s4 1966171168
          %v1211 = vunpack.c.0.s8 %v1210
          %v1212 = vlaneseq
          %v1213 = vshrl.u32 %v1212, 7
          %v1214 = vsub.s32 %v1211, %v1213
          %v1215 = vrot.slane %v1201, %v1214
          %v1216 = vcombine.low %v1208, %v1215
          %1219 = vst [vmem:[#allocation2] sm:$0xff] %v1167
          %1220 = vst [vmem:[#allocation2 + $0x8] sm:$0xff] %v1216
        $region92: #{aux_classifier.1} parent=55 // pred_fallthru
          _
        %v1221 = vld [vmem:[%s415] sm:$0xff]
        %v1222 = vld [vmem:[%s415 + $0x8] sm:$0xff]
        %v1223 = vld [vmem:[%s415 + $0x10] sm:$0xff]
        %v1224 = vld [vmem:[%s415 + $0x18] sm:$0xff]
        %v1225 = vld [vmem:[%s415 + $0x20] sm:$0xff]
        %v1226 = vld [vmem:[%s415 + $0x28] sm:$0xff]
        %v1227 = vld [vmem:[%s415 + $0x30] sm:$0xff]
        %v1228 = vld [vmem:[%s415 + $0x38] sm:$0xff]
        %v1229 = vld [vmem:[%s415 + $0x40] sm:$0xff]
        %v1230 = vld [vmem:[%s415 + $0x48] sm:$0xff]
        %v1231 = vld [vmem:[%s415 + $0x50] sm:$0xff]
        %v1232 = vld [vmem:[%s415 + $0x58] sm:$0xff]
        %v1233 = vld [vmem:[%s415 + $0x60] sm:$0xff]
        %v1234 = vld [vmem:[%s415 + $0x68] sm:$0xff]
        %v1235 = vld [vmem:[%s415 + $0x70] sm:$0xff]
        %v1236 = vld [vmem:[%s415 + $0x78] sm:$0xff]
        %v1237 = vld [vmem:[%s415 + $0x80] sm:$0xff]
        %v1238 = vld [vmem:[%s415 + $0x88] sm:$0xff]
        %v1239 = vld [vmem:[%s415 + $0x90] sm:$0xff]
        %v1240 = vld [vmem:[%s415 + $0x98] sm:$0xff]
        %v1241 = vld [vmem:[%s415 + $0xa0] sm:$0xff]
        %v1242 = vld [vmem:[%s415 + $0xa8] sm:$0xff]
        %v1243 = vld [vmem:[%s415 + $0xb0] sm:$0xff]
        %v1244 = vld [vmem:[%s415 + $0xb8] sm:$0xff]
        %v1245 = vld [vmem:[%s415 + $0xc0] sm:$0xff]
        %v1246 = vld [vmem:[%s415 + $0xc8] sm:$0xff]
        %v1247 = vld [vmem:[%s415 + $0xd0] sm:$0xff]
        %v1248 = vld [vmem:[%s415 + $0xd8] sm:$0xff]
        %v1249 = vld [vmem:[%s415 + $0xe0] sm:$0xff]
        %v1250 = vld [vmem:[%s415 + $0xe8] sm:$0xff]
        %v1251 = vld [vmem:[%s415 + $0xf0] sm:$0xff]
        %v1252 = vld [vmem:[%s415 + $0xf8] sm:$0xff]
        %v1253 = vld [vmem:[%s415 + $0x100] sm:$0xff]
        %v1254 = vld [vmem:[%s415 + $0x108] sm:$0xff]
        %v1255 = vld [vmem:[%s415 + $0x110] sm:$0xff]
        %v1256 = vld [vmem:[%s415 + $0x118] sm:$0xff]
        %v1257 = vld [vmem:[%s415 + $0x120] sm:$0xff]
        %v1258 = vld [vmem:[%s415 + $0x128] sm:$0xff]
        %v1259 = vld [vmem:[%s415 + $0x130] sm:$0xff]
        %v1260 = vld [vmem:[%s415 + $0x138] sm:$0xff]
        %v1261 = vld [vmem:[%s415 + $0x140] sm:$0xff]
        %v1262 = vld [vmem:[%s415 + $0x148] sm:$0xff]
        %v1263 = vld [vmem:[%s415 + $0x150] sm:$0xff]
        %v1264 = vld [vmem:[%s415 + $0x158] sm:$0xff]
        %v1265 = vld [vmem:[%s415 + $0x160] sm:$0xff]
        %v1266 = vld [vmem:[%s415 + $0x168] sm:$0xff]
        %v1267 = vld [vmem:[%s415 + $0x170] sm:$0xff]
        %v1268 = vld [vmem:[%s415 + $0x178] sm:$0xff]
        %v1269 = vld [vmem:[%s415 + $0x180] sm:$0xff]
        %v1270 = vld [vmem:[%s415 + $0x188] sm:$0xff]
        %v1271 = vld [vmem:[%s415 + $0x190] sm:$0xff]
        %v1272 = vld [vmem:[%s415 + $0x198] sm:$0xff]
        %v1273 = vld [vmem:[%s415 + $0x1a0] sm:$0xff]
        %v1274 = vld [vmem:[%s415 + $0x1a8] sm:$0xff]
        %v1275 = vld [vmem:[%s415 + $0x1b0] sm:$0xff]
        %v1276 = vld [vmem:[%s415 + $0x1b8] sm:$0xff]
        %v1277 = vld [vmem:[%s415 + $0x1c0] sm:$0xff]
        %v1278 = vld [vmem:[%s415 + $0x1c8] sm:$0xff]
        %v1279 = vld [vmem:[%s415 + $0x1d0] sm:$0xff]
        %v1280 = vld [vmem:[%s415 + $0x1d8] sm:$0xff]
        %v1281 = vld [vmem:[%s415 + $0x1e0] sm:$0xff]
        %v1282 = vld [vmem:[%s415 + $0x1e8] sm:$0xff]
        %v1283 = vld [vmem:[%s415 + $0x1f0] sm:$0xff]
        %v1284 = vld [vmem:[%s415 + $0x1f8] sm:$0xff]
        %v1285 = vld [vmem:[%s415 + $0x200] sm:$0xff]
        %v1286 = vld [vmem:[%s415 + $0x208] sm:$0xff]
        %v1287 = vld [vmem:[%s415 + $0x210] sm:$0xff]
        %v1288 = vld [vmem:[%s415 + $0x218] sm:$0xff]
        %v1289 = vld [vmem:[%s415 + $0x220] sm:$0xff]
        %v1290 = vld [vmem:[%s415 + $0x228] sm:$0xff]
        %v1291 = vld [vmem:[%s415 + $0x230] sm:$0xff]
        %v1292 = vld [vmem:[%s415 + $0x238] sm:$0xff]
        %v1293 = vld [vmem:[%s415 + $0x240] sm:$0xff]
        %v1294 = vld [vmem:[%s415 + $0x248] sm:$0xff]
        %v1295 = vld [vmem:[%s415 + $0x250] sm:$0xff]
        %v1296 = vld [vmem:[%s415 + $0x258] sm:$0xff]
        %v1297 = vld [vmem:[%s415 + $0x260] sm:$0xff]
        %v1298 = vld [vmem:[%s415 + $0x268] sm:$0xff]
        %v1299 = vld [vmem:[%s415 + $0x270] sm:$0xff]
        %v1300 = vld [vmem:[%s415 + $0x278] sm:$0xff]
        %v1301 = vld [vmem:[%s415 + $0x280] sm:$0xff]
        %v1302 = vld [vmem:[%s415 + $0x288] sm:$0xff]
        %v1303 = vld [vmem:[%s415 + $0x290] sm:$0xff]
        %v1304 = vld [vmem:[%s415 + $0x298] sm:$0xff]
        %v1305 = vld [vmem:[%s415 + $0x2a0] sm:$0xff]
        %v1306 = vld [vmem:[%s415 + $0x2a8] sm:$0xff]
        %v1307 = vld [vmem:[%s415 + $0x2b0] sm:$0xff]
        %v1308 = vld [vmem:[%s415 + $0x2b8] sm:$0xff]
        %v1309 = vld [vmem:[%s415 + $0x2c0] sm:$0xff]
        %v1310 = vld [vmem:[%s415 + $0x2c8] sm:$0xff]
        %v1311 = vld [vmem:[%s415 + $0x2d0] sm:$0xff]
        %v1312 = vld [vmem:[%s415 + $0x2d8] sm:$0xff]
        %v1313 = vld [vmem:[%s415 + $0x2e0] sm:$0xff]
        %v1314 = vld [vmem:[%s415 + $0x2e8] sm:$0xff]
        %v1315 = vld [vmem:[%s415 + $0x2f0] sm:$0xff]
        %v1316 = vld [vmem:[%s415 + $0x2f8] sm:$0xff]
        %v1317 = vld [vmem:[%s415 + $0x300] sm:$0xff]
        %v1318 = vld [vmem:[%s415 + $0x308] sm:$0xff]
        %v1319 = vld [vmem:[%s415 + $0x310] sm:$0xff]
        %v1320 = vld [vmem:[%s415 + $0x318] sm:$0xff]
        %v1321 = vld [vmem:[%s415 + $0x320] sm:$0xff]
        %v1322 = vld [vmem:[%s415 + $0x328] sm:$0xff]
        %v1323 = vld [vmem:[%s415 + $0x330] sm:$0xff]
        %v1324 = vld [vmem:[%s415 + $0x338] sm:$0xff]
        %v1325 = vld [vmem:[%s415 + $0x340] sm:$0xff]
        %v1326 = vld [vmem:[%s415 + $0x348] sm:$0xff]
        %v1327 = vld [vmem:[%s415 + $0x350] sm:$0xff]
        %v1328 = vld [vmem:[%s415 + $0x358] sm:$0xff]
        %v1329 = vld [vmem:[%s415 + $0x360] sm:$0xff]
        %v1330 = vld [vmem:[%s415 + $0x368] sm:$0xff]
        %v1331 = vld [vmem:[%s415 + $0x370] sm:$0xff]
        %v1332 = vld [vmem:[%s415 + $0x378] sm:$0xff]
        %v1333 = vld [vmem:[%s415 + $0x380] sm:$0xff]
        %v1334 = vld [vmem:[%s415 + $0x388] sm:$0xff]
        %v1335 = vld [vmem:[%s415 + $0x390] sm:$0xff]
        %v1336 = vld [vmem:[%s415 + $0x398] sm:$0xff]
        %v1337 = vld [vmem:[%s415 + $0x3a0] sm:$0xff]
        %v1338 = vld [vmem:[%s415 + $0x3a8] sm:$0xff]
        %v1339 = vld [vmem:[%s415 + $0x3b0] sm:$0xff]
        %v1340 = vld [vmem:[%s415 + $0x3b8] sm:$0xff]
        %v1341 = vld [vmem:[%s415 + $0x3c0] sm:$0xff]
        %v1342 = vld [vmem:[%s415 + $0x3c8] sm:$0xff]
        %v1343 = vld [vmem:[%s415 + $0x3d0] sm:$0xff]
        %v1344 = vld [vmem:[%s415 + $0x3d8] sm:$0xff]
        %v1345 = vld [vmem:[%s415 + $0x3e0] sm:$0xff]
        %v1346 = vld [vmem:[%s415 + $0x3e8] sm:$0xff]
        %v1347 = vld [vmem:[%s415 + $0x3f0] sm:$0xff]
        %v1348 = vld [vmem:[%s415 + $0x3f8] sm:$0xff]
        %v1349 = vld [vmem:[%s415 + $0x400] sm:$0xff]
        %v1350 = vld [vmem:[%s415 + $0x408] sm:$0xff]
        %v1351 = vld [vmem:[%s415 + $0x410] sm:$0xff]
        %v1352 = vld [vmem:[%s415 + $0x418] sm:$0xff]
        %v1353 = vld [vmem:[%s415 + $0x420] sm:$0xff]
        %v1354 = vld [vmem:[%s415 + $0x428] sm:$0xff]
        %v1355 = vld [vmem:[%s415 + $0x430] sm:$0xff]
        %v1356 = vld [vmem:[%s415 + $0x438] sm:$0xff]
        %v1357 = vld [vmem:[%s415 + $0x440] sm:$0xff]
        %v1358 = vld [vmem:[%s415 + $0x448] sm:$0xff]
        %v1359 = vld [vmem:[%s415 + $0x450] sm:$0xff]
        %v1360 = vld [vmem:[%s415 + $0x458] sm:$0xff]
        %v1361 = vld [vmem:[%s415 + $0x460] sm:$0xff]
        %v1362 = vld [vmem:[%s415 + $0x468] sm:$0xff]
        %v1363 = vld [vmem:[%s415 + $0x470] sm:$0xff]
        %v1364 = vld [vmem:[%s415 + $0x478] sm:$0xff]
        %v1365 = vld [vmem:[%s415 + $0x480] sm:$0xff]
        %v1366 = vld [vmem:[%s415 + $0x488] sm:$0xff]
        %v1367 = vld [vmem:[%s415 + $0x490] sm:$0xff]
        %v1368 = vld [vmem:[%s415 + $0x498] sm:$0xff]
        %v1369 = vld [vmem:[%s415 + $0x4a0] sm:$0xff]
        %v1370 = vld [vmem:[%s415 + $0x4a8] sm:$0xff]
        %v1371 = vld [vmem:[%s415 + $0x4b0] sm:$0xff]
        %v1372 = vld [vmem:[%s415 + $0x4b8] sm:$0xff]
        %v1373 = vld [vmem:[%s415 + $0x4c0] sm:$0xff]
        %v1374 = vld [vmem:[%s415 + $0x4c8] sm:$0xff]
        %v1375 = vld [vmem:[%s415 + $0x4d0] sm:$0xff]
        %v1376 = vld [vmem:[%s415 + $0x4d8] sm:$0xff]
        %v1377 = vld [vmem:[%s415 + $0x4e0] sm:$0xff]
        %v1378 = vld [vmem:[%s415 + $0x4e8] sm:$0xff]
        %v1379 = vld [vmem:[%s415 + $0x4f0] sm:$0xff]
        %v1380 = vld [vmem:[%s415 + $0x4f8] sm:$0xff]
        %v1381 = vld [vmem:[%s415 + $0x500] sm:$0xff]
        %v1382 = vld [vmem:[%s415 + $0x508] sm:$0xff]
        %v1383 = vld [vmem:[%s415 + $0x510] sm:$0xff]
        %v1384 = vld [vmem:[%s415 + $0x518] sm:$0xff]
        %v1385 = vld [vmem:[%s415 + $0x520] sm:$0xff]
        %v1386 = vld [vmem:[%s415 + $0x528] sm:$0xff]
        %v1387 = vld [vmem:[%s415 + $0x530] sm:$0xff]
        %v1388 = vld [vmem:[%s415 + $0x538] sm:$0xff]
        %v1389 = vld [vmem:[%s415 + $0x540] sm:$0xff]
        %v1390 = vld [vmem:[%s415 + $0x548] sm:$0xff]
        %v1391 = vld [vmem:[%s415 + $0x550] sm:$0xff]
        %v1392 = vld [vmem:[%s415 + $0x558] sm:$0xff]
        %v1393 = vld [vmem:[%s415 + $0x560] sm:$0xff]
        %v1394 = vld [vmem:[%s415 + $0x568] sm:$0xff]
        %v1395 = vld [vmem:[%s415 + $0x570] sm:$0xff]
        %v1396 = vld [vmem:[%s415 + $0x578] sm:$0xff]
        %v1397 = vld [vmem:[%s415 + $0x580] sm:$0xff]
        %v1398 = vld [vmem:[%s415 + $0x588] sm:$0xff]
        %v1399 = vld [vmem:[%s415 + $0x590] sm:$0xff]
        %v1400 = vld [vmem:[%s415 + $0x598] sm:$0xff]
        %v1401 = vld [vmem:[%s415 + $0x5a0] sm:$0xff]
        %v1402 = vld [vmem:[%s415 + $0x5a8] sm:$0xff]
        %v1403 = vld [vmem:[%s415 + $0x5b0] sm:$0xff]
        %v1404 = vld [vmem:[%s415 + $0x5b8] sm:$0xff]
        %v1405 = vld [vmem:[%s415 + $0x5c0] sm:$0xff]
        %v1406 = vld [vmem:[%s415 + $0x5c8] sm:$0xff]
        %v1407 = vld [vmem:[%s415 + $0x5d0] sm:$0xff]
        %v1408 = vld [vmem:[%s415 + $0x5d8] sm:$0xff]
        %v1409 = vld [vmem:[%s415 + $0x5e0] sm:$0xff]
        %v1410 = vld [vmem:[%s415 + $0x5e8] sm:$0xff]
        %v1411 = vld [vmem:[%s415 + $0x5f0] sm:$0xff]
        %v1412 = vld [vmem:[%s415 + $0x5f8] sm:$0xff]
        %v1413 = vld [vmem:[%s415 + $0x600] sm:$0xff]
        %v1414 = vld [vmem:[%s415 + $0x608] sm:$0xff]
        %v1415 = vld [vmem:[%s415 + $0x610] sm:$0xff]
        %v1416 = vld [vmem:[%s415 + $0x618] sm:$0xff]
        %v1417 = vld [vmem:[%s415 + $0x620] sm:$0xff]
        %v1418 = vld [vmem:[%s415 + $0x628] sm:$0xff]
        %v1419 = vld [vmem:[%s415 + $0x630] sm:$0xff]
        %v1420 = vld [vmem:[%s415 + $0x638] sm:$0xff]
        %v1421 = vld [vmem:[%s415 + $0x640] sm:$0xff]
        %v1422 = vld [vmem:[%s415 + $0x648] sm:$0xff]
        %v1423 = vld [vmem:[%s415 + $0x650] sm:$0xff]
        %v1424 = vld [vmem:[%s415 + $0x658] sm:$0xff]
        %v1425 = vld [vmem:[%s415 + $0x660] sm:$0xff]
        %v1426 = vld [vmem:[%s415 + $0x668] sm:$0xff]
        %v1427 = vld [vmem:[%s415 + $0x670] sm:$0xff]
        %v1428 = vld [vmem:[%s415 + $0x678] sm:$0xff]
        %v1429 = vld [vmem:[%s415 + $0x680] sm:$0xff]
        %v1430 = vld [vmem:[%s415 + $0x688] sm:$0xff]
        %v1431 = vld [vmem:[%s415 + $0x690] sm:$0xff]
        %v1432 = vld [vmem:[%s415 + $0x698] sm:$0xff]
        %v1433 = vld [vmem:[%s415 + $0x6a0] sm:$0xff]
        %v1434 = vld [vmem:[%s415 + $0x6a8] sm:$0xff]
        %v1435 = vld [vmem:[%s415 + $0x6b0] sm:$0xff]
        %v1436 = vld [vmem:[%s415 + $0x6b8] sm:$0xff]
        %v1437 = vld [vmem:[%s415 + $0x6c0] sm:$0xff]
        %v1438 = vld [vmem:[%s415 + $0x6c8] sm:$0xff]
        %v1439 = vld [vmem:[%s415 + $0x6d0] sm:$0xff]
        %v1440 = vld [vmem:[%s415 + $0x6d8] sm:$0xff]
        %v1441 = vld [vmem:[%s415 + $0x6e0] sm:$0xff]
        %v1442 = vld [vmem:[%s415 + $0x6e8] sm:$0xff]
        %v1443 = vld [vmem:[%s415 + $0x6f0] sm:$0xff]
        %v1444 = vld [vmem:[%s415 + $0x6f8] sm:$0xff]
        %v1445 = vld [vmem:[%s415 + $0x700] sm:$0xff]
        %v1446 = vld [vmem:[%s415 + $0x708] sm:$0xff]
        %v1447 = vld [vmem:[%s415 + $0x710] sm:$0xff]
        %v1448 = vld [vmem:[%s415 + $0x718] sm:$0xff]
        %v1449 = vld [vmem:[%s415 + $0x720] sm:$0xff]
        %v1450 = vld [vmem:[%s415 + $0x728] sm:$0xff]
        %v1451 = vld [vmem:[%s415 + $0x730] sm:$0xff]
        %v1452 = vld [vmem:[%s415 + $0x738] sm:$0xff]
        %v1453 = vld [vmem:[%s415 + $0x740] sm:$0xff]
        %v1454 = vld [vmem:[%s415 + $0x748] sm:$0xff]
        %v1455 = vld [vmem:[%s415 + $0x750] sm:$0xff]
        %v1456 = vld [vmem:[%s415 + $0x758] sm:$0xff]
        %v1457 = vld [vmem:[%s415 + $0x760] sm:$0xff]
        %v1458 = vld [vmem:[%s415 + $0x768] sm:$0xff]
        %v1459 = vld [vmem:[%s415 + $0x770] sm:$0xff]
        %v1460 = vld [vmem:[%s415 + $0x778] sm:$0xff]
        %v1461 = vld [vmem:[%s415 + $0x780] sm:$0xff]
        %v1462 = vld [vmem:[%s415 + $0x788] sm:$0xff]
        %v1463 = vld [vmem:[%s415 + $0x790] sm:$0xff]
        %v1464 = vld [vmem:[%s415 + $0x798] sm:$0xff]
        %v1465 = vld [vmem:[%s415 + $0x7a0] sm:$0xff]
        %v1466 = vld [vmem:[%s415 + $0x7a8] sm:$0xff]
        %v1467 = vld [vmem:[%s415 + $0x7b0] sm:$0xff]
        %v1468 = vld [vmem:[%s415 + $0x7b8] sm:$0xff]
        %v1469 = vld [vmem:[%s415 + $0x7c0] sm:$0xff]
        %v1470 = vld [vmem:[%s415 + $0x7c8] sm:$0xff]
        %v1471 = vld [vmem:[%s415 + $0x7d0] sm:$0xff]
        %v1472 = vld [vmem:[%s415 + $0x7d8] sm:$0xff]
        %v1473 = vld [vmem:[%s415 + $0x7e0] sm:$0xff]
        %v1474 = vld [vmem:[%s415 + $0x7e8] sm:$0xff]
        %v1475 = vld [vmem:[%s415 + $0x7f0] sm:$0xff]
        %v1476 = vld [vmem:[%s415 + $0x7f8] sm:$0xff]
        %v1477 = vunpack.c.l.s8.bf16 %v1221
        %v1478 = vunpack.c.l.s8.bf16 %v1222
        %v1479 = vunpack.c.l.s8.bf16 %v1223
        %v1480 = vunpack.c.l.s8.bf16 %v1224
        %v1481 = vunpack.c.h.s8.bf16 %v1221
        %v1482 = vunpack.c.h.s8.bf16 %v1222
        %v1483 = vunpack.c.h.s8.bf16 %v1223
        %v1484 = vunpack.c.h.s8.bf16 %v1224
        %v1485 = vunpack.c.l.s8.bf16 %v1225
        %v1486 = vunpack.c.l.s8.bf16 %v1226
        %v1487 = vunpack.c.l.s8.bf16 %v1227
        %v1488 = vunpack.c.l.s8.bf16 %v1228
        %v1489 = vunpack.c.h.s8.bf16 %v1225
        %v1490 = vunpack.c.h.s8.bf16 %v1226
        %v1491 = vunpack.c.h.s8.bf16 %v1227
        %v1492 = vunpack.c.h.s8.bf16 %v1228
        %v1493 = vunpack.c.l.s8.bf16 %v1229
        %v1494 = vunpack.c.l.s8.bf16 %v1230
        %v1495 = vunpack.c.l.s8.bf16 %v1231
        %v1496 = vunpack.c.l.s8.bf16 %v1232
        %v1497 = vunpack.c.h.s8.bf16 %v1229
        %v1498 = vunpack.c.h.s8.bf16 %v1230
        %v1499 = vunpack.c.h.s8.bf16 %v1231
        %v1500 = vunpack.c.h.s8.bf16 %v1232
        %v1501 = vunpack.c.l.s8.bf16 %v1233
        %v1502 = vunpack.c.l.s8.bf16 %v1234
        %v1503 = vunpack.c.l.s8.bf16 %v1235
        %v1504 = vunpack.c.l.s8.bf16 %v1236
        %v1505 = vunpack.c.h.s8.bf16 %v1233
        %v1506 = vunpack.c.h.s8.bf16 %v1234
        %v1507 = vunpack.c.h.s8.bf16 %v1235
        %v1508 = vunpack.c.h.s8.bf16 %v1236
        %v1509 = vunpack.c.l.s8.bf16 %v1237
        %v1510 = vunpack.c.l.s8.bf16 %v1238
        %v1511 = vunpack.c.l.s8.bf16 %v1239
        %v1512 = vunpack.c.l.s8.bf16 %v1240
        %v1513 = vunpack.c.h.s8.bf16 %v1237
        %v1514 = vunpack.c.h.s8.bf16 %v1238
        %v1515 = vunpack.c.h.s8.bf16 %v1239
        %v1516 = vunpack.c.h.s8.bf16 %v1240
        %v1517 = vunpack.c.l.s8.bf16 %v1241
        %v1518 = vunpack.c.l.s8.bf16 %v1242
        %v1519 = vunpack.c.l.s8.bf16 %v1243
        %v1520 = vunpack.c.l.s8.bf16 %v1244
        %v1521 = vunpack.c.h.s8.bf16 %v1241
        %v1522 = vunpack.c.h.s8.bf16 %v1242
        %v1523 = vunpack.c.h.s8.bf16 %v1243
        %v1524 = vunpack.c.h.s8.bf16 %v1244
        %v1525 = vunpack.c.l.s8.bf16 %v1245
        %v1526 = vunpack.c.l.s8.bf16 %v1246
        %v1527 = vunpack.c.l.s8.bf16 %v1247
        %v1528 = vunpack.c.l.s8.bf16 %v1248
        %v1529 = vunpack.c.h.s8.bf16 %v1245
        %v1530 = vunpack.c.h.s8.bf16 %v1246
        %v1531 = vunpack.c.h.s8.bf16 %v1247
        %v1532 = vunpack.c.h.s8.bf16 %v1248
        %v1533 = vunpack.c.l.s8.bf16 %v1249
        %v1534 = vunpack.c.l.s8.bf16 %v1250
        %v1535 = vunpack.c.l.s8.bf16 %v1251
        %v1536 = vunpack.c.l.s8.bf16 %v1252
        %v1537 = vunpack.c.h.s8.bf16 %v1249
        %v1538 = vunpack.c.h.s8.bf16 %v1250
        %v1539 = vunpack.c.h.s8.bf16 %v1251
        %v1540 = vunpack.c.h.s8.bf16 %v1252
        %v1541 = vunpack.c.l.s8.bf16 %v1253
        %v1542 = vunpack.c.l.s8.bf16 %v1254
        %v1543 = vunpack.c.l.s8.bf16 %v1255
        %v1544 = vunpack.c.l.s8.bf16 %v1256
        %v1545 = vunpack.c.h.s8.bf16 %v1253
        %v1546 = vunpack.c.h.s8.bf16 %v1254
        %v1547 = vunpack.c.h.s8.bf16 %v1255
        %v1548 = vunpack.c.h.s8.bf16 %v1256
        %v1549 = vunpack.c.l.s8.bf16 %v1257
        %v1550 = vunpack.c.l.s8.bf16 %v1258
        %v1551 = vunpack.c.l.s8.bf16 %v1259
        %v1552 = vunpack.c.l.s8.bf16 %v1260
        %v1553 = vunpack.c.h.s8.bf16 %v1257
        %v1554 = vunpack.c.h.s8.bf16 %v1258
        %v1555 = vunpack.c.h.s8.bf16 %v1259
        %v1556 = vunpack.c.h.s8.bf16 %v1260
        %v1557 = vunpack.c.l.s8.bf16 %v1261
        %v1558 = vunpack.c.l.s8.bf16 %v1262
        %v1559 = vunpack.c.l.s8.bf16 %v1263
        %v1560 = vunpack.c.l.s8.bf16 %v1264
        %v1561 = vunpack.c.h.s8.bf16 %v1261
        %v1562 = vunpack.c.h.s8.bf16 %v1262
        %v1563 = vunpack.c.h.s8.bf16 %v1263
        %v1564 = vunpack.c.h.s8.bf16 %v1264
        %v1565 = vunpack.c.l.s8.bf16 %v1265
        %v1566 = vunpack.c.l.s8.bf16 %v1266
        %v1567 = vunpack.c.l.s8.bf16 %v1267
        %v1568 = vunpack.c.l.s8.bf16 %v1268
        %v1569 = vunpack.c.h.s8.bf16 %v1265
        %v1570 = vunpack.c.h.s8.bf16 %v1266
        %v1571 = vunpack.c.h.s8.bf16 %v1267
        %v1572 = vunpack.c.h.s8.bf16 %v1268
        %v1573 = vunpack.c.l.s8.bf16 %v1269
        %v1574 = vunpack.c.l.s8.bf16 %v1270
        %v1575 = vunpack.c.l.s8.bf16 %v1271
        %v1576 = vunpack.c.l.s8.bf16 %v1272
        %v1577 = vunpack.c.h.s8.bf16 %v1269
        %v1578 = vunpack.c.h.s8.bf16 %v1270
        %v1579 = vunpack.c.h.s8.bf16 %v1271
        %v1580 = vunpack.c.h.s8.bf16 %v1272
        %v1581 = vunpack.c.l.s8.bf16 %v1273
        %v1582 = vunpack.c.l.s8.bf16 %v1274
        %v1583 = vunpack.c.l.s8.bf16 %v1275
        %v1584 = vunpack.c.l.s8.bf16 %v1276
        %v1585 = vunpack.c.h.s8.bf16 %v1273
        %v1586 = vunpack.c.h.s8.bf16 %v1274
        %v1587 = vunpack.c.h.s8.bf16 %v1275
        %v1588 = vunpack.c.h.s8.bf16 %v1276
        %v1589 = vunpack.c.l.s8.bf16 %v1277
        %v1590 = vunpack.c.l.s8.bf16 %v1278
        %v1591 = vunpack.c.l.s8.bf16 %v1279
        %v1592 = vunpack.c.l.s8.bf16 %v1280
        %v1593 = vunpack.c.h.s8.bf16 %v1277
        %v1594 = vunpack.c.h.s8.bf16 %v1278
        %v1595 = vunpack.c.h.s8.bf16 %v1279
        %v1596 = vunpack.c.h.s8.bf16 %v1280
        %v1597 = vunpack.c.l.s8.bf16 %v1281
        %v1598 = vunpack.c.l.s8.bf16 %v1282
        %v1599 = vunpack.c.l.s8.bf16 %v1283
        %v1600 = vunpack.c.l.s8.bf16 %v1284
        %v1601 = vunpack.c.h.s8.bf16 %v1281
        %v1602 = vunpack.c.h.s8.bf16 %v1282
        %v1603 = vunpack.c.h.s8.bf16 %v1283
        %v1604 = vunpack.c.h.s8.bf16 %v1284
        %v1605 = vunpack.c.l.s8.bf16 %v1285
        %v1606 = vunpack.c.l.s8.bf16 %v1286
        %v1607 = vunpack.c.l.s8.bf16 %v1287
        %v1608 = vunpack.c.l.s8.bf16 %v1288
        %v1609 = vunpack.c.h.s8.bf16 %v1285
        %v1610 = vunpack.c.h.s8.bf16 %v1286
        %v1611 = vunpack.c.h.s8.bf16 %v1287
        %v1612 = vunpack.c.h.s8.bf16 %v1288
        %v1613 = vunpack.c.l.s8.bf16 %v1289
        %v1614 = vunpack.c.l.s8.bf16 %v1290
        %v1615 = vunpack.c.l.s8.bf16 %v1291
        %v1616 = vunpack.c.l.s8.bf16 %v1292
        %v1617 = vunpack.c.h.s8.bf16 %v1289
        %v1618 = vunpack.c.h.s8.bf16 %v1290
        %v1619 = vunpack.c.h.s8.bf16 %v1291
        %v1620 = vunpack.c.h.s8.bf16 %v1292
        %v1621 = vunpack.c.l.s8.bf16 %v1293
        %v1622 = vunpack.c.l.s8.bf16 %v1294
        %v1623 = vunpack.c.l.s8.bf16 %v1295
        %v1624 = vunpack.c.l.s8.bf16 %v1296
        %v1625 = vunpack.c.h.s8.bf16 %v1293
        %v1626 = vunpack.c.h.s8.bf16 %v1294
        %v1627 = vunpack.c.h.s8.bf16 %v1295
        %v1628 = vunpack.c.h.s8.bf16 %v1296
        %v1629 = vunpack.c.l.s8.bf16 %v1297
        %v1630 = vunpack.c.l.s8.bf16 %v1298
        %v1631 = vunpack.c.l.s8.bf16 %v1299
        %v1632 = vunpack.c.l.s8.bf16 %v1300
        %v1633 = vunpack.c.h.s8.bf16 %v1297
        %v1634 = vunpack.c.h.s8.bf16 %v1298
        %v1635 = vunpack.c.h.s8.bf16 %v1299
        %v1636 = vunpack.c.h.s8.bf16 %v1300
        %v1637 = vunpack.c.l.s8.bf16 %v1301
        %v1638 = vunpack.c.l.s8.bf16 %v1302
        %v1639 = vunpack.c.l.s8.bf16 %v1303
        %v1640 = vunpack.c.l.s8.bf16 %v1304
        %v1641 = vunpack.c.h.s8.bf16 %v1301
        %v1642 = vunpack.c.h.s8.bf16 %v1302
        %v1643 = vunpack.c.h.s8.bf16 %v1303
        %v1644 = vunpack.c.h.s8.bf16 %v1304
        %v1645 = vunpack.c.l.s8.bf16 %v1305
        %v1646 = vunpack.c.l.s8.bf16 %v1306
        %v1647 = vunpack.c.l.s8.bf16 %v1307
        %v1648 = vunpack.c.l.s8.bf16 %v1308
        %v1649 = vunpack.c.h.s8.bf16 %v1305
        %v1650 = vunpack.c.h.s8.bf16 %v1306
        %v1651 = vunpack.c.h.s8.bf16 %v1307
        %v1652 = vunpack.c.h.s8.bf16 %v1308
        %v1653 = vunpack.c.l.s8.bf16 %v1309
        %v1654 = vunpack.c.l.s8.bf16 %v1310
        %v1655 = vunpack.c.l.s8.bf16 %v1311
        %v1656 = vunpack.c.l.s8.bf16 %v1312
        %v1657 = vunpack.c.h.s8.bf16 %v1309
        %v1658 = vunpack.c.h.s8.bf16 %v1310
        %v1659 = vunpack.c.h.s8.bf16 %v1311
        %v1660 = vunpack.c.h.s8.bf16 %v1312
        %v1661 = vunpack.c.l.s8.bf16 %v1313
        %v1662 = vunpack.c.l.s8.bf16 %v1314
        %v1663 = vunpack.c.l.s8.bf16 %v1315
        %v1664 = vunpack.c.l.s8.bf16 %v1316
        %v1665 = vunpack.c.h.s8.bf16 %v1313
        %v1666 = vunpack.c.h.s8.bf16 %v1314
        %v1667 = vunpack.c.h.s8.bf16 %v1315
        %v1668 = vunpack.c.h.s8.bf16 %v1316
        %v1669 = vunpack.c.l.s8.bf16 %v1317
        %v1670 = vunpack.c.l.s8.bf16 %v1318
        %v1671 = vunpack.c.l.s8.bf16 %v1319
        %v1672 = vunpack.c.l.s8.bf16 %v1320
        %v1673 = vunpack.c.h.s8.bf16 %v1317
        %v1674 = vunpack.c.h.s8.bf16 %v1318
        %v1675 = vunpack.c.h.s8.bf16 %v1319
        %v1676 = vunpack.c.h.s8.bf16 %v1320
        %v1677 = vunpack.c.l.s8.bf16 %v1321
        %v1678 = vunpack.c.l.s8.bf16 %v1322
        %v1679 = vunpack.c.l.s8.bf16 %v1323
        %v1680 = vunpack.c.l.s8.bf16 %v1324
        %v1681 = vunpack.c.h.s8.bf16 %v1321
        %v1682 = vunpack.c.h.s8.bf16 %v1322
        %v1683 = vunpack.c.h.s8.bf16 %v1323
        %v1684 = vunpack.c.h.s8.bf16 %v1324
        %v1685 = vunpack.c.l.s8.bf16 %v1325
        %v1686 = vunpack.c.l.s8.bf16 %v1326
        %v1687 = vunpack.c.l.s8.bf16 %v1327
        %v1688 = vunpack.c.l.s8.bf16 %v1328
        %v1689 = vunpack.c.h.s8.bf16 %v1325
        %v1690 = vunpack.c.h.s8.bf16 %v1326
        %v1691 = vunpack.c.h.s8.bf16 %v1327
        %v1692 = vunpack.c.h.s8.bf16 %v1328
        %v1693 = vunpack.c.l.s8.bf16 %v1329
        %v1694 = vunpack.c.l.s8.bf16 %v1330
        %v1695 = vunpack.c.l.s8.bf16 %v1331
        %v1696 = vunpack.c.l.s8.bf16 %v1332
        %v1697 = vunpack.c.h.s8.bf16 %v1329
        %v1698 = vunpack.c.h.s8.bf16 %v1330
        %v1699 = vunpack.c.h.s8.bf16 %v1331
        %v1700 = vunpack.c.h.s8.bf16 %v1332
        %v1701 = vunpack.c.l.s8.bf16 %v1333
        %v1702 = vunpack.c.l.s8.bf16 %v1334
        %v1703 = vunpack.c.l.s8.bf16 %v1335
        %v1704 = vunpack.c.l.s8.bf16 %v1336
        %v1705 = vunpack.c.h.s8.bf16 %v1333
        %v1706 = vunpack.c.h.s8.bf16 %v1334
        %v1707 = vunpack.c.h.s8.bf16 %v1335
        %v1708 = vunpack.c.h.s8.bf16 %v1336
        %v1709 = vunpack.c.l.s8.bf16 %v1337
        %v1710 = vunpack.c.l.s8.bf16 %v1338
        %v1711 = vunpack.c.l.s8.bf16 %v1339
        %v1712 = vunpack.c.l.s8.bf16 %v1340
        %v1713 = vunpack.c.h.s8.bf16 %v1337
        %v1714 = vunpack.c.h.s8.bf16 %v1338
        %v1715 = vunpack.c.h.s8.bf16 %v1339
        %v1716 = vunpack.c.h.s8.bf16 %v1340
        %v1717 = vunpack.c.l.s8.bf16 %v1341
        %v1718 = vunpack.c.l.s8.bf16 %v1342
        %v1719 = vunpack.c.l.s8.bf16 %v1343
        %v1720 = vunpack.c.l.s8.bf16 %v1344
        %v1721 = vunpack.c.h.s8.bf16 %v1341
        %v1722 = vunpack.c.h.s8.bf16 %v1342
        %v1723 = vunpack.c.h.s8.bf16 %v1343
        %v1724 = vunpack.c.h.s8.bf16 %v1344
        %v1725 = vunpack.c.l.s8.bf16 %v1345
        %v1726 = vunpack.c.l.s8.bf16 %v1346
        %v1727 = vunpack.c.l.s8.bf16 %v1347
        %v1728 = vunpack.c.l.s8.bf16 %v1348
        %v1729 = vunpack.c.h.s8.bf16 %v1345
        %v1730 = vunpack.c.h.s8.bf16 %v1346
        %v1731 = vunpack.c.h.s8.bf16 %v1347
        %v1732 = vunpack.c.h.s8.bf16 %v1348
        %v1733 = vunpack.c.l.s8.bf16 %v1349
        %v1734 = vunpack.c.l.s8.bf16 %v1350
        %v1735 = vunpack.c.l.s8.bf16 %v1351
        %v1736 = vunpack.c.l.s8.bf16 %v1352
        %v1737 = vunpack.c.h.s8.bf16 %v1349
        %v1738 = vunpack.c.h.s8.bf16 %v1350
        %v1739 = vunpack.c.h.s8.bf16 %v1351
        %v1740 = vunpack.c.h.s8.bf16 %v1352
        %v1741 = vunpack.c.l.s8.bf16 %v1353
        %v1742 = vunpack.c.l.s8.bf16 %v1354
        %v1743 = vunpack.c.l.s8.bf16 %v1355
        %v1744 = vunpack.c.l.s8.bf16 %v1356
        %v1745 = vunpack.c.h.s8.bf16 %v1353
        %v1746 = vunpack.c.h.s8.bf16 %v1354
        %v1747 = vunpack.c.h.s8.bf16 %v1355
        %v1748 = vunpack.c.h.s8.bf16 %v1356
        %v1749 = vunpack.c.l.s8.bf16 %v1357
        %v1750 = vunpack.c.l.s8.bf16 %v1358
        %v1751 = vunpack.c.l.s8.bf16 %v1359
        %v1752 = vunpack.c.l.s8.bf16 %v1360
        %v1753 = vunpack.c.h.s8.bf16 %v1357
        %v1754 = vunpack.c.h.s8.bf16 %v1358
        %v1755 = vunpack.c.h.s8.bf16 %v1359
        %v1756 = vunpack.c.h.s8.bf16 %v1360
        %v1757 = vunpack.c.l.s8.bf16 %v1361
        %v1758 = vunpack.c.l.s8.bf16 %v1362
        %v1759 = vunpack.c.l.s8.bf16 %v1363
        %v1760 = vunpack.c.l.s8.bf16 %v1364
        %v1761 = vunpack.c.h.s8.bf16 %v1361
        %v1762 = vunpack.c.h.s8.bf16 %v1362
        %v1763 = vunpack.c.h.s8.bf16 %v1363
        %v1764 = vunpack.c.h.s8.bf16 %v1364
        %v1765 = vunpack.c.l.s8.bf16 %v1365
        %v1766 = vunpack.c.l.s8.bf16 %v1366
        %v1767 = vunpack.c.l.s8.bf16 %v1367
        %v1768 = vunpack.c.l.s8.bf16 %v1368
        %v1769 = vunpack.c.h.s8.bf16 %v1365
        %v1770 = vunpack.c.h.s8.bf16 %v1366
        %v1771 = vunpack.c.h.s8.bf16 %v1367
        %v1772 = vunpack.c.h.s8.bf16 %v1368
        %v1773 = vunpack.c.l.s8.bf16 %v1369
        %v1774 = vunpack.c.l.s8.bf16 %v1370
        %v1775 = vunpack.c.l.s8.bf16 %v1371
        %v1776 = vunpack.c.l.s8.bf16 %v1372
        %v1777 = vunpack.c.h.s8.bf16 %v1369
        %v1778 = vunpack.c.h.s8.bf16 %v1370
        %v1779 = vunpack.c.h.s8.bf16 %v1371
        %v1780 = vunpack.c.h.s8.bf16 %v1372
        %v1781 = vunpack.c.l.s8.bf16 %v1373
        %v1782 = vunpack.c.l.s8.bf16 %v1374
        %v1783 = vunpack.c.l.s8.bf16 %v1375
        %v1784 = vunpack.c.l.s8.bf16 %v1376
        %v1785 = vunpack.c.h.s8.bf16 %v1373
        %v1786 = vunpack.c.h.s8.bf16 %v1374
        %v1787 = vunpack.c.h.s8.bf16 %v1375
        %v1788 = vunpack.c.h.s8.bf16 %v1376
        %v1789 = vunpack.c.l.s8.bf16 %v1377
        %v1790 = vunpack.c.l.s8.bf16 %v1378
        %v1791 = vunpack.c.l.s8.bf16 %v1379
        %v1792 = vunpack.c.l.s8.bf16 %v1380
        %v1793 = vunpack.c.h.s8.bf16 %v1377
        %v1794 = vunpack.c.h.s8.bf16 %v1378
        %v1795 = vunpack.c.h.s8.bf16 %v1379
        %v1796 = vunpack.c.h.s8.bf16 %v1380
        %v1797 = vunpack.c.l.s8.bf16 %v1381
        %v1798 = vunpack.c.l.s8.bf16 %v1382
        %v1799 = vunpack.c.l.s8.bf16 %v1383
        %v1800 = vunpack.c.l.s8.bf16 %v1384
        %v1801 = vunpack.c.h.s8.bf16 %v1381
        %v1802 = vunpack.c.h.s8.bf16 %v1382
        %v1803 = vunpack.c.h.s8.bf16 %v1383
        %v1804 = vunpack.c.h.s8.bf16 %v1384
        %v1805 = vunpack.c.l.s8.bf16 %v1385
        %v1806 = vunpack.c.l.s8.bf16 %v1386
        %v1807 = vunpack.c.l.s8.bf16 %v1387
        %v1808 = vunpack.c.l.s8.bf16 %v1388
        %v1809 = vunpack.c.h.s8.bf16 %v1385
        %v1810 = vunpack.c.h.s8.bf16 %v1386
        %v1811 = vunpack.c.h.s8.bf16 %v1387
        %v1812 = vunpack.c.h.s8.bf16 %v1388
        %v1813 = vunpack.c.l.s8.bf16 %v1389
        %v1814 = vunpack.c.l.s8.bf16 %v1390
        %v1815 = vunpack.c.l.s8.bf16 %v1391
        %v1816 = vunpack.c.l.s8.bf16 %v1392
        %v1817 = vunpack.c.h.s8.bf16 %v1389
        %v1818 = vunpack.c.h.s8.bf16 %v1390
        %v1819 = vunpack.c.h.s8.bf16 %v1391
        %v1820 = vunpack.c.h.s8.bf16 %v1392
        %v1821 = vunpack.c.l.s8.bf16 %v1393
        %v1822 = vunpack.c.l.s8.bf16 %v1394
        %v1823 = vunpack.c.l.s8.bf16 %v1395
        %v1824 = vunpack.c.l.s8.bf16 %v1396
        %v1825 = vunpack.c.h.s8.bf16 %v1393
        %v1826 = vunpack.c.h.s8.bf16 %v1394
        %v1827 = vunpack.c.h.s8.bf16 %v1395
        %v1828 = vunpack.c.h.s8.bf16 %v1396
        %v1829 = vunpack.c.l.s8.bf16 %v1397
        %v1830 = vunpack.c.l.s8.bf16 %v1398
        %v1831 = vunpack.c.l.s8.bf16 %v1399
        %v1832 = vunpack.c.l.s8.bf16 %v1400
        %v1833 = vunpack.c.h.s8.bf16 %v1397
        %v1834 = vunpack.c.h.s8.bf16 %v1398
        %v1835 = vunpack.c.h.s8.bf16 %v1399
        %v1836 = vunpack.c.h.s8.bf16 %v1400
        %v1837 = vunpack.c.l.s8.bf16 %v1401
        %v1838 = vunpack.c.l.s8.bf16 %v1402
        %v1839 = vunpack.c.l.s8.bf16 %v1403
        %v1840 = vunpack.c.l.s8.bf16 %v1404
        %v1841 = vunpack.c.h.s8.bf16 %v1401
        %v1842 = vunpack.c.h.s8.bf16 %v1402
        %v1843 = vunpack.c.h.s8.bf16 %v1403
        %v1844 = vunpack.c.h.s8.bf16 %v1404
        %v1845 = vunpack.c.l.s8.bf16 %v1405
        %v1846 = vunpack.c.l.s8.bf16 %v1406
        %v1847 = vunpack.c.l.s8.bf16 %v1407
        %v1848 = vunpack.c.l.s8.bf16 %v1408
        %v1849 = vunpack.c.h.s8.bf16 %v1405
        %v1850 = vunpack.c.h.s8.bf16 %v1406
        %v1851 = vunpack.c.h.s8.bf16 %v1407
        %v1852 = vunpack.c.h.s8.bf16 %v1408
        %v1853 = vunpack.c.l.s8.bf16 %v1409
        %v1854 = vunpack.c.l.s8.bf16 %v1410
        %v1855 = vunpack.c.l.s8.bf16 %v1411
        %v1856 = vunpack.c.l.s8.bf16 %v1412
        %v1857 = vunpack.c.h.s8.bf16 %v1409
        %v1858 = vunpack.c.h.s8.bf16 %v1410
        %v1859 = vunpack.c.h.s8.bf16 %v1411
        %v1860 = vunpack.c.h.s8.bf16 %v1412
        %v1861 = vunpack.c.l.s8.bf16 %v1413
        %v1862 = vunpack.c.l.s8.bf16 %v1414
        %v1863 = vunpack.c.l.s8.bf16 %v1415
        %v1864 = vunpack.c.l.s8.bf16 %v1416
        %v1865 = vunpack.c.h.s8.bf16 %v1413
        %v1866 = vunpack.c.h.s8.bf16 %v1414
        %v1867 = vunpack.c.h.s8.bf16 %v1415
        %v1868 = vunpack.c.h.s8.bf16 %v1416
        %v1869 = vunpack.c.l.s8.bf16 %v1417
        %v1870 = vunpack.c.l.s8.bf16 %v1418
        %v1871 = vunpack.c.l.s8.bf16 %v1419
        %v1872 = vunpack.c.l.s8.bf16 %v1420
        %v1873 = vunpack.c.h.s8.bf16 %v1417
        %v1874 = vunpack.c.h.s8.bf16 %v1418
        %v1875 = vunpack.c.h.s8.bf16 %v1419
        %v1876 = vunpack.c.h.s8.bf16 %v1420
        %v1877 = vunpack.c.l.s8.bf16 %v1421
        %v1878 = vunpack.c.l.s8.bf16 %v1422
        %v1879 = vunpack.c.l.s8.bf16 %v1423
        %v1880 = vunpack.c.l.s8.bf16 %v1424
        %v1881 = vunpack.c.h.s8.bf16 %v1421
        %v1882 = vunpack.c.h.s8.bf16 %v1422
        %v1883 = vunpack.c.h.s8.bf16 %v1423
        %v1884 = vunpack.c.h.s8.bf16 %v1424
        %v1885 = vunpack.c.l.s8.bf16 %v1425
        %v1886 = vunpack.c.l.s8.bf16 %v1426
        %v1887 = vunpack.c.l.s8.bf16 %v1427
        %v1888 = vunpack.c.l.s8.bf16 %v1428
        %v1889 = vunpack.c.h.s8.bf16 %v1425
        %v1890 = vunpack.c.h.s8.bf16 %v1426
        %v1891 = vunpack.c.h.s8.bf16 %v1427
        %v1892 = vunpack.c.h.s8.bf16 %v1428
        %v1893 = vunpack.c.l.s8.bf16 %v1429
        %v1894 = vunpack.c.l.s8.bf16 %v1430
        %v1895 = vunpack.c.l.s8.bf16 %v1431
        %v1896 = vunpack.c.l.s8.bf16 %v1432
        %v1897 = vunpack.c.h.s8.bf16 %v1429
        %v1898 = vunpack.c.h.s8.bf16 %v1430
        %v1899 = vunpack.c.h.s8.bf16 %v1431
        %v1900 = vunpack.c.h.s8.bf16 %v1432
        %v1901 = vunpack.c.l.s8.bf16 %v1433
        %v1902 = vunpack.c.l.s8.bf16 %v1434
        %v1903 = vunpack.c.l.s8.bf16 %v1435
        %v1904 = vunpack.c.l.s8.bf16 %v1436
        %v1905 = vunpack.c.h.s8.bf16 %v1433
        %v1906 = vunpack.c.h.s8.bf16 %v1434
        %v1907 = vunpack.c.h.s8.bf16 %v1435
        %v1908 = vunpack.c.h.s8.bf16 %v1436
        %v1909 = vunpack.c.l.s8.bf16 %v1437
        %v1910 = vunpack.c.l.s8.bf16 %v1438
        %v1911 = vunpack.c.l.s8.bf16 %v1439
        %v1912 = vunpack.c.l.s8.bf16 %v1440
        %v1913 = vunpack.c.h.s8.bf16 %v1437
        %v1914 = vunpack.c.h.s8.bf16 %v1438
        %v1915 = vunpack.c.h.s8.bf16 %v1439
        %v1916 = vunpack.c.h.s8.bf16 %v1440
        %v1917 = vunpack.c.l.s8.bf16 %v1441
        %v1918 = vunpack.c.l.s8.bf16 %v1442
        %v1919 = vunpack.c.l.s8.bf16 %v1443
        %v1920 = vunpack.c.l.s8.bf16 %v1444
        %v1921 = vunpack.c.h.s8.bf16 %v1441
        %v1922 = vunpack.c.h.s8.bf16 %v1442
        %v1923 = vunpack.c.h.s8.bf16 %v1443
        %v1924 = vunpack.c.h.s8.bf16 %v1444
        %v1925 = vunpack.c.l.s8.bf16 %v1445
        %v1926 = vunpack.c.l.s8.bf16 %v1446
        %v1927 = vunpack.c.l.s8.bf16 %v1447
        %v1928 = vunpack.c.l.s8.bf16 %v1448
        %v1929 = vunpack.c.h.s8.bf16 %v1445
        %v1930 = vunpack.c.h.s8.bf16 %v1446
        %v1931 = vunpack.c.h.s8.bf16 %v1447
        %v1932 = vunpack.c.h.s8.bf16 %v1448
        %v1933 = vunpack.c.l.s8.bf16 %v1449
        %v1934 = vunpack.c.l.s8.bf16 %v1450
        %v1935 = vunpack.c.l.s8.bf16 %v1451
        %v1936 = vunpack.c.l.s8.bf16 %v1452
        %v1937 = vunpack.c.h.s8.bf16 %v1449
        %v1938 = vunpack.c.h.s8.bf16 %v1450
        %v1939 = vunpack.c.h.s8.bf16 %v1451
        %v1940 = vunpack.c.h.s8.bf16 %v1452
        %v1941 = vunpack.c.l.s8.bf16 %v1453
        %v1942 = vunpack.c.l.s8.bf16 %v1454
        %v1943 = vunpack.c.l.s8.bf16 %v1455
        %v1944 = vunpack.c.l.s8.bf16 %v1456
        %v1945 = vunpack.c.h.s8.bf16 %v1453
        %v1946 = vunpack.c.h.s8.bf16 %v1454
        %v1947 = vunpack.c.h.s8.bf16 %v1455
        %v1948 = vunpack.c.h.s8.bf16 %v1456
        %v1949 = vunpack.c.l.s8.bf16 %v1457
        %v1950 = vunpack.c.l.s8.bf16 %v1458
        %v1951 = vunpack.c.l.s8.bf16 %v1459
        %v1952 = vunpack.c.l.s8.bf16 %v1460
        %v1953 = vunpack.c.h.s8.bf16 %v1457
        %v1954 = vunpack.c.h.s8.bf16 %v1458
        %v1955 = vunpack.c.h.s8.bf16 %v1459
        %v1956 = vunpack.c.h.s8.bf16 %v1460
        %v1957 = vunpack.c.l.s8.bf16 %v1461
        %v1958 = vunpack.c.l.s8.bf16 %v1462
        %v1959 = vunpack.c.l.s8.bf16 %v1463
        %v1960 = vunpack.c.l.s8.bf16 %v1464
        %v1961 = vunpack.c.h.s8.bf16 %v1461
        %v1962 = vunpack.c.h.s8.bf16 %v1462
        %v1963 = vunpack.c.h.s8.bf16 %v1463
        %v1964 = vunpack.c.h.s8.bf16 %v1464
        %v1965 = vunpack.c.l.s8.bf16 %v1465
        %v1966 = vunpack.c.l.s8.bf16 %v1466
        %v1967 = vunpack.c.l.s8.bf16 %v1467
        %v1968 = vunpack.c.l.s8.bf16 %v1468
        %v1969 = vunpack.c.h.s8.bf16 %v1465
        %v1970 = vunpack.c.h.s8.bf16 %v1466
        %v1971 = vunpack.c.h.s8.bf16 %v1467
        %v1972 = vunpack.c.h.s8.bf16 %v1468
        %v1973 = vunpack.c.l.s8.bf16 %v1469
        %v1974 = vunpack.c.l.s8.bf16 %v1470
        %v1975 = vunpack.c.l.s8.bf16 %v1471
        %v1976 = vunpack.c.l.s8.bf16 %v1472
        %v1977 = vunpack.c.h.s8.bf16 %v1469
        %v1978 = vunpack.c.h.s8.bf16 %v1470
        %v1979 = vunpack.c.h.s8.bf16 %v1471
        %v1980 = vunpack.c.h.s8.bf16 %v1472
        %v1981 = vunpack.c.l.s8.bf16 %v1473
        %v1982 = vunpack.c.l.s8.bf16 %v1474
        %v1983 = vunpack.c.l.s8.bf16 %v1475
        %v1984 = vunpack.c.l.s8.bf16 %v1476
        %v1985 = vunpack.c.h.s8.bf16 %v1473
        %v1986 = vunpack.c.h.s8.bf16 %v1474
        %v1987 = vunpack.c.h.s8.bf16 %v1475
        %v1988 = vunpack.c.h.s8.bf16 %v1476
        %v1989 = vld [vmem:[#allocation2] sm:$0xff]
        %v1990 = vld [vmem:[#allocation2 + $0x8] sm:$0xff]
        %v1993 = vcombine.high %v1989, %v1989
        %v1995 = vunpack.c.l.s4 1966171168
        %v1996 = vunpack.c.0.s8 %v1995
        %v1997 = vlaneseq
        %v1998 = vshrl.u32 %v1997, 7
        %v1999 = vsub.s32 %v1996, %v1998
        %v2000 = vrot.slane %v1989, %v1999
        %v2002 = vunpack.c.l.s4 1966171168
        %v2003 = vunpack.c.0.s8 %v2002
        %v2004 = vlaneseq
        %v2005 = vshrl.u32 %v2004, 7
        %v2006 = vsub.s32 %v2003, %v2005
        %v2007 = vrot.slane %v1993, %v2006
        %v2008 = vcombine.high %v2000, %v2000
        %v2009 = vcombine.high %v2007, %v2007
        %v2011 = vunpack.c.l.s4 1966171168
        %v2012 = vunpack.c.0.s8 %v2011
        %v2013 = vlaneseq
        %v2014 = vshrl.u32 %v2013, 7
        %v2015 = vsub.s32 %v2012, %v2014
        %v2016 = vrot.slane %v2000, %v2015
        %v2018 = vunpack.c.l.s4 1966171168
        %v2019 = vunpack.c.0.s8 %v2018
        %v2020 = vlaneseq
        %v2021 = vshrl.u32 %v2020, 7
        %v2022 = vsub.s32 %v2019, %v2021
        %v2023 = vrot.slane %v2007, %v2022
        %v2025 = vunpack.c.l.s4 1966171168
        %v2026 = vunpack.c.0.s8 %v2025
        %v2027 = vlaneseq
        %v2028 = vshrl.u32 %v2027, 7
        %v2029 = vsub.s32 %v2026, %v2028
        %v2030 = vrot.slane %v2008, %v2029
        %v2032 = vunpack.c.l.s4 1966171168
        %v2033 = vunpack.c.0.s8 %v2032
        %v2034 = vlaneseq
        %v2035 = vshrl.u32 %v2034, 7
        %v2036 = vsub.s32 %v2033, %v2035
        %v2037 = vrot.slane %v2009, %v2036
        %v2038 = vcombine.high %v2016, %v2016
        %v2039 = vcombine.high %v2023, %v2023
        %v2040 = vcombine.high %v2030, %v2030
        %v2041 = vcombine.high %v2037, %v2037
        %v2042 = vcombine.high %v1990, %v1990
        %v2044 = vunpack.c.l.s4 1966171168
        %v2045 = vunpack.c.0.s8 %v2044
        %v2046 = vlaneseq
        %v2047 = vshrl.u32 %v2046, 7
        %v2048 = vsub.s32 %v2045, %v2047
        %v2049 = vrot.slane %v1990, %v2048
        %v2051 = vunpack.c.l.s4 1966171168
        %v2052 = vunpack.c.0.s8 %v2051
        %v2053 = vlaneseq
        %v2054 = vshrl.u32 %v2053, 7
        %v2055 = vsub.s32 %v2052, %v2054
        %v2056 = vrot.slane %v2042, %v2055
        %v2057 = vcombine.high %v2049, %v2049
        %v2058 = vcombine.high %v2056, %v2056
        %v2060 = vunpack.c.l.s4 1966171168
        %v2061 = vunpack.c.0.s8 %v2060
        %v2062 = vlaneseq
        %v2063 = vshrl.u32 %v2062, 7
        %v2064 = vsub.s32 %v2061, %v2063
        %v2065 = vrot.slane %v2049, %v2064
        %v2067 = vunpack.c.l.s4 1966171168
        %v2068 = vunpack.c.0.s8 %v2067
        %v2069 = vlaneseq
        %v2070 = vshrl.u32 %v2069, 7
        %v2071 = vsub.s32 %v2068, %v2070
        %v2072 = vrot.slane %v2056, %v2071
        %v2074 = vunpack.c.l.s4 1966171168
        %v2075 = vunpack.c.0.s8 %v2074
        %v2076 = vlaneseq
        %v2077 = vshrl.u32 %v2076, 7
        %v2078 = vsub.s32 %v2075, %v2077
        %v2079 = vrot.slane %v2057, %v2078
        %v2081 = vunpack.c.l.s4 1966171168
        %v2082 = vunpack.c.0.s8 %v2081
        %v2083 = vlaneseq
        %v2084 = vshrl.u32 %v2083, 7
        %v2085 = vsub.s32 %v2082, %v2084
        %v2086 = vrot.slane %v2058, %v2085
        %v2087 = vcombine.high %v2065, %v2065
        %v2088 = vcombine.high %v2072, %v2072
        %v2089 = vcombine.high %v2079, %v2079
        %v2090 = vcombine.high %v2086, %v2086
        %2107 = vmatprep.subr.bf16.mxu0 %v1478
        %2108 = vmatpush1.bf16.msra.mxu0 %v1477
        %2109 = vmatprep.subr.bf16.mxu0 %v1482
        %2110 = vmatpush1.bf16.msra.mxu0 %v1481
        %2111 = vmatprep.subr.bf16.mxu0 %v1486
        %2112 = vmatpush1.bf16.msra.mxu0 %v1485
        %2113 = vmatprep.subr.bf16.mxu0 %v1490
        %2114 = vmatpush1.bf16.msra.mxu0 %v1489
        %2115 = vmatprep.subr.bf16.mxu0 %v1494
        %2116 = vmatpush1.bf16.msra.mxu0 %v1493
        %2117 = vmatprep.subr.bf16.mxu0 %v1498
        %2118 = vmatpush1.bf16.msra.mxu0 %v1497
        %2119 = vmatprep.subr.bf16.mxu0 %v1502
        %2120 = vmatpush1.bf16.msra.mxu0 %v1501
        %2121 = vmatprep.subr.bf16.mxu0 %v1506
        %2122 = vmatpush1.bf16.msra.mxu0 %v1505
        %2123 = vmatprep.subr.bf16.mxu0 %v1510
        %2124 = vmatpush1.bf16.msra.mxu0 %v1509
        %2125 = vmatprep.subr.bf16.mxu0 %v1514
        %2126 = vmatpush1.bf16.msra.mxu0 %v1513
        %2127 = vmatprep.subr.bf16.mxu0 %v1518
        %2128 = vmatpush1.bf16.msra.mxu0 %v1517
        %2129 = vmatprep.subr.bf16.mxu0 %v1522
        %2130 = vmatpush1.bf16.msra.mxu0 %v1521
        %2131 = vmatprep.subr.bf16.mxu0 %v1526
        %2132 = vmatpush1.bf16.msra.mxu0 %v1525
        %2133 = vmatprep.subr.bf16.mxu0 %v1530
        %2134 = vmatpush1.bf16.msra.mxu0 %v1529
        %2135 = vmatprep.subr.bf16.mxu0 %v1534
        %2136 = vmatpush1.bf16.msra.mxu0 %v1533
        %2137 = vmatprep.subr.bf16.mxu0 %v1538
        %2138 = vmatpush1.bf16.msra.mxu0 %v1537
        %2139 = vmatprep.mubr.bf16.mxu0 %v2030
        %2140 = vmatmul.mubr.bf16.gmra.mrb[0].mxu0 %v2016
        %v2141 = vpop.f32.mrb[0].mxu0
        %v2142 = vadd.f32 0.0, %v2141
        %v2143 = vpop.f32.mrb[0].mxu0
        %v2144 = vadd.f32 0.0, %v2143
        %v2145 = vpop.f32.mrb[0].mxu0
        %v2146 = vpop.f32.mrb[0].mxu0
        %2147 = vdwg.mxu0
        %2148 = vmatprep.subr.bf16.mxu0 %v1542
        %2149 = vmatpush1.bf16.msra.mxu0 %v1541
        %2150 = vmatprep.subr.bf16.mxu0 %v1546
        %2151 = vmatpush1.bf16.msra.mxu0 %v1545
        %2152 = vmatprep.subr.bf16.mxu0 %v1550
        %2153 = vmatpush1.bf16.msra.mxu0 %v1549
        %2154 = vmatprep.subr.bf16.mxu0 %v1554
        %2155 = vmatpush1.bf16.msra.mxu0 %v1553
        %2156 = vmatprep.subr.bf16.mxu0 %v1558
        %2157 = vmatpush1.bf16.msra.mxu0 %v1557
        %2158 = vmatprep.subr.bf16.mxu0 %v1562
        %2159 = vmatpush1.bf16.msra.mxu0 %v1561
        %2160 = vmatprep.subr.bf16.mxu0 %v1566
        %2161 = vmatpush1.bf16.msra.mxu0 %v1565
        %2162 = vmatprep.subr.bf16.mxu0 %v1570
        %2163 = vmatpush1.bf16.msra.mxu0 %v1569
        %2164 = vmatprep.subr.bf16.mxu0 %v1574
        %2165 = vmatpush1.bf16.msra.mxu0 %v1573
        %2166 = vmatprep.subr.bf16.mxu0 %v1578
        %2167 = vmatpush1.bf16.msra.mxu0 %v1577
        %2168 = vmatprep.subr.bf16.mxu0 %v1582
        %2169 = vmatpush1.bf16.msra.mxu0 %v1581
        %2170 = vmatprep.subr.bf16.mxu0 %v1586
        %2171 = vmatpush1.bf16.msra.mxu0 %v1585
        %2172 = vmatprep.subr.bf16.mxu0 %v1590
        %2173 = vmatpush1.bf16.msra.mxu0 %v1589
        %2174 = vmatprep.subr.bf16.mxu0 %v1594
        %2175 = vmatpush1.bf16.msra.mxu0 %v1593
        %2176 = vmatprep.subr.bf16.mxu0 %v1598
        %2177 = vmatpush1.bf16.msra.mxu0 %v1597
        %2178 = vmatprep.subr.bf16.mxu0 %v1602
        %2179 = vmatpush1.bf16.msra.mxu0 %v1601
        %2180 = vmatprep.mubr.bf16.mxu0 %v2040
        %2181 = vmatmul.mubr.bf16.gmra.mrb[0].mxu0 %v2038
        %v2182 = vpop.f32.mrb[0].mxu0
        %v2183 = vadd.f32 %v2142, %v2182
        %v2184 = vpop.f32.mrb[0].mxu0
        %v2185 = vadd.f32 %v2144, %v2184
        %v2186 = vpop.f32.mrb[0].mxu0
        %v2187 = vpop.f32.mrb[0].mxu0
        %2188 = vdwg.mxu0
        %2189 = vmatprep.subr.bf16.mxu0 %v1606
        %2190 = vmatpush1.bf16.msra.mxu0 %v1605
        %2191 = vmatprep.subr.bf16.mxu0 %v1610
        %2192 = vmatpush1.bf16.msra.mxu0 %v1609
        %2193 = vmatprep.subr.bf16.mxu0 %v1614
        %2194 = vmatpush1.bf16.msra.mxu0 %v1613
        %2195 = vmatprep.subr.bf16.mxu0 %v1618
        %2196 = vmatpush1.bf16.msra.mxu0 %v1617
        %2197 = vmatprep.subr.bf16.mxu0 %v1622
        %2198 = vmatpush1.bf16.msra.mxu0 %v1621
        %2199 = vmatprep.subr.bf16.mxu0 %v1626
        %2200 = vmatpush1.bf16.msra.mxu0 %v1625
        %2201 = vmatprep.subr.bf16.mxu0 %v1630
        %2202 = vmatpush1.bf16.msra.mxu0 %v1629
        %2203 = vmatprep.subr.bf16.mxu0 %v1634
        %2204 = vmatpush1.bf16.msra.mxu0 %v1633
        %2205 = vmatprep.subr.bf16.mxu0 %v1638
        %2206 = vmatpush1.bf16.msra.mxu0 %v1637
        %2207 = vmatprep.subr.bf16.mxu0 %v1642
        %2208 = vmatpush1.bf16.msra.mxu0 %v1641
        %2209 = vmatprep.subr.bf16.mxu0 %v1646
        %2210 = vmatpush1.bf16.msra.mxu0 %v1645
        %2211 = vmatprep.subr.bf16.mxu0 %v1650
        %2212 = vmatpush1.bf16.msra.mxu0 %v1649
        %2213 = vmatprep.subr.bf16.mxu0 %v1654
        %2214 = vmatpush1.bf16.msra.mxu0 %v1653
        %2215 = vmatprep.subr.bf16.mxu0 %v1658
        %2216 = vmatpush1.bf16.msra.mxu0 %v1657
        %2217 = vmatprep.subr.bf16.mxu0 %v1662
        %2218 = vmatpush1.bf16.msra.mxu0 %v1661
        %2219 = vmatprep.subr.bf16.mxu0 %v1666
        %2220 = vmatpush1.bf16.msra.mxu0 %v1665
        %2221 = vmatprep.mubr.bf16.mxu0 %v2037
        %2222 = vmatmul.mubr.bf16.gmra.mrb[0].mxu0 %v2023
        %v2223 = vpop.f32.mrb[0].mxu0
        %v2224 = vadd.f32 %v2183, %v2223
        %v2225 = vpop.f32.mrb[0].mxu0
        %v2226 = vadd.f32 %v2185, %v2225
        %v2227 = vpop.f32.mrb[0].mxu0
        %v2228 = vpop.f32.mrb[0].mxu0
        %2229 = vdwg.mxu0
        %2230 = vmatprep.subr.bf16.mxu0 %v1670
        %2231 = vmatpush1.bf16.msra.mxu0 %v1669
        %2232 = vmatprep.subr.bf16.mxu0 %v1674
        %2233 = vmatpush1.bf16.msra.mxu0 %v1673
        %2234 = vmatprep.subr.bf16.mxu0 %v1678
        %2235 = vmatpush1.bf16.msra.mxu0 %v1677
        %2236 = vmatprep.subr.bf16.mxu0 %v1682
        %2237 = vmatpush1.bf16.msra.mxu0 %v1681
        %2238 = vmatprep.subr.bf16.mxu0 %v1686
        %2239 = vmatpush1.bf16.msra.mxu0 %v1685
        %2240 = vmatprep.subr.bf16.mxu0 %v1690
        %2241 = vmatpush1.bf16.msra.mxu0 %v1689
        %2242 = vmatprep.subr.bf16.mxu0 %v1694
        %2243 = vmatpush1.bf16.msra.mxu0 %v1693
        %2244 = vmatprep.subr.bf16.mxu0 %v1698
        %2245 = vmatpush1.bf16.msra.mxu0 %v1697
        %2246 = vmatprep.subr.bf16.mxu0 %v1702
        %2247 = vmatpush1.bf16.msra.mxu0 %v1701
        %2248 = vmatprep.subr.bf16.mxu0 %v1706
        %2249 = vmatpush1.bf16.msra.mxu0 %v1705
        %2250 = vmatprep.subr.bf16.mxu0 %v1710
        %2251 = vmatpush1.bf16.msra.mxu0 %v1709
        %2252 = vmatprep.subr.bf16.mxu0 %v1714
        %2253 = vmatpush1.bf16.msra.mxu0 %v1713
        %2254 = vmatprep.subr.bf16.mxu0 %v1718
        %2255 = vmatpush1.bf16.msra.mxu0 %v1717
        %2256 = vmatprep.subr.bf16.mxu0 %v1722
        %2257 = vmatpush1.bf16.msra.mxu0 %v1721
        %2258 = vmatprep.subr.bf16.mxu0 %v1726
        %2259 = vmatpush1.bf16.msra.mxu0 %v1725
        %2260 = vmatprep.subr.bf16.mxu0 %v1730
        %2261 = vmatpush1.bf16.msra.mxu0 %v1729
        %2262 = vmatprep.mubr.bf16.mxu0 %v2041
        %2263 = vmatmul.mubr.bf16.gmra.mrb[0].mxu0 %v2039
        %v2264 = vpop.f32.mrb[0].mxu0
        %v2265 = vadd.f32 %v2224, %v2264
        %v2266 = vpop.f32.mrb[0].mxu0
        %v2267 = vadd.f32 %v2226, %v2266
        %v2268 = vpop.f32.mrb[0].mxu0
        %v2269 = vpop.f32.mrb[0].mxu0
        %2270 = vdwg.mxu0
        %2271 = vmatprep.subr.bf16.mxu0 %v1734
        %2272 = vmatpush1.bf16.msra.mxu0 %v1733
        %2273 = vmatprep.subr.bf16.mxu0 %v1738
        %2274 = vmatpush1.bf16.msra.mxu0 %v1737
        %2275 = vmatprep.subr.bf16.mxu0 %v1742
        %2276 = vmatpush1.bf16.msra.mxu0 %v1741
        %2277 = vmatprep.subr.bf16.mxu0 %v1746
        %2278 = vmatpush1.bf16.msra.mxu0 %v1745
        %2279 = vmatprep.subr.bf16.mxu0 %v1750
        %2280 = vmatpush1.bf16.msra.mxu0 %v1749
        %2281 = vmatprep.subr.bf16.mxu0 %v1754
        %2282 = vmatpush1.bf16.msra.mxu0 %v1753
        %2283 = vmatprep.subr.bf16.mxu0 %v1758
        %2284 = vmatpush1.bf16.msra.mxu0 %v1757
        %2285 = vmatprep.subr.bf16.mxu0 %v1762
        %2286 = vmatpush1.bf16.msra.mxu0 %v1761
        %2287 = vmatprep.subr.bf16.mxu0 %v1766
        %2288 = vmatpush1.bf16.msra.mxu0 %v1765
        %2289 = vmatprep.subr.bf16.mxu0 %v1770
        %2290 = vmatpush1.bf16.msra.mxu0 %v1769
        %2291 = vmatprep.subr.bf16.mxu0 %v1774
        %2292 = vmatpush1.bf16.msra.mxu0 %v1773
        %2293 = vmatprep.subr.bf16.mxu0 %v1778
        %2294 = vmatpush1.bf16.msra.mxu0 %v1777
        %2295 = vmatprep.subr.bf16.mxu0 %v1782
        %2296 = vmatpush1.bf16.msra.mxu0 %v1781
        %2297 = vmatprep.subr.bf16.mxu0 %v1786
        %2298 = vmatpush1.bf16.msra.mxu0 %v1785
        %2299 = vmatprep.subr.bf16.mxu0 %v1790
        %2300 = vmatpush1.bf16.msra.mxu0 %v1789
        %2301 = vmatprep.subr.bf16.mxu0 %v1794
        %2302 = vmatpush1.bf16.msra.mxu0 %v1793
        %2303 = vmatprep.mubr.bf16.mxu0 %v2079
        %2304 = vmatmul.mubr.bf16.gmra.mrb[0].mxu0 %v2065
        %v2305 = vpop.f32.mrb[0].mxu0
        %v2306 = vadd.f32 %v2265, %v2305
        %v2307 = vpop.f32.mrb[0].mxu0
        %v2308 = vadd.f32 %v2267, %v2307
        %v2309 = vpop.f32.mrb[0].mxu0
        %v2310 = vpop.f32.mrb[0].mxu0
        %2311 = vdwg.mxu0
        %2312 = vmatprep.subr.bf16.mxu0 %v1798
        %2313 = vmatpush1.bf16.msra.mxu0 %v1797
        %2314 = vmatprep.subr.bf16.mxu0 %v1802
        %2315 = vmatpush1.bf16.msra.mxu0 %v1801
        %2316 = vmatprep.subr.bf16.mxu0 %v1806
        %2317 = vmatpush1.bf16.msra.mxu0 %v1805
        %2318 = vmatprep.subr.bf16.mxu0 %v1810
        %2319 = vmatpush1.bf16.msra.mxu0 %v1809
        %2320 = vmatprep.subr.bf16.mxu0 %v1814
        %2321 = vmatpush1.bf16.msra.mxu0 %v1813
        %2322 = vmatprep.subr.bf16.mxu0 %v1818
        %2323 = vmatpush1.bf16.msra.mxu0 %v1817
        %2324 = vmatprep.subr.bf16.mxu0 %v1822
        %2325 = vmatpush1.bf16.msra.mxu0 %v1821
        %2326 = vmatprep.subr.bf16.mxu0 %v1826
        %2327 = vmatpush1.bf16.msra.mxu0 %v1825
        %2328 = vmatprep.subr.bf16.mxu0 %v1830
        %2329 = vmatpush1.bf16.msra.mxu0 %v1829
        %2330 = vmatprep.subr.bf16.mxu0 %v1834
        %2331 = vmatpush1.bf16.msra.mxu0 %v1833
        %2332 = vmatprep.subr.bf16.mxu0 %v1838
        %2333 = vmatpush1.bf16.msra.mxu0 %v1837
        %2334 = vmatprep.subr.bf16.mxu0 %v1842
        %2335 = vmatpush1.bf16.msra.mxu0 %v1841
        %2336 = vmatprep.subr.bf16.mxu0 %v1846
        %2337 = vmatpush1.bf16.msra.mxu0 %v1845
        %2338 = vmatprep.subr.bf16.mxu0 %v1850
        %2339 = vmatpush1.bf16.msra.mxu0 %v1849
        %2340 = vmatprep.subr.bf16.mxu0 %v1854
        %2341 = vmatpush1.bf16.msra.mxu0 %v1853
        %2342 = vmatprep.subr.bf16.mxu0 %v1858
        %2343 = vmatpush1.bf16.msra.mxu0 %v1857
        %2344 = vmatprep.mubr.bf16.mxu0 %v2089
        %2345 = vmatmul.mubr.bf16.gmra.mrb[0].mxu0 %v2087
        %v2346 = vpop.f32.mrb[0].mxu0
        %v2347 = vadd.f32 %v2306, %v2346
        %v2348 = vpop.f32.mrb[0].mxu0
        %v2349 = vadd.f32 %v2308, %v2348
        %v2350 = vpop.f32.mrb[0].mxu0
        %v2351 = vpop.f32.mrb[0].mxu0
        %2352 = vdwg.mxu0
        %2353 = vmatprep.subr.bf16.mxu0 %v1862
        %2354 = vmatpush1.bf16.msra.mxu0 %v1861
        %2355 = vmatprep.subr.bf16.mxu0 %v1866
        %2356 = vmatpush1.bf16.msra.mxu0 %v1865
        %2357 = vmatprep.subr.bf16.mxu0 %v1870
        %2358 = vmatpush1.bf16.msra.mxu0 %v1869
        %2359 = vmatprep.subr.bf16.mxu0 %v1874
        %2360 = vmatpush1.bf16.msra.mxu0 %v1873
        %2361 = vmatprep.subr.bf16.mxu0 %v1878
        %2362 = vmatpush1.bf16.msra.mxu0 %v1877
        %2363 = vmatprep.subr.bf16.mxu0 %v1882
        %2364 = vmatpush1.bf16.msra.mxu0 %v1881
        %2365 = vmatprep.subr.bf16.mxu0 %v1886
        %2366 = vmatpush1.bf16.msra.mxu0 %v1885
        %2367 = vmatprep.subr.bf16.mxu0 %v1890
        %2368 = vmatpush1.bf16.msra.mxu0 %v1889
        %2369 = vmatprep.subr.bf16.mxu0 %v1894
        %2370 = vmatpush1.bf16.msra.mxu0 %v1893
        %2371 = vmatprep.subr.bf16.mxu0 %v1898
        %2372 = vmatpush1.bf16.msra.mxu0 %v1897
        %2373 = vmatprep.subr.bf16.mxu0 %v1902
        %2374 = vmatpush1.bf16.msra.mxu0 %v1901
        %2375 = vmatprep.subr.bf16.mxu0 %v1906
        %2376 = vmatpush1.bf16.msra.mxu0 %v1905
        %2377 = vmatprep.subr.bf16.mxu0 %v1910
        %2378 = vmatpush1.bf16.msra.mxu0 %v1909
        %2379 = vmatprep.subr.bf16.mxu0 %v1914
        %2380 = vmatpush1.bf16.msra.mxu0 %v1913
        %2381 = vmatprep.subr.bf16.mxu0 %v1918
        %2382 = vmatpush1.bf16.msra.mxu0 %v1917
        %2383 = vmatprep.subr.bf16.mxu0 %v1922
        %2384 = vmatpush1.bf16.msra.mxu0 %v1921
        %2385 = vmatprep.mubr.bf16.mxu0 %v2086
        %2386 = vmatmul.mubr.bf16.gmra.mrb[0].mxu0 %v2072
        %v2387 = vpop.f32.mrb[0].mxu0
        %v2388 = vadd.f32 %v2347, %v2387
        %v2389 = vpop.f32.mrb[0].mxu0
        %v2390 = vadd.f32 %v2349, %v2389
        %v2391 = vpop.f32.mrb[0].mxu0
        %v2392 = vpop.f32.mrb[0].mxu0
        %2393 = vdwg.mxu0
        %2394 = vmatprep.subr.bf16.mxu0 %v1926
        %2395 = vmatpush1.bf16.msra.mxu0 %v1925
        %2396 = vmatprep.subr.bf16.mxu0 %v1930
        %2397 = vmatpush1.bf16.msra.mxu0 %v1929
        %2398 = vmatprep.subr.bf16.mxu0 %v1934
        %2399 = vmatpush1.bf16.msra.mxu0 %v1933
        %2400 = vmatprep.subr.bf16.mxu0 %v1938
        %2401 = vmatpush1.bf16.msra.mxu0 %v1937
        %2402 = vmatprep.subr.bf16.mxu0 %v1942
        %2403 = vmatpush1.bf16.msra.mxu0 %v1941
        %2404 = vmatprep.subr.bf16.mxu0 %v1946
        %2405 = vmatpush1.bf16.msra.mxu0 %v1945
        %2406 = vmatprep.subr.bf16.mxu0 %v1950
        %2407 = vmatpush1.bf16.msra.mxu0 %v1949
        %2408 = vmatprep.subr.bf16.mxu0 %v1954
        %2409 = vmatpush1.bf16.msra.mxu0 %v1953
        %2410 = vmatprep.subr.bf16.mxu0 %v1958
        %2411 = vmatpush1.bf16.msra.mxu0 %v1957
        %2412 = vmatprep.subr.bf16.mxu0 %v1962
        %2413 = vmatpush1.bf16.msra.mxu0 %v1961
        %2414 = vmatprep.subr.bf16.mxu0 %v1966
        %2415 = vmatpush1.bf16.msra.mxu0 %v1965
        %2416 = vmatprep.subr.bf16.mxu0 %v1970
        %2417 = vmatpush1.bf16.msra.mxu0 %v1969
        %2418 = vmatprep.subr.bf16.mxu0 %v1974
        %2419 = vmatpush1.bf16.msra.mxu0 %v1973
        %2420 = vmatprep.subr.bf16.mxu0 %v1978
        %2421 = vmatpush1.bf16.msra.mxu0 %v1977
        %2422 = vmatprep.subr.bf16.mxu0 %v1982
        %2423 = vmatpush1.bf16.msra.mxu0 %v1981
        %2424 = vmatprep.subr.bf16.mxu0 %v1986
        %2425 = vmatpush1.bf16.msra.mxu0 %v1985
        %2426 = vmatprep.mubr.bf16.mxu0 %v2090
        %2427 = vmatmul.mubr.bf16.gmra.mrb[0].mxu0 %v2088
        %v2428 = vpop.f32.mrb[0].mxu0
        %v2429 = vadd.f32 %v2388, %v2428
        %v2430 = vpop.f32.mrb[0].mxu0
        %v2431 = vadd.f32 %v2390, %v2430
        %v2432 = vpop.f32.mrb[0].mxu0
        %v2433 = vpop.f32.mrb[0].mxu0
        %2434 = vdwg.mxu0
        %2435 = vmatprep.subr.bf16.mxu0 %v1480
        %2436 = vmatpush1.bf16.msra.mxu0 %v1479
        %2437 = vmatprep.subr.bf16.mxu0 %v1484
        %2438 = vmatpush1.bf16.msra.mxu0 %v1483
        %2439 = vmatprep.subr.bf16.mxu0 %v1488
        %2440 = vmatpush1.bf16.msra.mxu0 %v1487
        %2441 = vmatprep.subr.bf16.mxu0 %v1492
        %2442 = vmatpush1.bf16.msra.mxu0 %v1491
        %2443 = vmatprep.subr.bf16.mxu0 %v1496
        %2444 = vmatpush1.bf16.msra.mxu0 %v1495
        %2445 = vmatprep.subr.bf16.mxu0 %v1500
        %2446 = vmatpush1.bf16.msra.mxu0 %v1499
        %2447 = vmatprep.subr.bf16.mxu0 %v1504
        %2448 = vmatpush1.bf16.msra.mxu0 %v1503
        %2449 = vmatprep.subr.bf16.mxu0 %v1508
        %2450 = vmatpush1.bf16.msra.mxu0 %v1507
        %2451 = vmatprep.subr.bf16.mxu0 %v1512
        %2452 = vmatpush1.bf16.msra.mxu0 %v1511
        %2453 = vmatprep.subr.bf16.mxu0 %v1516
        %2454 = vmatpush1.bf16.msra.mxu0 %v1515
        %2455 = vmatprep.subr.bf16.mxu0 %v1520
        %2456 = vmatpush1.bf16.msra.mxu0 %v1519
        %2457 = vmatprep.subr.bf16.mxu0 %v1524
        %2458 = vmatpush1.bf16.msra.mxu0 %v1523
        %2459 = vmatprep.subr.bf16.mxu0 %v1528
        %2460 = vmatpush1.bf16.msra.mxu0 %v1527
        %2461 = vmatprep.subr.bf16.mxu0 %v1532
        %2462 = vmatpush1.bf16.msra.mxu0 %v1531
        %2463 = vmatprep.subr.bf16.mxu0 %v1536
        %2464 = vmatpush1.bf16.msra.mxu0 %v1535
        %2465 = vmatprep.subr.bf16.mxu0 %v1540
        %2466 = vmatpush1.bf16.msra.mxu0 %v1539
        %2467 = vmatprep.mubr.bf16.mxu0 %v2030
        %2468 = vmatmul.mubr.bf16.gmra.mrb[0].mxu0 %v2016
        %v2469 = vpop.f32.mrb[0].mxu0
        %v2470 = vadd.f32 0.0, %v2469
        %v2471 = vpop.f32.mrb[0].mxu0
        %v2472 = vadd.f32 0.0, %v2471
        %v2473 = vpop.f32.mrb[0].mxu0
        %v2474 = vpop.f32.mrb[0].mxu0
        %2475 = vdwg.mxu0
        %2476 = vmatprep.subr.bf16.mxu0 %v1544
        %2477 = vmatpush1.bf16.msra.mxu0 %v1543
        %2478 = vmatprep.subr.bf16.mxu0 %v1548
        %2479 = vmatpush1.bf16.msra.mxu0 %v1547
        %2480 = vmatprep.subr.bf16.mxu0 %v1552
        %2481 = vmatpush1.bf16.msra.mxu0 %v1551
        %2482 = vmatprep.subr.bf16.mxu0 %v1556
        %2483 = vmatpush1.bf16.msra.mxu0 %v1555
        %2484 = vmatprep.subr.bf16.mxu0 %v1560
        %2485 = vmatpush1.bf16.msra.mxu0 %v1559
        %2486 = vmatprep.subr.bf16.mxu0 %v1564
        %2487 = vmatpush1.bf16.msra.mxu0 %v1563
        %2488 = vmatprep.subr.bf16.mxu0 %v1568
        %2489 = vmatpush1.bf16.msra.mxu0 %v1567
        %2490 = vmatprep.subr.bf16.mxu0 %v1572
        %2491 = vmatpush1.bf16.msra.mxu0 %v1571
        %2492 = vmatprep.subr.bf16.mxu0 %v1576
        %2493 = vmatpush1.bf16.msra.mxu0 %v1575
        %2494 = vmatprep.subr.bf16.mxu0 %v1580
        %2495 = vmatpush1.bf16.msra.mxu0 %v1579
        %2496 = vmatprep.subr.bf16.mxu0 %v1584
        %2497 = vmatpush1.bf16.msra.mxu0 %v1583
        %2498 = vmatprep.subr.bf16.mxu0 %v1588
        %2499 = vmatpush1.bf16.msra.mxu0 %v1587
        %2500 = vmatprep.subr.bf16.mxu0 %v1592
        %2501 = vmatpush1.bf16.msra.mxu0 %v1591
        %2502 = vmatprep.subr.bf16.mxu0 %v1596
        %2503 = vmatpush1.bf16.msra.mxu0 %v1595
        %2504 = vmatprep.subr.bf16.mxu0 %v1600
        %2505 = vmatpush1.bf16.msra.mxu0 %v1599
        %2506 = vmatprep.subr.bf16.mxu0 %v1604
        %2507 = vmatpush1.bf16.msra.mxu0 %v1603
        %2508 = vmatprep.mubr.bf16.mxu0 %v2040
        %2509 = vmatmul.mubr.bf16.gmra.mrb[0].mxu0 %v2038
        %v2510 = vpop.f32.mrb[0].mxu0
        %v2511 = vadd.f32 %v2470, %v2510
        %v2512 = vpop.f32.mrb[0].mxu0
        %v2513 = vadd.f32 %v2472, %v2512
        %v2514 = vpop.f32.mrb[0].mxu0
        %v2515 = vpop.f32.mrb[0].mxu0
        %2516 = vdwg.mxu0
        %2517 = vmatprep.subr.bf16.mxu0 %v1608
        %2518 = vmatpush1.bf16.msra.mxu0 %v1607
        %2519 = vmatprep.subr.bf16.mxu0 %v1612
        %2520 = vmatpush1.bf16.msra.mxu0 %v1611
        %2521 = vmatprep.subr.bf16.mxu0 %v1616
        %2522 = vmatpush1.bf16.msra.mxu0 %v1615
        %2523 = vmatprep.subr.bf16.mxu0 %v1620
        %2524 = vmatpush1.bf16.msra.mxu0 %v1619
        %2525 = vmatprep.subr.bf16.mxu0 %v1624
        %2526 = vmatpush1.bf16.msra.mxu0 %v1623
        %2527 = vmatprep.subr.bf16.mxu0 %v1628
        %2528 = vmatpush1.bf16.msra.mxu0 %v1627
        %2529 = vmatprep.subr.bf16.mxu0 %v1632
        %2530 = vmatpush1.bf16.msra.mxu0 %v1631
        %2531 = vmatprep.subr.bf16.mxu0 %v1636
        %2532 = vmatpush1.bf16.msra.mxu0 %v1635
        %2533 = vmatprep.subr.bf16.mxu0 %v1640
        %2534 = vmatpush1.bf16.msra.mxu0 %v1639
        %2535 = vmatprep.subr.bf16.mxu0 %v1644
        %2536 = vmatpush1.bf16.msra.mxu0 %v1643
        %2537 = vmatprep.subr.bf16.mxu0 %v1648
        %2538 = vmatpush1.bf16.msra.mxu0 %v1647
        %2539 = vmatprep.subr.bf16.mxu0 %v1652
        %2540 = vmatpush1.bf16.msra.mxu0 %v1651
        %2541 = vmatprep.subr.bf16.mxu0 %v1656
        %2542 = vmatpush1.bf16.msra.mxu0 %v1655
        %2543 = vmatprep.subr.bf16.mxu0 %v1660
        %2544 = vmatpush1.bf16.msra.mxu0 %v1659
        %2545 = vmatprep.subr.bf16.mxu0 %v1664
        %2546 = vmatpush1.bf16.msra.mxu0 %v1663
        %2547 = vmatprep.subr.bf16.mxu0 %v1668
        %2548 = vmatpush1.bf16.msra.mxu0 %v1667
        %2549 = vmatprep.mubr.bf16.mxu0 %v2037
        %2550 = vmatmul.mubr.bf16.gmra.mrb[0].mxu0 %v2023
        %v2551 = vpop.f32.mrb[0].mxu0
        %v2552 = vadd.f32 %v2511, %v2551
        %v2553 = vpop.f32.mrb[0].mxu0
        %v2554 = vadd.f32 %v2513, %v2553
        %v2555 = vpop.f32.mrb[0].mxu0
        %v2556 = vpop.f32.mrb[0].mxu0
        %2557 = vdwg.mxu0
        %2558 = vmatprep.subr.bf16.mxu0 %v1672
        %2559 = vmatpush1.bf16.msra.mxu0 %v1671
        %2560 = vmatprep.subr.bf16.mxu0 %v1676
        %2561 = vmatpush1.bf16.msra.mxu0 %v1675
        %2562 = vmatprep.subr.bf16.mxu0 %v1680
        %2563 = vmatpush1.bf16.msra.mxu0 %v1679
        %2564 = vmatprep.subr.bf16.mxu0 %v1684
        %2565 = vmatpush1.bf16.msra.mxu0 %v1683
        %2566 = vmatprep.subr.bf16.mxu0 %v1688
        %2567 = vmatpush1.bf16.msra.mxu0 %v1687
        %2568 = vmatprep.subr.bf16.mxu0 %v1692
        %2569 = vmatpush1.bf16.msra.mxu0 %v1691
        %2570 = vmatprep.subr.bf16.mxu0 %v1696
        %2571 = vmatpush1.bf16.msra.mxu0 %v1695
        %2572 = vmatprep.subr.bf16.mxu0 %v1700
        %2573 = vmatpush1.bf16.msra.mxu0 %v1699
        %2574 = vmatprep.subr.bf16.mxu0 %v1704
        %2575 = vmatpush1.bf16.msra.mxu0 %v1703
        %2576 = vmatprep.subr.bf16.mxu0 %v1708
        %2577 = vmatpush1.bf16.msra.mxu0 %v1707
        %2578 = vmatprep.subr.bf16.mxu0 %v1712
        %2579 = vmatpush1.bf16.msra.mxu0 %v1711
        %2580 = vmatprep.subr.bf16.mxu0 %v1716
        %2581 = vmatpush1.bf16.msra.mxu0 %v1715
        %2582 = vmatprep.subr.bf16.mxu0 %v1720
        %2583 = vmatpush1.bf16.msra.mxu0 %v1719
        %2584 = vmatprep.subr.bf16.mxu0 %v1724
        %2585 = vmatpush1.bf16.msra.mxu0 %v1723
        %2586 = vmatprep.subr.bf16.mxu0 %v1728
        %2587 = vmatpush1.bf16.msra.mxu0 %v1727
        %2588 = vmatprep.subr.bf16.mxu0 %v1732
        %2589 = vmatpush1.bf16.msra.mxu0 %v1731
        %2590 = vmatprep.mubr.bf16.mxu0 %v2041
        %2591 = vmatmul.mubr.bf16.gmra.mrb[0].mxu0 %v2039
        %v2592 = vpop.f32.mrb[0].mxu0
        %v2593 = vadd.f32 %v2552, %v2592
        %v2594 = vpop.f32.mrb[0].mxu0
        %v2595 = vadd.f32 %v2554, %v2594
        %v2596 = vpop.f32.mrb[0].mxu0
        %v2597 = vpop.f32.mrb[0].mxu0
        %2598 = vdwg.mxu0
        %2599 = vmatprep.subr.bf16.mxu0 %v1736
        %2600 = vmatpush1.bf16.msra.mxu0 %v1735
        %2601 = vmatprep.subr.bf16.mxu0 %v1740
        %2602 = vmatpush1.bf16.msra.mxu0 %v1739
        %2603 = vmatprep.subr.bf16.mxu0 %v1744
        %2604 = vmatpush1.bf16.msra.mxu0 %v1743
        %2605 = vmatprep.subr.bf16.mxu0 %v1748
        %2606 = vmatpush1.bf16.msra.mxu0 %v1747
        %2607 = vmatprep.subr.bf16.mxu0 %v1752
        %2608 = vmatpush1.bf16.msra.mxu0 %v1751
        %2609 = vmatprep.subr.bf16.mxu0 %v1756
        %2610 = vmatpush1.bf16.msra.mxu0 %v1755
        %2611 = vmatprep.subr.bf16.mxu0 %v1760
        %2612 = vmatpush1.bf16.msra.mxu0 %v1759
        %2613 = vmatprep.subr.bf16.mxu0 %v1764
        %2614 = vmatpush1.bf16.msra.mxu0 %v1763
        %2615 = vmatprep.subr.bf16.mxu0 %v1768
        %2616 = vmatpush1.bf16.msra.mxu0 %v1767
        %2617 = vmatprep.subr.bf16.mxu0 %v1772
        %2618 = vmatpush1.bf16.msra.mxu0 %v1771
        %2619 = vmatprep.subr.bf16.mxu0 %v1776
        %2620 = vmatpush1.bf16.msra.mxu0 %v1775
        %2621 = vmatprep.subr.bf16.mxu0 %v1780
        %2622 = vmatpush1.bf16.msra.mxu0 %v1779
        %2623 = vmatprep.subr.bf16.mxu0 %v1784
        %2624 = vmatpush1.bf16.msra.mxu0 %v1783
        %2625 = vmatprep.subr.bf16.mxu0 %v1788
        %2626 = vmatpush1.bf16.msra.mxu0 %v1787
        %2627 = vmatprep.subr.bf16.mxu0 %v1792
        %2628 = vmatpush1.bf16.msra.mxu0 %v1791
        %2629 = vmatprep.subr.bf16.mxu0 %v1796
        %2630 = vmatpush1.bf16.msra.mxu0 %v1795
        %2631 = vmatprep.mubr.bf16.mxu0 %v2079
        %2632 = vmatmul.mubr.bf16.gmra.mrb[0].mxu0 %v2065
        %v2633 = vpop.f32.mrb[0].mxu0
        %v2634 = vadd.f32 %v2593, %v2633
        %v2635 = vpop.f32.mrb[0].mxu0
        %v2636 = vadd.f32 %v2595, %v2635
        %v2637 = vpop.f32.mrb[0].mxu0
        %v2638 = vpop.f32.mrb[0].mxu0
        %2639 = vdwg.mxu0
        %2640 = vmatprep.subr.bf16.mxu0 %v1800
        %2641 = vmatpush1.bf16.msra.mxu0 %v1799
        %2642 = vmatprep.subr.bf16.mxu0 %v1804
        %2643 = vmatpush1.bf16.msra.mxu0 %v1803
        %2644 = vmatprep.subr.bf16.mxu0 %v1808
        %2645 = vmatpush1.bf16.msra.mxu0 %v1807
        %2646 = vmatprep.subr.bf16.mxu0 %v1812
        %2647 = vmatpush1.bf16.msra.mxu0 %v1811
        %2648 = vmatprep.subr.bf16.mxu0 %v1816
        %2649 = vmatpush1.bf16.msra.mxu0 %v1815
        %2650 = vmatprep.subr.bf16.mxu0 %v1820
        %2651 = vmatpush1.bf16.msra.mxu0 %v1819
        %2652 = vmatprep.subr.bf16.mxu0 %v1824
        %2653 = vmatpush1.bf16.msra.mxu0 %v1823
        %2654 = vmatprep.subr.bf16.mxu0 %v1828
        %2655 = vmatpush1.bf16.msra.mxu0 %v1827
        %2656 = vmatprep.subr.bf16.mxu0 %v1832
        %2657 = vmatpush1.bf16.msra.mxu0 %v1831
        %2658 = vmatprep.subr.bf16.mxu0 %v1836
        %2659 = vmatpush1.bf16.msra.mxu0 %v1835
        %2660 = vmatprep.subr.bf16.mxu0 %v1840
        %2661 = vmatpush1.bf16.msra.mxu0 %v1839
        %2662 = vmatprep.subr.bf16.mxu0 %v1844
        %2663 = vmatpush1.bf16.msra.mxu0 %v1843
        %2664 = vmatprep.subr.bf16.mxu0 %v1848
        %2665 = vmatpush1.bf16.msra.mxu0 %v1847
        %2666 = vmatprep.subr.bf16.mxu0 %v1852
        %2667 = vmatpush1.bf16.msra.mxu0 %v1851
        %2668 = vmatprep.subr.bf16.mxu0 %v1856
        %2669 = vmatpush1.bf16.msra.mxu0 %v1855
        %2670 = vmatprep.subr.bf16.mxu0 %v1860
        %2671 = vmatpush1.bf16.msra.mxu0 %v1859
        %2672 = vmatprep.mubr.bf16.mxu0 %v2089
        %2673 = vmatmul.mubr.bf16.gmra.mrb[0].mxu0 %v2087
        %v2674 = vpop.f32.mrb[0].mxu0
        %v2675 = vadd.f32 %v2634, %v2674
        %v2676 = vpop.f32.mrb[0].mxu0
        %v2677 = vadd.f32 %v2636, %v2676
        %v2678 = vpop.f32.mrb[0].mxu0
        %v2679 = vpop.f32.mrb[0].mxu0
        %2680 = vdwg.mxu0
        %2681 = vmatprep.subr.bf16.mxu0 %v1864
        %2682 = vmatpush1.bf16.msra.mxu0 %v1863
        %2683 = vmatprep.subr.bf16.mxu0 %v1868
        %2684 = vmatpush1.bf16.msra.mxu0 %v1867
        %2685 = vmatprep.subr.bf16.mxu0 %v1872
        %2686 = vmatpush1.bf16.msra.mxu0 %v1871
        %2687 = vmatprep.subr.bf16.mxu0 %v1876
        %2688 = vmatpush1.bf16.msra.mxu0 %v1875
        %2689 = vmatprep.subr.bf16.mxu0 %v1880
        %2690 = vmatpush1.bf16.msra.mxu0 %v1879
        %2691 = vmatprep.subr.bf16.mxu0 %v1884
        %2692 = vmatpush1.bf16.msra.mxu0 %v1883
        %2693 = vmatprep.subr.bf16.mxu0 %v1888
        %2694 = vmatpush1.bf16.msra.mxu0 %v1887
        %2695 = vmatprep.subr.bf16.mxu0 %v1892
        %2696 = vmatpush1.bf16.msra.mxu0 %v1891
        %2697 = vmatprep.subr.bf16.mxu0 %v1896
        %2698 = vmatpush1.bf16.msra.mxu0 %v1895
        %2699 = vmatprep.subr.bf16.mxu0 %v1900
        %2700 = vmatpush1.bf16.msra.mxu0 %v1899
        %2701 = vmatprep.subr.bf16.mxu0 %v1904
        %2702 = vmatpush1.bf16.msra.mxu0 %v1903
        %2703 = vmatprep.subr.bf16.mxu0 %v1908
        %2704 = vmatpush1.bf16.msra.mxu0 %v1907
        %2705 = vmatprep.subr.bf16.mxu0 %v1912
        %2706 = vmatpush1.bf16.msra.mxu0 %v1911
        %2707 = vmatprep.subr.bf16.mxu0 %v1916
        %2708 = vmatpush1.bf16.msra.mxu0 %v1915
        %2709 = vmatprep.subr.bf16.mxu0 %v1920
        %2710 = vmatpush1.bf16.msra.mxu0 %v1919
        %2711 = vmatprep.subr.bf16.mxu0 %v1924
        %2712 = vmatpush1.bf16.msra.mxu0 %v1923
        %2713 = vmatprep.mubr.bf16.mxu0 %v2086
        %2714 = vmatmul.mubr.bf16.gmra.mrb[0].mxu0 %v2072
        %v2715 = vpop.f32.mrb[0].mxu0
        %v2716 = vadd.f32 %v2675, %v2715
        %v2717 = vpop.f32.mrb[0].mxu0
        %v2718 = vadd.f32 %v2677, %v2717
        %v2719 = vpop.f32.mrb[0].mxu0
        %v2720 = vpop.f32.mrb[0].mxu0
        %2721 = vdwg.mxu0
        %2722 = vmatprep.subr.bf16.mxu0 %v1928
        %2723 = vmatpush1.bf16.msra.mxu0 %v1927
        %2724 = vmatprep.subr.bf16.mxu0 %v1932
        %2725 = vmatpush1.bf16.msra.mxu0 %v1931
        %2726 = vmatprep.subr.bf16.mxu0 %v1936
        %2727 = vmatpush1.bf16.msra.mxu0 %v1935
        %2728 = vmatprep.subr.bf16.mxu0 %v1940
        %2729 = vmatpush1.bf16.msra.mxu0 %v1939
        %2730 = vmatprep.subr.bf16.mxu0 %v1944
        %2731 = vmatpush1.bf16.msra.mxu0 %v1943
        %2732 = vmatprep.subr.bf16.mxu0 %v1948
        %2733 = vmatpush1.bf16.msra.mxu0 %v1947
        %2734 = vmatprep.subr.bf16.mxu0 %v1952
        %2735 = vmatpush1.bf16.msra.mxu0 %v1951
        %2736 = vmatprep.subr.bf16.mxu0 %v1956
        %2737 = vmatpush1.bf16.msra.mxu0 %v1955
        %2738 = vmatprep.subr.bf16.mxu0 %v1960
        %2739 = vmatpush1.bf16.msra.mxu0 %v1959
        %2740 = vmatprep.subr.bf16.mxu0 %v1964
        %2741 = vmatpush1.bf16.msra.mxu0 %v1963
        %2742 = vmatprep.subr.bf16.mxu0 %v1968
        %2743 = vmatpush1.bf16.msra.mxu0 %v1967
        %2744 = vmatprep.subr.bf16.mxu0 %v1972
        %2745 = vmatpush1.bf16.msra.mxu0 %v1971
        %2746 = vmatprep.subr.bf16.mxu0 %v1976
        %2747 = vmatpush1.bf16.msra.mxu0 %v1975
        %2748 = vmatprep.subr.bf16.mxu0 %v1980
        %2749 = vmatpush1.bf16.msra.mxu0 %v1979
        %2750 = vmatprep.subr.bf16.mxu0 %v1984
        %2751 = vmatpush1.bf16.msra.mxu0 %v1983
        %2752 = vmatprep.subr.bf16.mxu0 %v1988
        %2753 = vmatpush1.bf16.msra.mxu0 %v1987
        %2754 = vmatprep.mubr.bf16.mxu0 %v2090
        %2755 = vmatmul.mubr.bf16.gmra.mrb[0].mxu0 %v2088
        %v2756 = vpop.f32.mrb[0].mxu0
        %v2757 = vadd.f32 %v2716, %v2756
        %v2758 = vpop.f32.mrb[0].mxu0
        %v2759 = vadd.f32 %v2718, %v2758
        %v2760 = vpop.f32.mrb[0].mxu0
        %v2761 = vpop.f32.mrb[0].mxu0
        %2762 = vdwg.mxu0
        %v2763 = vld [vmem:[%s424] sm:$0xf]
        %v2765 = vlaneseq
        %v2766 = vshrl.u32 %v2765, 7
        %v2767 = vsub.s32 0, %v2766
        %v2768 = vrot.slane %v2763, %v2767
        %v2769 = vlaneseq
        %v2770 = vshrl.u32 %v2769, 7
        %v2771 = vsub.s32 1, %v2770
        %v2772 = vrot.slane %v2763, %v2771
        %v2773 = vlaneseq
        %v2774 = vshrl.u32 %v2773, 7
        %v2775 = vsub.s32 2, %v2774
        %v2776 = vrot.slane %v2763, %v2775
        %v2777 = vlaneseq
        %v2778 = vshrl.u32 %v2777, 7
        %v2779 = vsub.s32 3, %v2778
        %v2780 = vrot.slane %v2763, %v2779
        %v2785 = vmul.f32 %v2429, %v2768
        %v2786 = vmul.f32 %v2431, %v2772
        %v2787 = vmul.f32 %v2757, %v2776
        %v2788 = vmul.f32 %v2759, %v2780
        %v2789 = vld [vmem:[%s433] sm:$0xf]
        %v2791 = vlaneseq
        %v2792 = vshrl.u32 %v2791, 7
        %v2793 = vsub.s32 0, %v2792
        %v2794 = vrot.slane %v2789, %v2793
        %v2795 = vlaneseq
        %v2796 = vshrl.u32 %v2795, 7
        %v2797 = vsub.s32 1, %v2796
        %v2798 = vrot.slane %v2789, %v2797
        %v2799 = vlaneseq
        %v2800 = vshrl.u32 %v2799, 7
        %v2801 = vsub.s32 2, %v2800
        %v2802 = vrot.slane %v2789, %v2801
        %v2803 = vlaneseq
        %v2804 = vshrl.u32 %v2803, 7
        %v2805 = vsub.s32 3, %v2804
        %v2806 = vrot.slane %v2789, %v2805
        %v2811 = vadd.f32 %v2785, %v2794
        %v2812 = vadd.f32 %v2786, %v2798
        %v2813 = vadd.f32 %v2787, %v2802
        %v2814 = vadd.f32 %v2788, %v2806
        %v2815 = vmax.f32 %v2811, 0.0
        %v2816 = vmax.f32 %v2812, 0.0
        %v2817 = vmax.f32 %v2813, 0.0
        %v2818 = vmax.f32 %v2814, 0.0
        // Predicated region
        $region93: #{aux_classifier.1} parent=55 // pred_check
          %p2819 = pneg %p485
        $region94: #{aux_classifier.1} parent=55 // pred_check_branch
          %2821 = sbr.rel (%p2819) target = $region96
        $region95: #{aux_classifier.1} parent=55 // pred_region
          %v2822 = vpack.c.bf16 %v2815, %v2815
          %v2823 = vpack.c.bf16 %v2816, %v2816
          %v2824 = vpack.c.bf16 %v2817, %v2817
          %v2825 = vpack.c.bf16 %v2818, %v2818
          %v2830 = vcombine.low %v2822, %v2823
          %v2831 = vcombine.low %v2824, %v2825
          %v2833 = vunpack.c.l.s4 1966171168
          %v2834 = vunpack.c.0.s8 %v2833
          %v2835 = vlaneseq
          %v2836 = vshrl.u32 %v2835, 7
          %v2837 = vsub.s32 %v2834, %v2836
          %v2838 = vrot.slane %v2830, %v2837
          %v2840 = vunpack.c.l.s4 1966171168
          %v2841 = vunpack.c.0.s8 %v2840
          %v2842 = vlaneseq
          %v2843 = vshrl.u32 %v2842, 7
          %v2844 = vsub.s32 %v2841, %v2843
          %v2845 = vrot.slane %v2831, %v2844
          %v2846 = vcombine.low %v2838, %v2845
          %v2848 = vunpack.c.l.s4 1966171168
          %v2849 = vunpack.c.0.s8 %v2848
          %v2850 = vlaneseq
          %v2851 = vshrl.u32 %v2850, 7
          %v2852 = vsub.s32 %v2849, %v2851
          %v2853 = vrot.slane %v2846, %v2852
          %2855 = vst [vmem:[#allocation3] sm:$0xf] %v2853
        $region96: #{aux_classifier.1} parent=55 // pred_fallthru
          _
        %p2856 = scmp.eq.s32.totalorder %s30, 1
        // Predicated region
        $region97: #{aux_classifier.1} parent=55 // pred_check
          %p2857 = pneg %p2856
        $region98: #{aux_classifier.1} parent=55 // pred_check_branch
          %2859 = sbr.rel (%p2857) target = $region100
        $region99: #{aux_classifier.1} parent=55 // pred_region
          %v2860 = vpack.c.bf16 %v2815, %v2815
          %v2861 = vpack.c.bf16 %v2816, %v2816
          %v2862 = vpack.c.bf16 %v2817, %v2817
          %v2863 = vpack.c.bf16 %v2818, %v2818
          %v2868 = vcombine.low %v2860, %v2861
          %v2869 = vcombine.low %v2862, %v2863
          %v2871 = vunpack.c.l.s4 1966171168
          %v2872 = vunpack.c.0.s8 %v2871
          %v2873 = vlaneseq
          %v2874 = vshrl.u32 %v2873, 7
          %v2875 = vsub.s32 %v2872, %v2874
          %v2876 = vrot.slane %v2868, %v2875
          %v2878 = vunpack.c.l.s4 1966171168
          %v2879 = vunpack.c.0.s8 %v2878
          %v2880 = vlaneseq
          %v2881 = vshrl.u32 %v2880, 7
          %v2882 = vsub.s32 %v2879, %v2881
          %v2883 = vrot.slane %v2869, %v2882
          %v2884 = vcombine.low %v2876, %v2883
          %v2886 = vunpack.c.l.s4 1966171168
          %v2887 = vunpack.c.0.s8 %v2886
          %v2888 = vlaneseq
          %v2889 = vshrl.u32 %v2888, 7
          %v2890 = vsub.s32 %v2887, %v2889
          %v2891 = vrot.slane %v2884, %v2890
          %2893 = vst [vmem:[#allocation3 + $0x4] sm:$0xf] %v2891
          %v2894 = vld [vmem:[#allocation3] sm:$0xff]
          %v2895 = vld [vmem:[#allocation15] sm:$0xf]
          %v2896 = vld [vmem:[#allocation15 + $0x4] sm:$0xf]
          %v2897 = vld [vmem:[#allocation15 + $0x8] sm:$0xf]
          %v2898 = vld [vmem:[#allocation15 + $0xc] sm:$0xf]
          %v2899 = vld [vmem:[#allocation15 + $0x10] sm:$0xf]
          %v2900 = vld [vmem:[#allocation15 + $0x14] sm:$0xf]
          %v2901 = vld [vmem:[#allocation15 + $0x18] sm:$0xf]
          %v2902 = vld [vmem:[#allocation15 + $0x1c] sm:$0xf]
          %v2903 = vld [vmem:[#allocation15 + $0x20] sm:$0xf]
          %v2904 = vld [vmem:[#allocation15 + $0x24] sm:$0xf]
          %v2905 = vld [vmem:[#allocation15 + $0x28] sm:$0xf]
          %v2906 = vld [vmem:[#allocation15 + $0x2c] sm:$0xf]
          %v2907 = vld [vmem:[#allocation15 + $0x30] sm:$0xf]
          %v2908 = vld [vmem:[#allocation15 + $0x34] sm:$0xf]
          %v2909 = vld [vmem:[#allocation15 + $0x38] sm:$0xf]
          %v2910 = vld [vmem:[#allocation15 + $0x3c] sm:$0xf]
          %v2911 = vld [vmem:[#allocation15 + $0x40] sm:$0xf]
          %v2912 = vld [vmem:[#allocation15 + $0x44] sm:$0xf]
          %v2913 = vld [vmem:[#allocation15 + $0x48] sm:$0xf]
          %v2914 = vld [vmem:[#allocation15 + $0x4c] sm:$0xf]
          %v2915 = vld [vmem:[#allocation15 + $0x50] sm:$0xf]
          %v2916 = vld [vmem:[#allocation15 + $0x54] sm:$0xf]
          %v2917 = vld [vmem:[#allocation15 + $0x58] sm:$0xf]
          %v2918 = vld [vmem:[#allocation15 + $0x5c] sm:$0xf]
          %v2919 = vld [vmem:[#allocation15 + $0x60] sm:$0xf]
          %v2920 = vld [vmem:[#allocation15 + $0x64] sm:$0xf]
          %v2921 = vld [vmem:[#allocation15 + $0x68] sm:$0xf]
          %v2922 = vld [vmem:[#allocation15 + $0x6c] sm:$0xf]
          %v2923 = vld [vmem:[#allocation15 + $0x70] sm:$0xf]
          %v2924 = vld [vmem:[#allocation15 + $0x74] sm:$0xf]
          %v2925 = vld [vmem:[#allocation15 + $0x78] sm:$0xf]
          %v2926 = vld [vmem:[#allocation15 + $0x7c] sm:$0xf]
          %v2927 = vld [vmem:[#allocation15 + $0x80] sm:$0xf]
          %v2928 = vld [vmem:[#allocation15 + $0x84] sm:$0xf]
          %v2929 = vld [vmem:[#allocation15 + $0x88] sm:$0xf]
          %v2930 = vld [vmem:[#allocation15 + $0x8c] sm:$0xf]
          %v2931 = vld [vmem:[#allocation15 + $0x90] sm:$0xf]
          %v2932 = vld [vmem:[#allocation15 + $0x94] sm:$0xf]
          %v2933 = vld [vmem:[#allocation15 + $0x98] sm:$0xf]
          %v2934 = vld [vmem:[#allocation15 + $0x9c] sm:$0xf]
          %v2935 = vld [vmem:[#allocation15 + $0xa0] sm:$0xf]
          %v2936 = vld [vmem:[#allocation15 + $0xa4] sm:$0xf]
          %v2937 = vld [vmem:[#allocation15 + $0xa8] sm:$0xf]
          %v2938 = vld [vmem:[#allocation15 + $0xac] sm:$0xf]
          %v2939 = vld [vmem:[#allocation15 + $0xb0] sm:$0xf]
          %v2940 = vld [vmem:[#allocation15 + $0xb4] sm:$0xf]
          %v2941 = vld [vmem:[#allocation15 + $0xb8] sm:$0xf]
          %v2942 = vld [vmem:[#allocation15 + $0xbc] sm:$0xf]
          %v2943 = vld [vmem:[#allocation15 + $0xc0] sm:$0xf]
          %v2944 = vld [vmem:[#allocation15 + $0xc4] sm:$0xf]
          %v2945 = vld [vmem:[#allocation15 + $0xc8] sm:$0xf]
          %v2946 = vld [vmem:[#allocation15 + $0xcc] sm:$0xf]
          %v2947 = vld [vmem:[#allocation15 + $0xd0] sm:$0xf]
          %v2948 = vld [vmem:[#allocation15 + $0xd4] sm:$0xf]
          %v2949 = vld [vmem:[#allocation15 + $0xd8] sm:$0xf]
          %v2950 = vld [vmem:[#allocation15 + $0xdc] sm:$0xf]
          %v2951 = vld [vmem:[#allocation15 + $0xe0] sm:$0xf]
          %v2952 = vld [vmem:[#allocation15 + $0xe4] sm:$0xf]
          %v2953 = vld [vmem:[#allocation15 + $0xe8] sm:$0xf]
          %v2954 = vld [vmem:[#allocation15 + $0xec] sm:$0xf]
          %v2955 = vld [vmem:[#allocation15 + $0xf0] sm:$0xf]
          %v2956 = vld [vmem:[#allocation15 + $0xf4] sm:$0xf]
          %v2957 = vld [vmem:[#allocation15 + $0xf8] sm:$0xf]
          %v2958 = vld [vmem:[#allocation15 + $0xfc] sm:$0xf]
          %v2959 = vld [vmem:[#allocation15 + $0x100] sm:$0xf]
          %v2960 = vld [vmem:[#allocation15 + $0x104] sm:$0xf]
          %v2961 = vld [vmem:[#allocation15 + $0x108] sm:$0xf]
          %v2962 = vld [vmem:[#allocation15 + $0x10c] sm:$0xf]
          %v2963 = vld [vmem:[#allocation15 + $0x110] sm:$0xf]
          %v2964 = vld [vmem:[#allocation15 + $0x114] sm:$0xf]
          %v2965 = vld [vmem:[#allocation15 + $0x118] sm:$0xf]
          %v2966 = vld [vmem:[#allocation15 + $0x11c] sm:$0xf]
          %v2967 = vld [vmem:[#allocation15 + $0x120] sm:$0xf]
          %v2968 = vld [vmem:[#allocation15 + $0x124] sm:$0xf]
          %v2969 = vld [vmem:[#allocation15 + $0x128] sm:$0xf]
          %v2970 = vld [vmem:[#allocation15 + $0x12c] sm:$0xf]
          %v2971 = vld [vmem:[#allocation15 + $0x130] sm:$0xf]
          %v2972 = vld [vmem:[#allocation15 + $0x134] sm:$0xf]
          %v2973 = vld [vmem:[#allocation15 + $0x138] sm:$0xf]
          %v2974 = vld [vmem:[#allocation15 + $0x13c] sm:$0xf]
          %v2975 = vld [vmem:[#allocation15 + $0x140] sm:$0xf]
          %v2976 = vld [vmem:[#allocation15 + $0x144] sm:$0xf]
          %v2977 = vld [vmem:[#allocation15 + $0x148] sm:$0xf]
          %v2978 = vld [vmem:[#allocation15 + $0x14c] sm:$0xf]
          %v2979 = vld [vmem:[#allocation15 + $0x150] sm:$0xf]
          %v2980 = vld [vmem:[#allocation15 + $0x154] sm:$0xf]
          %v2981 = vld [vmem:[#allocation15 + $0x158] sm:$0xf]
          %v2982 = vld [vmem:[#allocation15 + $0x15c] sm:$0xf]
          %v2983 = vld [vmem:[#allocation15 + $0x160] sm:$0xf]
          %v2984 = vld [vmem:[#allocation15 + $0x164] sm:$0xf]
          %v2985 = vld [vmem:[#allocation15 + $0x168] sm:$0xf]
          %v2986 = vld [vmem:[#allocation15 + $0x16c] sm:$0xf]
          %v2987 = vld [vmem:[#allocation15 + $0x170] sm:$0xf]
          %v2988 = vld [vmem:[#allocation15 + $0x174] sm:$0xf]
          %v2989 = vld [vmem:[#allocation15 + $0x178] sm:$0xf]
          %v2990 = vld [vmem:[#allocation15 + $0x17c] sm:$0xf]
          %v2991 = vld [vmem:[#allocation15 + $0x180] sm:$0xf]
          %v2992 = vld [vmem:[#allocation15 + $0x184] sm:$0xf]
          %v2993 = vld [vmem:[#allocation15 + $0x188] sm:$0xf]
          %v2994 = vld [vmem:[#allocation15 + $0x18c] sm:$0xf]
          %v2995 = vld [vmem:[#allocation15 + $0x190] sm:$0xf]
          %v2996 = vld [vmem:[#allocation15 + $0x194] sm:$0xf]
          %v2997 = vld [vmem:[#allocation15 + $0x198] sm:$0xf]
          %v2998 = vld [vmem:[#allocation15 + $0x19c] sm:$0xf]
          %v2999 = vld [vmem:[#allocation15 + $0x1a0] sm:$0xf]
          %v3000 = vld [vmem:[#allocation15 + $0x1a4] sm:$0xf]
          %v3001 = vld [vmem:[#allocation15 + $0x1a8] sm:$0xf]
          %v3002 = vld [vmem:[#allocation15 + $0x1ac] sm:$0xf]
          %v3003 = vld [vmem:[#allocation15 + $0x1b0] sm:$0xf]
          %v3004 = vld [vmem:[#allocation15 + $0x1b4] sm:$0xf]
          %v3005 = vld [vmem:[#allocation15 + $0x1b8] sm:$0xf]
          %v3006 = vld [vmem:[#allocation15 + $0x1bc] sm:$0xf]
          %v3007 = vld [vmem:[#allocation15 + $0x1c0] sm:$0xf]
          %v3008 = vld [vmem:[#allocation15 + $0x1c4] sm:$0xf]
          %v3009 = vld [vmem:[#allocation15 + $0x1c8] sm:$0xf]
          %v3010 = vld [vmem:[#allocation15 + $0x1cc] sm:$0xf]
          %v3011 = vld [vmem:[#allocation15 + $0x1d0] sm:$0xf]
          %v3012 = vld [vmem:[#allocation15 + $0x1d4] sm:$0xf]
          %v3013 = vld [vmem:[#allocation15 + $0x1d8] sm:$0xf]
          %v3014 = vld [vmem:[#allocation15 + $0x1dc] sm:$0xf]
          %v3015 = vld [vmem:[#allocation15 + $0x1e0] sm:$0xf]
          %v3016 = vld [vmem:[#allocation15 + $0x1e4] sm:$0xf]
          %v3017 = vld [vmem:[#allocation15 + $0x1e8] sm:$0xf]
          %v3018 = vld [vmem:[#allocation15 + $0x1ec] sm:$0xf]
          %v3019 = vld [vmem:[#allocation15 + $0x1f0] sm:$0xf]
          %v3020 = vld [vmem:[#allocation15 + $0x1f4] sm:$0xf]
          %v3021 = vld [vmem:[#allocation15 + $0x1f8] sm:$0xf]
          %v3022 = vld [vmem:[#allocation15 + $0x1fc] sm:$0xf]
          %v3023 = vld [vmem:[#allocation16] sm:$0x1]
          %v3025 = vlaneseq
          %v3026 = vshrl.u32 %v3025, 7
          %v3027 = vsub.s32 0, %v3026
          %v3028 = vrot.slane %v3023, %v3027
          %v3031 = vcombine.high %v2894, %v2894
          %v3033 = vunpack.c.l.s4 1966171168
          %v3034 = vunpack.c.0.s8 %v3033
          %v3035 = vlaneseq
          %v3036 = vshrl.u32 %v3035, 7
          %v3037 = vsub.s32 %v3034, %v3036
          %v3038 = vrot.slane %v2894, %v3037
          %v3040 = vunpack.c.l.s4 1966171168
          %v3041 = vunpack.c.0.s8 %v3040
          %v3042 = vlaneseq
          %v3043 = vshrl.u32 %v3042, 7
          %v3044 = vsub.s32 %v3041, %v3043
          %v3045 = vrot.slane %v3031, %v3044
          %v3046 = vcombine.high %v3038, %v3038
          %v3047 = vcombine.high %v3045, %v3045
          %v3049 = vunpack.c.l.s4 1966171168
          %v3050 = vunpack.c.0.s8 %v3049
          %v3051 = vlaneseq
          %v3052 = vshrl.u32 %v3051, 7
          %v3053 = vsub.s32 %v3050, %v3052
          %v3054 = vrot.slane %v3038, %v3053
          %v3056 = vunpack.c.l.s4 1966171168
          %v3057 = vunpack.c.0.s8 %v3056
          %v3058 = vlaneseq
          %v3059 = vshrl.u32 %v3058, 7
          %v3060 = vsub.s32 %v3057, %v3059
          %v3061 = vrot.slane %v3045, %v3060
          %v3063 = vunpack.c.l.s4 1966171168
          %v3064 = vunpack.c.0.s8 %v3063
          %v3065 = vlaneseq
          %v3066 = vshrl.u32 %v3065, 7
          %v3067 = vsub.s32 %v3064, %v3066
          %v3068 = vrot.slane %v3046, %v3067
          %v3070 = vunpack.c.l.s4 1966171168
          %v3071 = vunpack.c.0.s8 %v3070
          %v3072 = vlaneseq
          %v3073 = vshrl.u32 %v3072, 7
          %v3074 = vsub.s32 %v3071, %v3073
          %v3075 = vrot.slane %v3047, %v3074
          %v3076 = vcombine.high %v3054, %v3054
          %v3077 = vcombine.high %v3061, %v3061
          %v3078 = vcombine.high %v3068, %v3068
          %v3079 = vcombine.high %v3075, %v3075
          %v3216 = vunpack.c.l.b16 %v2895
          %v3217 = vunpack.c.l.b16 %v2896
          %v3218 = vunpack.c.l.b16 %v2897
          %v3219 = vunpack.c.l.b16 %v2898
          %v3220 = vunpack.c.l.b16 %v2899
          %v3221 = vunpack.c.l.b16 %v2900
          %v3222 = vunpack.c.l.b16 %v2901
          %v3223 = vunpack.c.l.b16 %v2902
          %v3224 = vunpack.c.l.b16 %v2903
          %v3225 = vunpack.c.l.b16 %v2904
          %v3226 = vunpack.c.l.b16 %v2905
          %v3227 = vunpack.c.l.b16 %v2906
          %v3228 = vunpack.c.l.b16 %v2907
          %v3229 = vunpack.c.l.b16 %v2908
          %v3230 = vunpack.c.l.b16 %v2909
          %v3231 = vunpack.c.l.b16 %v2910
          %v3232 = vunpack.c.l.b16 %v2911
          %v3233 = vunpack.c.l.b16 %v2912
          %v3234 = vunpack.c.l.b16 %v2913
          %v3235 = vunpack.c.l.b16 %v2914
          %v3236 = vunpack.c.l.b16 %v2915
          %v3237 = vunpack.c.l.b16 %v2916
          %v3238 = vunpack.c.l.b16 %v2917
          %v3239 = vunpack.c.l.b16 %v2918
          %v3240 = vunpack.c.l.b16 %v2919
          %v3241 = vunpack.c.l.b16 %v2920
          %v3242 = vunpack.c.l.b16 %v2921
          %v3243 = vunpack.c.l.b16 %v2922
          %v3244 = vunpack.c.l.b16 %v2923
          %v3245 = vunpack.c.l.b16 %v2924
          %v3246 = vunpack.c.l.b16 %v2925
          %v3247 = vunpack.c.l.b16 %v2926
          %v3248 = vunpack.c.l.b16 %v2927
          %v3249 = vunpack.c.l.b16 %v2928
          %v3250 = vunpack.c.l.b16 %v2929
          %v3251 = vunpack.c.l.b16 %v2930
          %v3252 = vunpack.c.l.b16 %v2931
          %v3253 = vunpack.c.l.b16 %v2932
          %v3254 = vunpack.c.l.b16 %v2933
          %v3255 = vunpack.c.l.b16 %v2934
          %v3256 = vunpack.c.l.b16 %v2935
          %v3257 = vunpack.c.l.b16 %v2936
          %v3258 = vunpack.c.l.b16 %v2937
          %v3259 = vunpack.c.l.b16 %v2938
          %v3260 = vunpack.c.l.b16 %v2939
          %v3261 = vunpack.c.l.b16 %v2940
          %v3262 = vunpack.c.l.b16 %v2941
          %v3263 = vunpack.c.l.b16 %v2942
          %v3264 = vunpack.c.l.b16 %v2943
          %v3265 = vunpack.c.l.b16 %v2944
          %v3266 = vunpack.c.l.b16 %v2945
          %v3267 = vunpack.c.l.b16 %v2946
          %v3268 = vunpack.c.l.b16 %v2947
          %v3269 = vunpack.c.l.b16 %v2948
          %v3270 = vunpack.c.l.b16 %v2949
          %v3271 = vunpack.c.l.b16 %v2950
          %v3272 = vunpack.c.l.b16 %v2951
          %v3273 = vunpack.c.l.b16 %v2952
          %v3274 = vunpack.c.l.b16 %v2953
          %v3275 = vunpack.c.l.b16 %v2954
          %v3276 = vunpack.c.l.b16 %v2955
          %v3277 = vunpack.c.l.b16 %v2956
          %v3278 = vunpack.c.l.b16 %v2957
          %v3279 = vunpack.c.l.b16 %v2958
          %v3280 = vunpack.c.l.b16 %v2959
          %v3281 = vunpack.c.l.b16 %v2960
          %v3282 = vunpack.c.l.b16 %v2961
          %v3283 = vunpack.c.l.b16 %v2962
          %v3284 = vunpack.c.l.b16 %v2963
          %v3285 = vunpack.c.l.b16 %v2964
          %v3286 = vunpack.c.l.b16 %v2965
          %v3287 = vunpack.c.l.b16 %v2966
          %v3288 = vunpack.c.l.b16 %v2967
          %v3289 = vunpack.c.l.b16 %v2968
          %v3290 = vunpack.c.l.b16 %v2969
          %v3291 = vunpack.c.l.b16 %v2970
          %v3292 = vunpack.c.l.b16 %v2971
          %v3293 = vunpack.c.l.b16 %v2972
          %v3294 = vunpack.c.l.b16 %v2973
          %v3295 = vunpack.c.l.b16 %v2974
          %v3296 = vunpack.c.l.b16 %v2975
          %v3297 = vunpack.c.l.b16 %v2976
          %v3298 = vunpack.c.l.b16 %v2977
          %v3299 = vunpack.c.l.b16 %v2978
          %v3300 = vunpack.c.l.b16 %v2979
          %v3301 = vunpack.c.l.b16 %v2980
          %v3302 = vunpack.c.l.b16 %v2981
          %v3303 = vunpack.c.l.b16 %v2982
          %v3304 = vunpack.c.l.b16 %v2983
          %v3305 = vunpack.c.l.b16 %v2984
          %v3306 = vunpack.c.l.b16 %v2985
          %v3307 = vunpack.c.l.b16 %v2986
          %v3308 = vunpack.c.l.b16 %v2987
          %v3309 = vunpack.c.l.b16 %v2988
          %v3310 = vunpack.c.l.b16 %v2989
          %v3311 = vunpack.c.l.b16 %v2990
          %v3312 = vunpack.c.l.b16 %v2991
          %v3313 = vunpack.c.l.b16 %v2992
          %v3314 = vunpack.c.l.b16 %v2993
          %v3315 = vunpack.c.l.b16 %v2994
          %v3316 = vunpack.c.l.b16 %v2995
          %v3317 = vunpack.c.l.b16 %v2996
          %v3318 = vunpack.c.l.b16 %v2997
          %v3319 = vunpack.c.l.b16 %v2998
          %v3320 = vunpack.c.l.b16 %v2999
          %v3321 = vunpack.c.l.b16 %v3000
          %v3322 = vunpack.c.l.b16 %v3001
          %v3323 = vunpack.c.l.b16 %v3002
          %v3324 = vunpack.c.l.b16 %v3003
          %v3325 = vunpack.c.l.b16 %v3004
          %v3326 = vunpack.c.l.b16 %v3005
          %v3327 = vunpack.c.l.b16 %v3006
          %v3328 = vunpack.c.l.b16 %v3007
          %v3329 = vunpack.c.l.b16 %v3008
          %v3330 = vunpack.c.l.b16 %v3009
          %v3331 = vunpack.c.l.b16 %v3010
          %v3332 = vunpack.c.l.b16 %v3011
          %v3333 = vunpack.c.l.b16 %v3012
          %v3334 = vunpack.c.l.b16 %v3013
          %v3335 = vunpack.c.l.b16 %v3014
          %v3336 = vunpack.c.l.b16 %v3015
          %v3337 = vunpack.c.l.b16 %v3016
          %v3338 = vunpack.c.l.b16 %v3017
          %v3339 = vunpack.c.l.b16 %v3018
          %v3340 = vunpack.c.l.b16 %v3019
          %v3341 = vunpack.c.l.b16 %v3020
          %v3342 = vunpack.c.l.b16 %v3021
          %v3343 = vunpack.c.l.b16 %v3022
          %v3344 = vpack.c.b16 %v3217, %v3216
          %v3345 = vpack.c.b16 %v3219, %v3218
          %v3346 = vpack.c.b16 %v3221, %v3220
          %v3347 = vpack.c.b16 %v3223, %v3222
          %v3348 = vpack.c.b16 %v3225, %v3224
          %v3349 = vpack.c.b16 %v3227, %v3226
          %v3350 = vpack.c.b16 %v3229, %v3228
          %v3351 = vpack.c.b16 %v3231, %v3230
          %v3352 = vpack.c.b16 %v3233, %v3232
          %v3353 = vpack.c.b16 %v3235, %v3234
          %v3354 = vpack.c.b16 %v3237, %v3236
          %v3355 = vpack.c.b16 %v3239, %v3238
          %v3356 = vpack.c.b16 %v3241, %v3240
          %v3357 = vpack.c.b16 %v3243, %v3242
          %v3358 = vpack.c.b16 %v3245, %v3244
          %v3359 = vpack.c.b16 %v3247, %v3246
          %v3360 = vpack.c.b16 %v3249, %v3248
          %v3361 = vpack.c.b16 %v3251, %v3250
          %v3362 = vpack.c.b16 %v3253, %v3252
          %v3363 = vpack.c.b16 %v3255, %v3254
          %v3364 = vpack.c.b16 %v3257, %v3256
          %v3365 = vpack.c.b16 %v3259, %v3258
          %v3366 = vpack.c.b16 %v3261, %v3260
          %v3367 = vpack.c.b16 %v3263, %v3262
          %v3368 = vpack.c.b16 %v3265, %v3264
          %v3369 = vpack.c.b16 %v3267, %v3266
          %v3370 = vpack.c.b16 %v3269, %v3268
          %v3371 = vpack.c.b16 %v3271, %v3270
          %v3372 = vpack.c.b16 %v3273, %v3272
          %v3373 = vpack.c.b16 %v3275, %v3274
          %v3374 = vpack.c.b16 %v3277, %v3276
          %v3375 = vpack.c.b16 %v3279, %v3278
          %v3376 = vpack.c.b16 %v3281, %v3280
          %v3377 = vpack.c.b16 %v3283, %v3282
          %v3378 = vpack.c.b16 %v3285, %v3284
          %v3379 = vpack.c.b16 %v3287, %v3286
          %v3380 = vpack.c.b16 %v3289, %v3288
          %v3381 = vpack.c.b16 %v3291, %v3290
          %v3382 = vpack.c.b16 %v3293, %v3292
          %v3383 = vpack.c.b16 %v3295, %v3294
          %v3384 = vpack.c.b16 %v3297, %v3296
          %v3385 = vpack.c.b16 %v3299, %v3298
          %v3386 = vpack.c.b16 %v3301, %v3300
          %v3387 = vpack.c.b16 %v3303, %v3302
          %v3388 = vpack.c.b16 %v3305, %v3304
          %v3389 = vpack.c.b16 %v3307, %v3306
          %v3390 = vpack.c.b16 %v3309, %v3308
          %v3391 = vpack.c.b16 %v3311, %v3310
          %v3392 = vpack.c.b16 %v3313, %v3312
          %v3393 = vpack.c.b16 %v3315, %v3314
          %v3394 = vpack.c.b16 %v3317, %v3316
          %v3395 = vpack.c.b16 %v3319, %v3318
          %v3396 = vpack.c.b16 %v3321, %v3320
          %v3397 = vpack.c.b16 %v3323, %v3322
          %v3398 = vpack.c.b16 %v3325, %v3324
          %v3399 = vpack.c.b16 %v3327, %v3326
          %v3400 = vpack.c.b16 %v3329, %v3328
          %v3401 = vpack.c.b16 %v3331, %v3330
          %v3402 = vpack.c.b16 %v3333, %v3332
          %v3403 = vpack.c.b16 %v3335, %v3334
          %v3404 = vpack.c.b16 %v3337, %v3336
          %v3405 = vpack.c.b16 %v3339, %v3338
          %v3406 = vpack.c.b16 %v3341, %v3340
          %v3407 = vpack.c.b16 %v3343, %v3342
          %3472 = vmatprep.subr.bf16.mxu0 0
          %3473 = vmatpush1.bf16.msra.mxu0 %v3344
          %3474 = vmatprep.subr.bf16.mxu0 0
          %3475 = vmatpush1.bf16.msra.mxu0 %v3345
          %3476 = vmatprep.subr.bf16.mxu0 0
          %3477 = vmatpush1.bf16.msra.mxu0 %v3346
          %3478 = vmatprep.subr.bf16.mxu0 0
          %3479 = vmatpush1.bf16.msra.mxu0 %v3347
          %3480 = vmatprep.subr.bf16.mxu0 0
          %3481 = vmatpush1.bf16.msra.mxu0 %v3348
          %3482 = vmatprep.subr.bf16.mxu0 0
          %3483 = vmatpush1.bf16.msra.mxu0 %v3349
          %3484 = vmatprep.subr.bf16.mxu0 0
          %3485 = vmatpush1.bf16.msra.mxu0 %v3350
          %3486 = vmatprep.subr.bf16.mxu0 0
          %3487 = vmatpush1.bf16.msra.mxu0 %v3351
          %3488 = vmatprep.subr.bf16.mxu0 0
          %3489 = vmatpush1.bf16.msra.mxu0 %v3352
          %3490 = vmatprep.subr.bf16.mxu0 0
          %3491 = vmatpush1.bf16.msra.mxu0 %v3353
          %3492 = vmatprep.subr.bf16.mxu0 0
          %3493 = vmatpush1.bf16.msra.mxu0 %v3354
          %3494 = vmatprep.subr.bf16.mxu0 0
          %3495 = vmatpush1.bf16.msra.mxu0 %v3355
          %3496 = vmatprep.subr.bf16.mxu0 0
          %3497 = vmatpush1.bf16.msra.mxu0 %v3356
          %3498 = vmatprep.subr.bf16.mxu0 0
          %3499 = vmatpush1.bf16.msra.mxu0 %v3357
          %3500 = vmatprep.subr.bf16.mxu0 0
          %3501 = vmatpush1.bf16.msra.mxu0 %v3358
          %3502 = vmatprep.subr.bf16.mxu0 0
          %3503 = vmatpush1.bf16.msra.mxu0 %v3359
          %3504 = vmatprep.mubr.bf16.mxu0 %v3068
          %3505 = vmatmul.mubr.bf16.gmra.mrb[0].mxu0 %v3054
          %v3506 = vpop.f32.mrb[0].mxu0
          %v3507 = vadd.f32 %v3028, %v3506
          %v3508 = vpop.f32.mrb[0].mxu0
          %v3509 = vpop.f32.mrb[0].mxu0
          %v3510 = vpop.f32.mrb[0].mxu0
          %3511 = vdwg.mxu0
          %3512 = vmatprep.subr.bf16.mxu0 0
          %3513 = vmatpush1.bf16.msra.mxu0 %v3360
          %3514 = vmatprep.subr.bf16.mxu0 0
          %3515 = vmatpush1.bf16.msra.mxu0 %v3361
          %3516 = vmatprep.subr.bf16.mxu0 0
          %3517 = vmatpush1.bf16.msra.mxu0 %v3362
          %3518 = vmatprep.subr.bf16.mxu0 0
          %3519 = vmatpush1.bf16.msra.mxu0 %v3363
          %3520 = vmatprep.subr.bf16.mxu0 0
          %3521 = vmatpush1.bf16.msra.mxu0 %v3364
          %3522 = vmatprep.subr.bf16.mxu0 0
          %3523 = vmatpush1.bf16.msra.mxu0 %v3365
          %3524 = vmatprep.subr.bf16.mxu0 0
          %3525 = vmatpush1.bf16.msra.mxu0 %v3366
          %3526 = vmatprep.subr.bf16.mxu0 0
          %3527 = vmatpush1.bf16.msra.mxu0 %v3367
          %3528 = vmatprep.subr.bf16.mxu0 0
          %3529 = vmatpush1.bf16.msra.mxu0 %v3368
          %3530 = vmatprep.subr.bf16.mxu0 0
          %3531 = vmatpush1.bf16.msra.mxu0 %v3369
          %3532 = vmatprep.subr.bf16.mxu0 0
          %3533 = vmatpush1.bf16.msra.mxu0 %v3370
          %3534 = vmatprep.subr.bf16.mxu0 0
          %3535 = vmatpush1.bf16.msra.mxu0 %v3371
          %3536 = vmatprep.subr.bf16.mxu0 0
          %3537 = vmatpush1.bf16.msra.mxu0 %v3372
          %3538 = vmatprep.subr.bf16.mxu0 0
          %3539 = vmatpush1.bf16.msra.mxu0 %v3373
          %3540 = vmatprep.subr.bf16.mxu0 0
          %3541 = vmatpush1.bf16.msra.mxu0 %v3374
          %3542 = vmatprep.subr.bf16.mxu0 0
          %3543 = vmatpush1.bf16.msra.mxu0 %v3375
          %3544 = vmatprep.mubr.bf16.mxu0 %v3078
          %3545 = vmatmul.mubr.bf16.gmra.mrb[0].mxu0 %v3076
          %v3546 = vpop.f32.mrb[0].mxu0
          %v3547 = vadd.f32 %v3507, %v3546
          %v3548 = vpop.f32.mrb[0].mxu0
          %v3549 = vpop.f32.mrb[0].mxu0
          %v3550 = vpop.f32.mrb[0].mxu0
          %3551 = vdwg.mxu0
          %3552 = vmatprep.subr.bf16.mxu0 0
          %3553 = vmatpush1.bf16.msra.mxu0 %v3376
          %3554 = vmatprep.subr.bf16.mxu0 0
          %3555 = vmatpush1.bf16.msra.mxu0 %v3377
          %3556 = vmatprep.subr.bf16.mxu0 0
          %3557 = vmatpush1.bf16.msra.mxu0 %v3378
          %3558 = vmatprep.subr.bf16.mxu0 0
          %3559 = vmatpush1.bf16.msra.mxu0 %v3379
          %3560 = vmatprep.subr.bf16.mxu0 0
          %3561 = vmatpush1.bf16.msra.mxu0 %v3380
          %3562 = vmatprep.subr.bf16.mxu0 0
          %3563 = vmatpush1.bf16.msra.mxu0 %v3381
          %3564 = vmatprep.subr.bf16.mxu0 0
          %3565 = vmatpush1.bf16.msra.mxu0 %v3382
          %3566 = vmatprep.subr.bf16.mxu0 0
          %3567 = vmatpush1.bf16.msra.mxu0 %v3383
          %3568 = vmatprep.subr.bf16.mxu0 0
          %3569 = vmatpush1.bf16.msra.mxu0 %v3384
          %3570 = vmatprep.subr.bf16.mxu0 0
          %3571 = vmatpush1.bf16.msra.mxu0 %v3385
          %3572 = vmatprep.subr.bf16.mxu0 0
          %3573 = vmatpush1.bf16.msra.mxu0 %v3386
          %3574 = vmatprep.subr.bf16.mxu0 0
          %3575 = vmatpush1.bf16.msra.mxu0 %v3387
          %3576 = vmatprep.subr.bf16.mxu0 0
          %3577 = vmatpush1.bf16.msra.mxu0 %v3388
          %3578 = vmatprep.subr.bf16.mxu0 0
          %3579 = vmatpush1.bf16.msra.mxu0 %v3389
          %3580 = vmatprep.subr.bf16.mxu0 0
          %3581 = vmatpush1.bf16.msra.mxu0 %v3390
          %3582 = vmatprep.subr.bf16.mxu0 0
          %3583 = vmatpush1.bf16.msra.mxu0 %v3391
          %3584 = vmatprep.mubr.bf16.mxu0 %v3075
          %3585 = vmatmul.mubr.bf16.gmra.mrb[0].mxu0 %v3061
          %v3586 = vpop.f32.mrb[0].mxu0
          %v3587 = vadd.f32 %v3547, %v3586
          %v3588 = vpop.f32.mrb[0].mxu0
          %v3589 = vpop.f32.mrb[0].mxu0
          %v3590 = vpop.f32.mrb[0].mxu0
          %3591 = vdwg.mxu0
          %3592 = vmatprep.subr.bf16.mxu0 0
          %3593 = vmatpush1.bf16.msra.mxu0 %v3392
          %3594 = vmatprep.subr.bf16.mxu0 0
          %3595 = vmatpush1.bf16.msra.mxu0 %v3393
          %3596 = vmatprep.subr.bf16.mxu0 0
          %3597 = vmatpush1.bf16.msra.mxu0 %v3394
          %3598 = vmatprep.subr.bf16.mxu0 0
          %3599 = vmatpush1.bf16.msra.mxu0 %v3395
          %3600 = vmatprep.subr.bf16.mxu0 0
          %3601 = vmatpush1.bf16.msra.mxu0 %v3396
          %3602 = vmatprep.subr.bf16.mxu0 0
          %3603 = vmatpush1.bf16.msra.mxu0 %v3397
          %3604 = vmatprep.subr.bf16.mxu0 0
          %3605 = vmatpush1.bf16.msra.mxu0 %v3398
          %3606 = vmatprep.subr.bf16.mxu0 0
          %3607 = vmatpush1.bf16.msra.mxu0 %v3399
          %3608 = vmatprep.subr.bf16.mxu0 0
          %3609 = vmatpush1.bf16.msra.mxu0 %v3400
          %3610 = vmatprep.subr.bf16.mxu0 0
          %3611 = vmatpush1.bf16.msra.mxu0 %v3401
          %3612 = vmatprep.subr.bf16.mxu0 0
          %3613 = vmatpush1.bf16.msra.mxu0 %v3402
          %3614 = vmatprep.subr.bf16.mxu0 0
          %3615 = vmatpush1.bf16.msra.mxu0 %v3403
          %3616 = vmatprep.subr.bf16.mxu0 0
          %3617 = vmatpush1.bf16.msra.mxu0 %v3404
          %3618 = vmatprep.subr.bf16.mxu0 0
          %3619 = vmatpush1.bf16.msra.mxu0 %v3405
          %3620 = vmatprep.subr.bf16.mxu0 0
          %3621 = vmatpush1.bf16.msra.mxu0 %v3406
          %3622 = vmatprep.subr.bf16.mxu0 0
          %3623 = vmatpush1.bf16.msra.mxu0 %v3407
          %3624 = vmatprep.mubr.bf16.mxu0 %v3079
          %3625 = vmatmul.mubr.bf16.gmra.mrb[0].mxu0 %v3077
          %v3626 = vpop.f32.mrb[0].mxu0
          %v3627 = vadd.f32 %v3587, %v3626
          %v3628 = vpop.f32.mrb[0].mxu0
          %v3629 = vpop.f32.mrb[0].mxu0
          %v3630 = vpop.f32.mrb[0].mxu0
          %3631 = vdwg.mxu0
          %v3632 = vmax.f32 %v3627, 0.0
          %v3633 = vlaneseq
          %v3634 = vand.u32 %v3633, 127
          %vm3635 = vcmp.lt.s32.totalorder %v3634, 10
          %v3636 = vsel %vm3635, %v3632, -1e+30
          %vm3637 = vcmask 1041408
          %v3638 = vsel %vm3637, %v3636, -inf
          %3639 = vmax.xlane.f32.xlu0 %v3638
          %v3640 = vpop.xlane.xlu0 %3639
          %v3641 = vsub.f32 %v3636, %v3640
          %v3642 = vmul.f32 %v3641, 1.442695
          %v3643 = vpow.pop %v3642
          %v3644 = vsel %vm3637, %v3643, 0.0
          %3645 = vadd.xlane.f32.xlu0 %v3644
          %v3646 = vpop.xlane.xlu0 %3645
          %v3647 = vrcp.pop %v3646
          %v3648 = vmul.f32 %v3643, %v3647
          %3649 = vst [vmem:[#allocation18] sm:$0x3] %v3648
        $region100: #{aux_classifier.1} parent=55 // pred_fallthru
          _
        // Predicated region
        $region101: #{aux_classifier.1} parent=55 // pred_check
          %p3650 = pneg %p247
        $region102: #{aux_classifier.1} parent=55 // pred_check_branch
          %3652 = sbr.rel (%p3650) target = $region104
        $region103: #{aux_classifier.1} parent=55 // pred_region
          %s3654 = ssub.s32 32, 32
          %3655 = vsyncadd [#allocation6], %s3654
          %s3657 = sshll.u32 [#allocation18], 4
          %s3658 = int_to_ptr.vmem [resolvable:$true] %s3657
          %3660 = dma.vmem_to_hbm [thread:$0]  %s3658, 32, %s9, [#allocation6]
        $region104: #{aux_classifier.1} parent=55 // pred_fallthru
          _
        // Predicated region
        $region105: #{aux_classifier.1} parent=55 // pred_check
          %p3661 = pneg %p247
        $region106: #{aux_classifier.1} parent=55 // pred_check_branch
          %3663 = sbr.rel (%p3661) target = $region108
        $region107: #{aux_classifier.1} parent=55 // pred_region
          %3664 = dma.done [#allocation6], 32
        $region108: #{aux_classifier.1} parent=55 // pred_fallthru
          _
      $region56: #{aux_classifier.1} parent=5 // pred_fallthru
        _
      %p3665 = scmp.le.s32.totalorder 2, %s25
      // Predicated region
      $region109: #{aux_classifier.1} parent=5 // pred_check
        %p3666 = pneg %p3665
      $region110: #{aux_classifier.1} parent=5 // pred_check_branch
        %3668 = sbr.rel (%p3666) target = $region112
      $region111: #{aux_classifier.1} parent=5 // pred_region
        %s3669 = ssub.s32 %s25, 2
      $region112: #{aux_classifier.1} parent=5 // pred_fallthru
        _
    $region6: #{aux_classifier.1} parent=1 // loop_footer
      %s29 = sadd.s32 1, %s25
    $region7: #{aux_classifier.1} parent=1 // loop_footer_branch
      %24 = sbr.rel target = $region3
    $region8: #{aux_classifier.1} parent=1 // loop_exit
      _
    %3670 = vsyncpa [#allocation5], 1
    %s3671 = scalar_lea.sflag [#allocation5], 1
    %3672 = vsyncpa %s3671, 1
    %3673 = vsyncpa [#allocation8], 1
    %3674 = vsyncpa [#allocation11], 1
    %s3675 = scalar_lea.sflag [#allocation11], 1
    %3676 = vsyncpa %s3675, 1
    %3677 = vsyncpa [#allocation14], 1
    %s3678 = scalar_lea.sflag [#allocation14], 1
    %3679 = vsyncpa %s3678, 1
    %3680 = vsyncpa [#allocation17], 1
    %3681 = vsyncpa [#allocation6], 1
    %s3682 = scalar_lea.sflag [#allocation6], 1
    %3683 = vsyncpa %s3682, 1

</llo_original>
